<compile_context>
chip_gen: v5e
topology: v5e:2x2
jax: 0.10.0
libtpu: 0.0.40
codegen_flags: <defaults>
</compile_context>

<pallas_src>
import math

import jax
import jax.numpy as jnp
from jax.experimental import pallas as pl
from jax.experimental.pallas import tpu as pltpu

# Problem sizes (H, W from the PyTorch script; hidden dims chosen small).
H = 50
W = 100
X_DIM = H * W                              # 5000
X_PAD = ((X_DIM + 127) // 128) * 128       # 5120 (lane-aligned feature axis)
H_DIM1 = 256
H_DIM2 = 128
Z_DIM = 64
B = 8

TN = 512                                   # fc6 output-column tile (lane-dense)
N_TILES = X_PAD // TN                      # 10 grid steps


def _vae_kernel(
    x_ref, code_ref, eps_ref,
    w1_ref, b1_ref,
    w2_ref, b2_ref,
    w3_ref, b3_ref,
    w4_ref, b4_ref, wc2_ref,
    w5_ref, b5_ref,
    w6_ref, b6_ref,
    recon_ref, mu_ref, logvar_ref,
    h4_ref,
):
    j = pl.program_id(0)

    # Encoder + sampling + decoder head run once (grid step 0); h4 is stashed in
    # VMEM scratch (bf16) and reused while fc6 column tiles are streamed.
    @pl.when(j == 0)
    def _():
        # encoder: fc_code1 is folded into fc1 (code is column X_DIM of x_aug,
        # wc1^T is row X_DIM of w1, bc1 folded into b1) -> one bf16 MXU matmul.
        h1 = jnp.dot(x_ref[...], w1_ref[...],
                     preferred_element_type=jnp.float32) + b1_ref[...]
        h1 = jnp.maximum(h1, 0.0)

        h2 = jnp.dot(h1, w2_ref[...],
                     preferred_element_type=jnp.float32) + b2_ref[...]
        h2 = jnp.maximum(h2, 0.0)

        # fc31 / fc32 fused into a single (H_DIM2, 2*Z_DIM) matmul.
        mlv = jnp.dot(h2, w3_ref[...],
                      preferred_element_type=jnp.float32) + b3_ref[...]
        mu = mlv[:, :Z_DIM]
        log_var = mlv[:, Z_DIM:]
        mu_ref[...] = mu
        logvar_ref[...] = log_var

        # reparameterization (eps supplied by caller, matching torch.randn_like)
        z = eps_ref[...] * jnp.exp(0.5 * log_var) + mu

        # decoder head: fc4 (+ fc_code2 path; bc2 folded into b4) and fc5
        h3 = jnp.dot(z, w4_ref[...],
                     preferred_element_type=jnp.float32) + b4_ref[...]
        h3 = h3 + code_ref[...] * wc2_ref[...]
        h3 = jnp.maximum(h3, 0.0)

        h4 = jnp.dot(h3, w5_ref[...],
                     preferred_element_type=jnp.float32) + b5_ref[...]
        h4 = jnp.maximum(h4, 0.0)
        h4_ref[...] = h4.astype(jnp.bfloat16)

    # Every grid step: one lane-dense fc6 column tile + sigmoid.
    logits = jnp.dot(h4_ref[...], w6_ref[...],
                     preferred_element_type=jnp.float32) + b6_ref[...]
    recon_ref[...] = jax.nn.sigmoid(logits)


def _linear_params(key, out_dim, in_dim):
    """Deterministic PyTorch-style nn.Linear init: U(-1/sqrt(in), 1/sqrt(in))."""
    kw, kb = jax.random.split(key)
    bound = 1.0 / math.sqrt(in_dim)
    w = jax.random.uniform(kw, (out_dim, in_dim), jnp.float32, -bound, bound)
    b = jax.random.uniform(kb, (out_dim,), jnp.float32, -bound, bound)
    return w, b


def init_vae_params(key):
    keys = jax.random.split(key, 9)
    return {
        "fc1": _linear_params(keys[0], H_DIM1, X_DIM),
        "fc2": _linear_params(keys[1], H_DIM2, H_DIM1),
        "fc31": _linear_params(keys[2], Z_DIM, H_DIM2),
        "fc32": _linear_params(keys[3], Z_DIM, H_DIM2),
        "fc4": _linear_params(keys[4], H_DIM2, Z_DIM),
        "fc5": _linear_params(keys[5], H_DIM1, H_DIM2),
        "fc6": _linear_params(keys[6], X_DIM, H_DIM1),
        "fc_code1": _linear_params(keys[7], H_DIM1, 1),
        "fc_code2": _linear_params(keys[8], H_DIM2, 1),
    }


def prepare_vae_params(params):
    """One-time weight prep (transpose / pad / fuse / bf16 cast), done OUTSIDE the
    per-call forward so no per-call transpose/pad copies hit HBM."""
    def t(w):
        return jnp.asarray(w).T

    def row(b):
        return jnp.asarray(b).reshape(1, -1)

    w1, b1 = params["fc1"]
    wc1, bc1 = params["fc_code1"]
    w2, b2 = params["fc2"]
    w31, b31 = params["fc31"]
    w32, b32 = params["fc32"]
    w4, b4 = params["fc4"]
    wc2, bc2 = params["fc_code2"]
    w5, b5 = params["fc5"]
    w6, b6 = params["fc6"]

    # fc1 with the fc_code1 path folded in: row X_DIM of the padded weight is wc1^T
    # and column X_DIM of the padded input carries `code`. Stored bf16 (big stream).
    w1p = jnp.zeros((X_PAD, H_DIM1), jnp.float32)
    w1p = w1p.at[:X_DIM, :].set(t(w1))
    w1p = w1p.at[X_DIM, :].set(jnp.asarray(wc1)[:, 0])
    w1p = w1p.astype(jnp.bfloat16)
    b1c = row(b1) + row(bc1)

    # fc31/fc32 fused into one 128-lane-wide matmul.
    w3p = jnp.concatenate([t(w31), t(w32)], axis=1)           # (H_DIM2, 2*Z_DIM)
    b3c = jnp.concatenate([row(b31), row(b32)], axis=1)

    # fc4 with the fc_code2 bias folded in; code*wc2 stays a tiny VPU broadcast.
    b4c = row(b4) + row(bc2)
    wc2r = t(wc2)                                             # (1, H_DIM2)

    # fc6 padded on the output axis (zeros) and stored bf16 (big stream).
    w6p = jnp.zeros((H_DIM1, X_PAD), jnp.float32)
    w6p = w6p.at[:, :X_DIM].set(t(w6))
    w6p = w6p.astype(jnp.bfloat16)
    b6p = jnp.zeros((1, X_PAD), jnp.float32).at[:, :X_DIM].set(row(b6))

    return {
        "w1": w1p, "b1": b1c,
        "w2": t(w2), "b2": row(b2),
        "w3": w3p, "b3": b3c,
        "w4": t(w4), "b4": b4c, "wc2": wc2r,
        "w5": t(w5), "b5": row(b5),
        "w6": w6p, "b6": b6p,
    }


@jax.jit
def vae_forward(x, score, eps, prepped):
    """Mirrors VAE.forward(x, score) -> (recon_padded, mu, log_var).

    recon_padded is (B, X_PAD); columns >= X_DIM are padding (value sigmoid(0)=0.5)
    and must be ignored — recon_padded[:, :X_DIM] equals the PyTorch reconstruction.
    """
    batch = x.shape[0]
    x_flat = x.reshape(batch, X_DIM).astype(jnp.float32)      # x.view(-1, H*W)
    code = score.reshape(batch, 1).astype(jnp.float32)        # score.view(-1, 1)

    # Fold `code` into column X_DIM of the lane-padded input; stream it in bf16.
    x_aug = jnp.concatenate(
        [x_flat, code, jnp.zeros((batch, X_PAD - X_DIM - 1), jnp.float32)],
        axis=1).astype(jnp.bfloat16)

    const = lambda j: (0, 0)
    tiled = lambda j: (0, j)

    grid_spec = pltpu.PrefetchScalarGridSpec(
        num_scalar_prefetch=0,
        grid=(N_TILES,),
        in_specs=[
            pl.BlockSpec((batch, X_PAD), const),        # x_aug (bf16)
            pl.BlockSpec((batch, 1), const),            # code
            pl.BlockSpec((batch, Z_DIM), const),        # eps
            pl.BlockSpec((X_PAD, H_DIM1), const),       # w1 (bf16, code row folded)
            pl.BlockSpec((1, H_DIM1), const),           # b1 + bc1
            pl.BlockSpec((H_DIM1, H_DIM2), const),      # w2
            pl.BlockSpec((1, H_DIM2), const),           # b2
            pl.BlockSpec((H_DIM2, 2 * Z_DIM), const),   # w31|w32 fused
            pl.BlockSpec((1, 2 * Z_DIM), const),        # b31|b32 fused
            pl.BlockSpec((Z_DIM, H_DIM2), const),       # w4
            pl.BlockSpec((1, H_DIM2), const),           # b4 + bc2
            pl.BlockSpec((1, H_DIM2), const),           # wc2 row
            pl.BlockSpec((H_DIM2, H_DIM1), const),      # w5
            pl.BlockSpec((1, H_DIM1), const),           # b5
            pl.BlockSpec((H_DIM1, TN), tiled),          # w6 column tile (bf16)
            pl.BlockSpec((1, TN), tiled),               # b6 column tile
        ],
        out_specs=[
            pl.BlockSpec((batch, TN), tiled),           # recon (padded, lane-dense)
            pl.BlockSpec((batch, Z_DIM), const),        # mu
            pl.BlockSpec((batch, Z_DIM), const),        # log_var
        ],
        scratch_shapes=[pltpu.VMEM((batch, H_DIM1), jnp.bfloat16)],  # h4 stash
    )

    recon_pad, mu, log_var = pl.pallas_call(
        _vae_kernel,
        out_shape=(
            jax.ShapeDtypeStruct((batch, X_PAD), jnp.float32),
            jax.ShapeDtypeStruct((batch, Z_DIM), jnp.float32),
            jax.ShapeDtypeStruct((batch, Z_DIM), jnp.float32),
        ),
        grid_spec=grid_spec,
        compiler_params=pltpu.CompilerParams(
            dimension_semantics=("arbitrary",),   # state (scratch / mu / logvar) carried across the axis
            vmem_limit_bytes=24 << 20,            # footprint ~4 MB; safe on v5e/v6e/v7x
        ),
    )(x_aug, code, eps.astype(jnp.float32),
      prepped["w1"], prepped["b1"],
      prepped["w2"], prepped["b2"],
      prepped["w3"], prepped["b3"],
      prepped["w4"], prepped["b4"], prepped["wc2"],
      prepped["w5"], prepped["b5"],
      prepped["w6"], prepped["b6"])

    return recon_pad, mu, log_var


def _reference_forward(x, score, eps, params):
    """Pure-JAX f32 reference of the PyTorch forward, for correctness checking."""
    batch = x.shape[0]
    xf = x.reshape(batch, X_DIM)
    code = score.reshape(batch, 1)

    def lin(p, v):
        w, b = p
        return v @ w.T + b

    h = jax.nn.relu(lin(params["fc1"], xf) + lin(params["fc_code1"], code))
    h = jax.nn.relu(lin(params["fc2"], h))
    mu = lin(params["fc31"], h)
    log_var = lin(params["fc32"], h)
    z = eps * jnp.exp(0.5 * log_var) + mu
    h = jax.nn.relu(lin(params["fc4"], z) + lin(params["fc_code2"], code))
    h = jax.nn.relu(lin(params["fc5"], h))
    recon = jax.nn.sigmoid(lin(params["fc6"], h))
    return recon, mu, log_var


if __name__ == "__main__":
    key = jax.random.PRNGKey(0)
    k_params, k_x, k_score, k_eps = jax.random.split(key, 4)

    raw_params = init_vae_params(k_params)
    prepped = prepare_vae_params(raw_params)     # one-time prep, reused every call

    x = jax.random.uniform(k_x, (B, H, W), jnp.float32)       # image-like input in [0,1)
    score = jax.random.normal(k_score, (B,), jnp.float32)
    eps = jax.random.normal(k_eps, (B, Z_DIM), jnp.float32)   # stands in for torch.randn_like

    recon_pad, mu, log_var = vae_forward(x, score, eps, prepped)
    jax.block_until_ready((recon_pad, mu, log_var))

    # Outside the hot path: drop the padded tail columns for comparison.
    recon = recon_pad[:, :X_DIM]

    r_ref, mu_ref, lv_ref = _reference_forward(x, score, eps, raw_params)
    assert recon.shape == (B, X_DIM)
    assert mu.shape == (B, Z_DIM) and log_var.shape == (B, Z_DIM)
    # bf16 streaming of the fc1/fc6 operands introduces small drift vs the f32 reference.
    assert jnp.allclose(recon, r_ref, atol=2e-2, rtol=2e-2)
    assert jnp.allclose(mu, mu_ref, atol=2e-2, rtol=2e-2)
    assert jnp.allclose(log_var, lv_ref, atol=2e-2, rtol=2e-2)

    print("KERNEL_OK")
</pallas_src>

<mosaic_0001>
module attributes {stable_mosaic.version = 11 : i64} {
  func.func @_vae_kernel(%arg0: i32, %arg1: memref<8x5120xbf16, #tpu.memory_space<vmem>>, %arg2: memref<8x1xf32, #tpu.memory_space<vmem>>, %arg3: memref<8x64xf32, #tpu.memory_space<vmem>>, %arg4: memref<5120x256xbf16, #tpu.memory_space<vmem>>, %arg5: memref<1x256xf32, #tpu.memory_space<vmem>>, %arg6: memref<256x128xf32, #tpu.memory_space<vmem>>, %arg7: memref<1x128xf32, #tpu.memory_space<vmem>>, %arg8: memref<128x128xf32, #tpu.memory_space<vmem>>, %arg9: memref<1x128xf32, #tpu.memory_space<vmem>>, %arg10: memref<64x128xf32, #tpu.memory_space<vmem>>, %arg11: memref<1x128xf32, #tpu.memory_space<vmem>>, %arg12: memref<1x128xf32, #tpu.memory_space<vmem>>, %arg13: memref<128x256xf32, #tpu.memory_space<vmem>>, %arg14: memref<1x256xf32, #tpu.memory_space<vmem>>, %arg15: memref<256x512xbf16, #tpu.memory_space<vmem>>, %arg16: memref<1x512xf32, #tpu.memory_space<vmem>>, %arg17: memref<8x512xf32, #tpu.memory_space<vmem>>, %arg18: memref<8x64xf32, #tpu.memory_space<vmem>>, %arg19: memref<8x64xf32, #tpu.memory_space<vmem>>, %arg20: memref<8x256xbf16, #tpu.memory_space<vmem>>) attributes {dimension_semantics = [#tpu.dimension_semantics<arbitrary>], iteration_bounds = array<i64: 10>, scalar_prefetch = 0 : i64, scratch_operands = 1 : i64, tpu.core_type = #tpu.core_type<tc>, window_params = [{pipeline_mode = #tpu.pipeline_mode<synchronous>, transform_indices = @transform_0, window_bounds = array<i64: 8, 5120>}, {pipeline_mode = #tpu.pipeline_mode<synchronous>, transform_indices = @transform_1, window_bounds = array<i64: 8, 1>}, {pipeline_mode = #tpu.pipeline_mode<synchronous>, transform_indices = @transform_2, window_bounds = array<i64: 8, 64>}, {pipeline_mode = #tpu.pipeline_mode<synchronous>, transform_indices = @transform_3, window_bounds = array<i64: 5120, 256>}, {pipeline_mode = #tpu.pipeline_mode<synchronous>, transform_indices = @transform_4, window_bounds = array<i64: 1, 256>}, {pipeline_mode = #tpu.pipeline_mode<synchronous>, transform_indices = @transform_5, window_bounds = array<i64: 256, 128>}, {pipeline_mode = #tpu.pipeline_mode<synchronous>, transform_indices = @transform_6, window_bounds = array<i64: 1, 128>}, {pipeline_mode = #tpu.pipeline_mode<synchronous>, transform_indices = @transform_7, window_bounds = array<i64: 128, 128>}, {pipeline_mode = #tpu.pipeline_mode<synchronous>, transform_indices = @transform_8, window_bounds = array<i64: 1, 128>}, {pipeline_mode = #tpu.pipeline_mode<synchronous>, transform_indices = @transform_9, window_bounds = array<i64: 64, 128>}, {pipeline_mode = #tpu.pipeline_mode<synchronous>, transform_indices = @transform_10, window_bounds = array<i64: 1, 128>}, {pipeline_mode = #tpu.pipeline_mode<synchronous>, transform_indices = @transform_11, window_bounds = array<i64: 1, 128>}, {pipeline_mode = #tpu.pipeline_mode<synchronous>, transform_indices = @transform_12, window_bounds = array<i64: 128, 256>}, {pipeline_mode = #tpu.pipeline_mode<synchronous>, transform_indices = @transform_13, window_bounds = array<i64: 1, 256>}, {transform_indices = @transform_14, window_bounds = array<i64: 256, 512>}, {transform_indices = @transform_15, window_bounds = array<i64: 1, 512>}, {transform_indices = @transform_16, window_bounds = array<i64: 8, 512>}, {pipeline_mode = #tpu.pipeline_mode<synchronous>, transform_indices = @transform_17, window_bounds = array<i64: 8, 64>}, {pipeline_mode = #tpu.pipeline_mode<synchronous>, transform_indices = @transform_18, window_bounds = array<i64: 8, 64>}]} {
    %c0_i32 = arith.constant 0 : i32
    %0 = arith.cmpi eq, %arg0, %c0_i32 : i32
    %1 = arith.extui %0 : i1 to i32
    %c0_i32_0 = arith.constant 0 : i32
    %2 = arith.cmpi ne, %1, %c0_i32_0 : i32
    scf.if %2 {
      %c0_9 = arith.constant 0 : index
      %c0_10 = arith.constant 0 : index
      %15 = vector.load %arg1[%c0_9, %c0_10] : memref<8x5120xbf16, #tpu.memory_space<vmem>>, vector<8x5120xbf16>
      %c0_11 = arith.constant 0 : index
      %c0_12 = arith.constant 0 : index
      %16 = vector.load %arg4[%c0_11, %c0_12] : memref<5120x256xbf16, #tpu.memory_space<vmem>>, vector<5120x256xbf16>
      %cst_13 = arith.constant dense<0.000000e+00> : vector<8x256xf32>
      %17 = tpu.matmul %15, %16, %cst_13 {dimension_numbers = #tpu.dot_dimension_numbers<[1], [0], [0], [1], [0, 0, 1, 1], [], []>} : vector<8x5120xbf16>, vector<5120x256xbf16>, vector<8x256xf32> -> vector<8x256xf32>
      %c0_14 = arith.constant 0 : index
      %c0_15 = arith.constant 0 : index
      %18 = vector.load %arg5[%c0_14, %c0_15] : memref<1x256xf32, #tpu.memory_space<vmem>>, vector<1x256xf32>
      %19 = vector.broadcast %18 : vector<1x256xf32> to vector<8x256xf32>
      %20 = arith.addf %17, %19 : vector<8x256xf32>
      %cst_16 = arith.constant 0.000000e+00 : f32
      %21 = vector.broadcast %cst_16 : f32 to vector<8x256xf32>
      %22 = arith.maximumf %20, %21 : vector<8x256xf32>
      %c0_17 = arith.constant 0 : index
      %c0_18 = arith.constant 0 : index
      %23 = vector.load %arg6[%c0_17, %c0_18] : memref<256x128xf32, #tpu.memory_space<vmem>>, vector<256x128xf32>
      %cst_19 = arith.constant dense<0.000000e+00> : vector<8x128xf32>
      %24 = tpu.matmul %22, %23, %cst_19 {dimension_numbers = #tpu.dot_dimension_numbers<[1], [0], [0], [1], [0, 0, 1, 1], [], []>} : vector<8x256xf32>, vector<256x128xf32>, vector<8x128xf32> -> vector<8x128xf32>
      %c0_20 = arith.constant 0 : index
      %c0_21 = arith.constant 0 : index
      %25 = vector.load %arg7[%c0_20, %c0_21] : memref<1x128xf32, #tpu.memory_space<vmem>>, vector<1x128xf32>
      %26 = vector.broadcast %25 : vector<1x128xf32> to vector<8x128xf32>
      %27 = arith.addf %24, %26 : vector<8x128xf32>
      %cst_22 = arith.constant 0.000000e+00 : f32
      %28 = vector.broadcast %cst_22 : f32 to vector<8x128xf32>
      %29 = arith.maximumf %27, %28 : vector<8x128xf32>
      %c0_23 = arith.constant 0 : index
      %c0_24 = arith.constant 0 : index
      %30 = vector.load %arg8[%c0_23, %c0_24] : memref<128x128xf32, #tpu.memory_space<vmem>>, vector<128x128xf32>
      %cst_25 = arith.constant dense<0.000000e+00> : vector<8x128xf32>
      %31 = tpu.matmul %29, %30, %cst_25 {dimension_numbers = #tpu.dot_dimension_numbers<[1], [0], [0], [1], [0, 0, 1, 1], [], []>} : vector<8x128xf32>, vector<128x128xf32>, vector<8x128xf32> -> vector<8x128xf32>
      %c0_26 = arith.constant 0 : index
      %c0_27 = arith.constant 0 : index
      %32 = vector.load %arg9[%c0_26, %c0_27] : memref<1x128xf32, #tpu.memory_space<vmem>>, vector<1x128xf32>
      %33 = vector.broadcast %32 : vector<1x128xf32> to vector<8x128xf32>
      %34 = arith.addf %31, %33 : vector<8x128xf32>
      %35 = vector.extract_strided_slice %34 {offsets = [0, 0], sizes = [8, 64], strides = [1, 1]} : vector<8x128xf32> to vector<8x64xf32>
      %36 = vector.extract_strided_slice %34 {offsets = [0, 64], sizes = [8, 64], strides = [1, 1]} : vector<8x128xf32> to vector<8x64xf32>
      %c0_28 = arith.constant 0 : index
      %c0_29 = arith.constant 0 : index
      %37 = vector.load %arg18[%c0_28, %c0_29] : memref<8x64xf32, #tpu.memory_space<vmem>>, vector<8x64xf32>
      tpu.vector_store %arg18[%c0_28, %c0_29], %35 {strides = array<i32>} : memref<8x64xf32, #tpu.memory_space<vmem>>, vector<8x64xf32>,
      %c0_30 = arith.constant 0 : index
      %c0_31 = arith.constant 0 : index
      %38 = vector.load %arg19[%c0_30, %c0_31] : memref<8x64xf32, #tpu.memory_space<vmem>>, vector<8x64xf32>
      tpu.vector_store %arg19[%c0_30, %c0_31], %36 {strides = array<i32>} : memref<8x64xf32, #tpu.memory_space<vmem>>, vector<8x64xf32>,
      %c0_32 = arith.constant 0 : index
      %c0_33 = arith.constant 0 : index
      %39 = vector.load %arg3[%c0_32, %c0_33] : memref<8x64xf32, #tpu.memory_space<vmem>>, vector<8x64xf32>
      %cst_34 = arith.constant 5.000000e-01 : f32
      %40 = vector.broadcast %cst_34 : f32 to vector<8x64xf32>
      %41 = arith.mulf %40, %36 : vector<8x64xf32>
      %42 = math.exp %41 : vector<8x64xf32>
      %43 = arith.mulf %39, %42 : vector<8x64xf32>
      %44 = arith.addf %43, %35 : vector<8x64xf32>
      %c0_35 = arith.constant 0 : index
      %c0_36 = arith.constant 0 : index
      %45 = vector.load %arg10[%c0_35, %c0_36] : memref<64x128xf32, #tpu.memory_space<vmem>>, vector<64x128xf32>
      %cst_37 = arith.constant dense<0.000000e+00> : vector<8x128xf32>
      %46 = tpu.matmul %44, %45, %cst_37 {dimension_numbers = #tpu.dot_dimension_numbers<[1], [0], [0], [1], [0, 0, 1, 1], [], []>} : vector<8x64xf32>, vector<64x128xf32>, vector<8x128xf32> -> vector<8x128xf32>
      %c0_38 = arith.constant 0 : index
      %c0_39 = arith.constant 0 : index
      %47 = vector.load %arg11[%c0_38, %c0_39] : memref<1x128xf32, #tpu.memory_space<vmem>>, vector<1x128xf32>
      %48 = vector.broadcast %47 : vector<1x128xf32> to vector<8x128xf32>
      %49 = arith.addf %46, %48 : vector<8x128xf32>
      %c0_40 = arith.constant 0 : index
      %c0_41 = arith.constant 0 : index
      %50 = vector.load %arg2[%c0_40, %c0_41] : memref<8x1xf32, #tpu.memory_space<vmem>>, vector<8x1xf32>
      %c0_42 = arith.constant 0 : index
      %c0_43 = arith.constant 0 : index
      %51 = vector.load %arg12[%c0_42, %c0_43] : memref<1x128xf32, #tpu.memory_space<vmem>>, vector<1x128xf32>
      %52 = vector.broadcast %50 : vector<8x1xf32> to vector<8x128xf32>
      %53 = vector.broadcast %51 : vector<1x128xf32> to vector<8x128xf32>
      %54 = arith.mulf %52, %53 : vector<8x128xf32>
      %55 = arith.addf %49, %54 : vector<8x128xf32>
      %cst_44 = arith.constant 0.000000e+00 : f32
      %56 = vector.broadcast %cst_44 : f32 to vector<8x128xf32>
      %57 = arith.maximumf %55, %56 : vector<8x128xf32>
      %c0_45 = arith.constant 0 : index
      %c0_46 = arith.constant 0 : index
      %58 = vector.load %arg13[%c0_45, %c0_46] : memref<128x256xf32, #tpu.memory_space<vmem>>, vector<128x256xf32>
      %cst_47 = arith.constant dense<0.000000e+00> : vector<8x256xf32>
      %59 = tpu.matmul %57, %58, %cst_47 {dimension_numbers = #tpu.dot_dimension_numbers<[1], [0], [0], [1], [0, 0, 1, 1], [], []>} : vector<8x128xf32>, vector<128x256xf32>, vector<8x256xf32> -> vector<8x256xf32>
      %c0_48 = arith.constant 0 : index
      %c0_49 = arith.constant 0 : index
      %60 = vector.load %arg14[%c0_48, %c0_49] : memref<1x256xf32, #tpu.memory_space<vmem>>, vector<1x256xf32>
      %61 = vector.broadcast %60 : vector<1x256xf32> to vector<8x256xf32>
      %62 = arith.addf %59, %61 : vector<8x256xf32>
      %cst_50 = arith.constant 0.000000e+00 : f32
      %63 = vector.broadcast %cst_50 : f32 to vector<8x256xf32>
      %64 = arith.maximumf %62, %63 : vector<8x256xf32>
      %65 = arith.truncf %64 : vector<8x256xf32> to vector<8x256xbf16>
      %c0_51 = arith.constant 0 : index
      %c0_52 = arith.constant 0 : index
      %66 = vector.load %arg20[%c0_51, %c0_52] : memref<8x256xbf16, #tpu.memory_space<vmem>>, vector<8x256xbf16>
      tpu.vector_store %arg20[%c0_51, %c0_52], %65 {strides = array<i32>} : memref<8x256xbf16, #tpu.memory_space<vmem>>, vector<8x256xbf16>,
    } else {
    }
    %c0 = arith.constant 0 : index
    %c0_1 = arith.constant 0 : index
    %3 = vector.load %arg20[%c0, %c0_1] : memref<8x256xbf16, #tpu.memory_space<vmem>>, vector<8x256xbf16>
    %c0_2 = arith.constant 0 : index
    %c0_3 = arith.constant 0 : index
    %4 = vector.load %arg15[%c0_2, %c0_3] : memref<256x512xbf16, #tpu.memory_space<vmem>>, vector<256x512xbf16>
    %cst = arith.constant dense<0.000000e+00> : vector<8x512xf32>
    %5 = tpu.matmul %3, %4, %cst {dimension_numbers = #tpu.dot_dimension_numbers<[1], [0], [0], [1], [0, 0, 1, 1], [], []>} : vector<8x256xbf16>, vector<256x512xbf16>, vector<8x512xf32> -> vector<8x512xf32>
    %c0_4 = arith.constant 0 : index
    %c0_5 = arith.constant 0 : index
    %6 = vector.load %arg16[%c0_4, %c0_5] : memref<1x512xf32, #tpu.memory_space<vmem>>, vector<1x512xf32>
    %7 = vector.broadcast %6 : vector<1x512xf32> to vector<8x512xf32>
    %8 = arith.addf %5, %7 : vector<8x512xf32>
    %9 = arith.negf %8 : vector<8x512xf32>
    %10 = math.exp %9 : vector<8x512xf32>
    %cst_6 = arith.constant 1.000000e+00 : f32
    %11 = vector.broadcast %cst_6 : f32 to vector<8x512xf32>
    %12 = arith.addf %11, %10 : vector<8x512xf32>
    %13 = arith.divf %11, %12 : vector<8x512xf32>
    %c0_7 = arith.constant 0 : index
    %c0_8 = arith.constant 0 : index
    %14 = vector.load %arg17[%c0_7, %c0_8] : memref<8x512xf32, #tpu.memory_space<vmem>>, vector<8x512xf32>
    tpu.vector_store %arg17[%c0_7, %c0_8], %13 {strides = array<i32>} : memref<8x512xf32, #tpu.memory_space<vmem>>, vector<8x512xf32>,
    return
  }
  func.func @transform_0(%arg0: i32) -> (i32, i32) {
    %c0_i32 = arith.constant 0 : i32
    %c0_i32_0 = arith.constant 0 : i32
    %c0_i32_1 = arith.constant 0 : i32
    return %c0_i32, %c0_i32_0 : i32, i32
  }
  func.func @transform_1(%arg0: i32) -> (i32, i32) {
    %c0_i32 = arith.constant 0 : i32
    %c0_i32_0 = arith.constant 0 : i32
    %c0_i32_1 = arith.constant 0 : i32
    return %c0_i32, %c0_i32_0 : i32, i32
  }
  func.func @transform_2(%arg0: i32) -> (i32, i32) {
    %c0_i32 = arith.constant 0 : i32
    %c0_i32_0 = arith.constant 0 : i32
    %c0_i32_1 = arith.constant 0 : i32
    return %c0_i32, %c0_i32_0 : i32, i32
  }
  func.func @transform_3(%arg0: i32) -> (i32, i32) {
    %c0_i32 = arith.constant 0 : i32
    %c0_i32_0 = arith.constant 0 : i32
    %c0_i32_1 = arith.constant 0 : i32
    return %c0_i32, %c0_i32_0 : i32, i32
  }
  func.func @transform_4(%arg0: i32) -> (i32, i32) {
    %c0_i32 = arith.constant 0 : i32
    %c0_i32_0 = arith.constant 0 : i32
    %c0_i32_1 = arith.constant 0 : i32
    return %c0_i32, %c0_i32_0 : i32, i32
  }
  func.func @transform_5(%arg0: i32) -> (i32, i32) {
    %c0_i32 = arith.constant 0 : i32
    %c0_i32_0 = arith.constant 0 : i32
    %c0_i32_1 = arith.constant 0 : i32
    return %c0_i32, %c0_i32_0 : i32, i32
  }
  func.func @transform_6(%arg0: i32) -> (i32, i32) {
    %c0_i32 = arith.constant 0 : i32
    %c0_i32_0 = arith.constant 0 : i32
    %c0_i32_1 = arith.constant 0 : i32
    return %c0_i32, %c0_i32_0 : i32, i32
  }
  func.func @transform_7(%arg0: i32) -> (i32, i32) {
    %c0_i32 = arith.constant 0 : i32
    %c0_i32_0 = arith.constant 0 : i32
    %c0_i32_1 = arith.constant 0 : i32
    return %c0_i32, %c0_i32_0 : i32, i32
  }
  func.func @transform_8(%arg0: i32) -> (i32, i32) {
    %c0_i32 = arith.constant 0 : i32
    %c0_i32_0 = arith.constant 0 : i32
    %c0_i32_1 = arith.constant 0 : i32
    return %c0_i32, %c0_i32_0 : i32, i32
  }
  func.func @transform_9(%arg0: i32) -> (i32, i32) {
    %c0_i32 = arith.constant 0 : i32
    %c0_i32_0 = arith.constant 0 : i32
    %c0_i32_1 = arith.constant 0 : i32
    return %c0_i32, %c0_i32_0 : i32, i32
  }
  func.func @transform_10(%arg0: i32) -> (i32, i32) {
    %c0_i32 = arith.constant 0 : i32
    %c0_i32_0 = arith.constant 0 : i32
    %c0_i32_1 = arith.constant 0 : i32
    return %c0_i32, %c0_i32_0 : i32, i32
  }
  func.func @transform_11(%arg0: i32) -> (i32, i32) {
    %c0_i32 = arith.constant 0 : i32
    %c0_i32_0 = arith.constant 0 : i32
    %c0_i32_1 = arith.constant 0 : i32
    return %c0_i32, %c0_i32_0 : i32, i32
  }
  func.func @transform_12(%arg0: i32) -> (i32, i32) {
    %c0_i32 = arith.constant 0 : i32
    %c0_i32_0 = arith.constant 0 : i32
    %c0_i32_1 = arith.constant 0 : i32
    return %c0_i32, %c0_i32_0 : i32, i32
  }
  func.func @transform_13(%arg0: i32) -> (i32, i32) {
    %c0_i32 = arith.constant 0 : i32
    %c0_i32_0 = arith.constant 0 : i32
    %c0_i32_1 = arith.constant 0 : i32
    return %c0_i32, %c0_i32_0 : i32, i32
  }
  func.func @transform_14(%arg0: i32) -> (i32, i32) {
    %c0_i32 = arith.constant 0 : i32
    %c0_i32_0 = arith.constant 0 : i32
    return %c0_i32, %arg0 : i32, i32
  }
  func.func @transform_15(%arg0: i32) -> (i32, i32) {
    %c0_i32 = arith.constant 0 : i32
    %c0_i32_0 = arith.constant 0 : i32
    return %c0_i32, %arg0 : i32, i32
  }
  func.func @transform_16(%arg0: i32) -> (i32, i32) {
    %c0_i32 = arith.constant 0 : i32
    %c0_i32_0 = arith.constant 0 : i32
    return %c0_i32, %arg0 : i32, i32
  }
  func.func @transform_17(%arg0: i32) -> (i32, i32) {
    %c0_i32 = arith.constant 0 : i32
    %c0_i32_0 = arith.constant 0 : i32
    %c0_i32_1 = arith.constant 0 : i32
    return %c0_i32, %c0_i32_0 : i32, i32
  }
  func.func @transform_18(%arg0: i32) -> (i32, i32) {
    %c0_i32 = arith.constant 0 : i32
    %c0_i32_0 = arith.constant 0 : i32
    %c0_i32_1 = arith.constant 0 : i32
    return %c0_i32, %c0_i32_0 : i32, i32
  }
}

</mosaic_0001>

<llo_original>
// kernel: vae_forward.1
$region0: #{vae_forward.1}
  #allocation0 [shape = 'u32[]', space=smem, size = 0x4, offset = 0x4, fixed_abs, tag = 'smem constant byte address 0x4 - core index']
  #allocation1 [shape = 'u32[72,128]{1,0:T(1,128)}', space=vmem, size = 0x9000, scoped, tag = 'internal scratch']
  #allocation2 [shape = 'bf16[8,256]{1,0:T(8,128)(2,1)}', space=vmem, size = 0x1000, scoped, tag = 'scratch operand']
  %s0 = inlined_call_operand.vmem [shape: bf16[8,5120], index: 0, kind: input, shape index: {}]
  %s1 = inlined_call_operand.vmem [shape: f32[8,1], index: 1, kind: input, shape index: {}]
  %s2 = inlined_call_operand.hbm [shape: f32[8,64], index: 2, kind: input, shape index: {}]
  %s3 = inlined_call_operand.hbm [shape: bf16[5120,256], index: 3, kind: input, shape index: {}]
  %s4 = inlined_call_operand.hbm [shape: f32[1,256], index: 4, kind: input, shape index: {}]
  %s5 = inlined_call_operand.hbm [shape: f32[256,128], index: 5, kind: input, shape index: {}]
  %s6 = inlined_call_operand.hbm [shape: f32[1,128], index: 6, kind: input, shape index: {}]
  %s7 = inlined_call_operand.hbm [shape: f32[128,128], index: 7, kind: input, shape index: {}]
  %s8 = inlined_call_operand.hbm [shape: f32[1,128], index: 8, kind: input, shape index: {}]
  %s9 = inlined_call_operand.hbm [shape: f32[64,128], index: 9, kind: input, shape index: {}]
  %s10 = inlined_call_operand.hbm [shape: f32[1,128], index: 10, kind: input, shape index: {}]
  %s11 = inlined_call_operand.hbm [shape: f32[1,128], index: 11, kind: input, shape index: {}]
  %s12 = inlined_call_operand.hbm [shape: f32[128,256], index: 12, kind: input, shape index: {}]
  %s13 = inlined_call_operand.hbm [shape: f32[1,256], index: 13, kind: input, shape index: {}]
  %s14 = inlined_call_operand.hbm [shape: bf16[256,5120], index: 14, kind: input, shape index: {}]
  %s15 = inlined_call_operand.hbm [shape: f32[1,5120], index: 15, kind: input, shape index: {}]
  %s16 = inlined_call_operand.hbm [shape: f32[8,5120], index: 16, kind: output, shape index: {0}]
  %s17 = inlined_call_operand.hbm [shape: f32[8,64], index: 17, kind: output, shape index: {1}]
  %s18 = inlined_call_operand.hbm [shape: f32[8,64], index: 18, kind: output, shape index: {2}]
  %19 = xla_tuple %s16, %s17, %s18
  %s20 = sld [smem:[#allocation0]]
  $region173: #{vae_forward.1} parent=0
    _
  %s22 = ssub.s32 1, %s20
  %s23 = scalar_select 0, %s22, %s20
  $region1: #{vae_forward.1} parent=0
    #allocation3 [shape = 'u8[4096]{0}', space=vmem, size = 0x1000, scoped, tag = 'input window, operand 2, single buffered']
    #allocation4 [shape = 's32[2]{0}', space=sflag, size = 0x8, scoped, tag = 'scoped memory for vae_forward.1']
    #allocation5 [shape = 's32[2]{0}', space=sflag, size = 0x8, scoped, tag = 'scoped memory for vae_forward.1']
    #allocation6 [shape = 'u8[2621440]{0}', space=vmem, size = 0x280000, scoped, tag = 'input window, operand 3, single buffered']
    #allocation7 [shape = 's32[1]{0}', space=sflag, size = 0x4, scoped, tag = 'scoped memory for vae_forward.1']
    #allocation8 [shape = 'u8[1024]{0}', space=vmem, size = 0x400, scoped, tag = 'input window, operand 4, single buffered']
    #allocation9 [shape = 'u8[131072]{0}', space=vmem, size = 0x20000, scoped, tag = 'input window, operand 5, single buffered']
    #allocation10 [shape = 's32[1]{0}', space=sflag, size = 0x4, scoped, tag = 'scoped memory for vae_forward.1']
    #allocation11 [shape = 'u8[512]{0}', space=vmem, size = 0x400, scoped, tag = 'input window, operand 6, single buffered']
    #allocation12 [shape = 'u8[65536]{0}', space=vmem, size = 0x10000, scoped, tag = 'input window, operand 7, single buffered']
    #allocation13 [shape = 's32[1]{0}', space=sflag, size = 0x4, scoped, tag = 'scoped memory for vae_forward.1']
    #allocation14 [shape = 'u8[512]{0}', space=vmem, size = 0x400, scoped, tag = 'input window, operand 8, single buffered']
    #allocation15 [shape = 'u8[32768]{0}', space=vmem, size = 0x8000, scoped, tag = 'input window, operand 9, single buffered']
    #allocation16 [shape = 's32[1]{0}', space=sflag, size = 0x4, scoped, tag = 'scoped memory for vae_forward.1']
    #allocation17 [shape = 'u8[512]{0}', space=vmem, size = 0x400, scoped, tag = 'input window, operand 10, single buffered']
    #allocation18 [shape = 'u8[512]{0}', space=vmem, size = 0x400, scoped, tag = 'input window, operand 11, single buffered']
    #allocation19 [shape = 's32[1]{0}', space=sflag, size = 0x4, scoped, tag = 'scoped memory for vae_forward.1']
    #allocation20 [shape = 'u8[131072]{0}', space=vmem, size = 0x20000, scoped, tag = 'input window, operand 12, single buffered']
    #allocation21 [shape = 'u8[1024]{0}', space=vmem, size = 0x400, scoped, tag = 'input window, operand 13, single buffered']
    #allocation22 [shape = 's32[1]{0}', space=sflag, size = 0x4, scoped, tag = 'scoped memory for vae_forward.1']
    #allocation23 [shape = 'u8[524288]{0}', space=vmem, size = 0x80000, scoped, tag = 'input window, operand 14']
    #allocation24 [shape = 'u8[4096]{0}', space=vmem, size = 0x1000, scoped, tag = 'input window, operand 15']
    #allocation25 [shape = 'u8[32768]{0}', space=vmem, size = 0x8000, scoped, tag = 'output window, operand 0']
    #allocation26 [shape = 'u8[4096]{0}', space=vmem, size = 0x1000, scoped, tag = 'output window, operand 1, single buffered']
    #allocation27 [shape = 's32[1]{0}', space=sflag, size = 0x4, scoped, tag = 'scoped memory for vae_forward.1']
    #allocation28 [shape = 'u8[4096]{0}', space=vmem, size = 0x1000, scoped, tag = 'output window, operand 2, single buffered']
    %24 = vsyncpa [#allocation4], 0
    %25 = vsyncpa [#allocation7], 0
    %26 = vsyncpa [#allocation10], 0
    %27 = vsyncpa [#allocation13], 0
    %28 = vsyncpa [#allocation16], 0
    %29 = vsyncpa [#allocation19], 0
    %30 = vsyncpa [#allocation22], 0
    %31 = vsyncpa [#allocation5], 0
    %s32 = scalar_lea.sflag [#allocation5], 1
    %33 = vsyncpa %s32, 0
    %34 = vsyncpa [#allocation27], 0
    loop: start=0, step=1, limit=12
    $region2: #{vae_forward.1} parent=1 // loop_pre_header
      _
    $region3: #{vae_forward.1} parent=1 // loop_header
      %s36 = sphi 0, %s40
      %p37 = scmp.ge.s32.totalorder %s36, 12
      %s44 = sphi 0, %s44
      %s46 = sphi 0, %s44
      %s47 = sphi 0, %s46
      %s61 = sphi 0, %s47
      %s65 = sphi 0, %s65
      %s67 = sphi 0, %s65
      %s68 = sphi 0, %s67
      %s82 = sphi 0, %s68
      %s86 = sphi 0, %s86
      %s88 = sphi 0, %s86
      %s89 = sphi 0, %s88
      %s103 = sphi 0, %s89
      %s107 = sphi 0, %s107
      %s109 = sphi 0, %s107
      %s110 = sphi 0, %s109
      %s124 = sphi 0, %s110
      %s128 = sphi 0, %s128
      %s130 = sphi 0, %s128
      %s131 = sphi 0, %s130
      %s145 = sphi 0, %s131
      %s149 = sphi 0, %s149
      %s151 = sphi 0, %s149
      %s152 = sphi 0, %s151
      %s166 = sphi 0, %s152
      %s170 = sphi 0, %s170
      %s172 = sphi 0, %s170
      %s173 = sphi 0, %s172
      %s187 = sphi 0, %s173
      %s191 = sphi 0, %s191
      %s193 = sphi 0, %s191
      %s194 = sphi 0, %s193
      %s208 = sphi 0, %s194
      %s212 = sphi 0, %s212
      %s214 = sphi 0, %s212
      %s215 = sphi 0, %s214
      %s229 = sphi 0, %s215
      %s233 = sphi 0, %s233
      %s235 = sphi 0, %s233
      %s236 = sphi 0, %s235
      %s250 = sphi 0, %s236
      %s254 = sphi 0, %s254
      %s256 = sphi 0, %s254
      %s257 = sphi 0, %s256
      %s271 = sphi 0, %s257
      %s275 = sphi 0, %s275
      %s277 = sphi 0, %s275
      %s278 = sphi 0, %s277
      %s292 = sphi 0, %s278
      %s296 = sphi 0, %s296
      %s298 = sphi 0, %s296
      %s299 = sphi 0, %s298
      %s313 = sphi 0, %s299
      %s317 = sphi 0, %s317
      %s319 = sphi 0, %s317
      %s320 = sphi 0, %s319
      %s334 = sphi 0, %s320
      %s340 = sphi 0, %s342
      %s343 = sphi 0, %s340
      %s344 = sphi 0, %s343
      %s360 = sphi 0, %s344
      %s366 = sphi 0, %s368
      %s369 = sphi 0, %s366
      %s370 = sphi 0, %s369
      %s386 = sphi 0, %s370
      %s392 = sphi 0, %s394
      %s395 = sphi 0, %s392
      %s396 = sphi 0, %s395
      %s412 = sphi 0, %s396
      %s416 = sphi 0, %s416
      %s418 = sphi 0, %s416
      %s419 = sphi 0, %s418
      %s433 = sphi 0, %s419
      %s437 = sphi 0, %s437
      %s439 = sphi 0, %s437
      %s440 = sphi 0, %s439
      %s454 = sphi 0, %s440
    $region4: #{vae_forward.1} parent=1 // loop_header_branch
      %39 = sbr.rel (%p37) target = $region8
    $region5: #{vae_forward.1} parent=1 // loop_body
      %s41 = ssub.s32 %s36, 1
      %s42 = ssub.s32 %s36, 2
      %s43 = sadd.s32 %s36, 1
      %s45 = sadd.s32 %s44, 1
      %p48 = scmp.eq.s32.totalorder %s36, 9
      %p49 = scmp.ne.s32.totalorder %s44, %s46
      %p50 = scmp.eq.s32.totalorder %s36, 0
      %p51 = por %p49, %p50
      %p52 = scmp.ne.s32.totalorder %s44, %s46
      %p53 = scmp.eq.s32.totalorder %s41, 9
      %p54 = por %p52, %p53
      %p55 = scmp.ne.s32.totalorder %s46, %s47
      %p56 = scmp.eq.s32.totalorder %s41, 0
      %p57 = por %p55, %p56
      %p58 = scmp.ne.s32.totalorder %s46, %s47
      %p59 = scmp.eq.s32.totalorder %s42, 9
      %p60 = por %p58, %p59
      %p62 = scmp.ne.s32.totalorder %s47, %s61
      %p63 = scmp.eq.s32.totalorder %s42, 0
      %p64 = por %p62, %p63
      %s66 = sadd.s32 %s65, 1
      %p69 = scmp.eq.s32.totalorder %s36, 9
      %p70 = scmp.ne.s32.totalorder %s65, %s67
      %p71 = scmp.eq.s32.totalorder %s36, 0
      %p72 = por %p70, %p71
      %p73 = scmp.ne.s32.totalorder %s65, %s67
      %p74 = scmp.eq.s32.totalorder %s41, 9
      %p75 = por %p73, %p74
      %p76 = scmp.ne.s32.totalorder %s67, %s68
      %p77 = scmp.eq.s32.totalorder %s41, 0
      %p78 = por %p76, %p77
      %p79 = scmp.ne.s32.totalorder %s67, %s68
      %p80 = scmp.eq.s32.totalorder %s42, 9
      %p81 = por %p79, %p80
      %p83 = scmp.ne.s32.totalorder %s68, %s82
      %p84 = scmp.eq.s32.totalorder %s42, 0
      %p85 = por %p83, %p84
      %s87 = sadd.s32 %s86, 1
      %p90 = scmp.eq.s32.totalorder %s36, 9
      %p91 = scmp.ne.s32.totalorder %s86, %s88
      %p92 = scmp.eq.s32.totalorder %s36, 0
      %p93 = por %p91, %p92
      %p94 = scmp.ne.s32.totalorder %s86, %s88
      %p95 = scmp.eq.s32.totalorder %s41, 9
      %p96 = por %p94, %p95
      %p97 = scmp.ne.s32.totalorder %s88, %s89
      %p98 = scmp.eq.s32.totalorder %s41, 0
      %p99 = por %p97, %p98
      %p100 = scmp.ne.s32.totalorder %s88, %s89
      %p101 = scmp.eq.s32.totalorder %s42, 9
      %p102 = por %p100, %p101
      %p104 = scmp.ne.s32.totalorder %s89, %s103
      %p105 = scmp.eq.s32.totalorder %s42, 0
      %p106 = por %p104, %p105
      %s108 = sadd.s32 %s107, 1
      %p111 = scmp.eq.s32.totalorder %s36, 9
      %p112 = scmp.ne.s32.totalorder %s107, %s109
      %p113 = scmp.eq.s32.totalorder %s36, 0
      %p114 = por %p112, %p113
      %p115 = scmp.ne.s32.totalorder %s107, %s109
      %p116 = scmp.eq.s32.totalorder %s41, 9
      %p117 = por %p115, %p116
      %p118 = scmp.ne.s32.totalorder %s109, %s110
      %p119 = scmp.eq.s32.totalorder %s41, 0
      %p120 = por %p118, %p119
      %p121 = scmp.ne.s32.totalorder %s109, %s110
      %p122 = scmp.eq.s32.totalorder %s42, 9
      %p123 = por %p121, %p122
      %p125 = scmp.ne.s32.totalorder %s110, %s124
      %p126 = scmp.eq.s32.totalorder %s42, 0
      %p127 = por %p125, %p126
      %s129 = sadd.s32 %s128, 1
      %p132 = scmp.eq.s32.totalorder %s36, 9
      %p133 = scmp.ne.s32.totalorder %s128, %s130
      %p134 = scmp.eq.s32.totalorder %s36, 0
      %p135 = por %p133, %p134
      %p136 = scmp.ne.s32.totalorder %s128, %s130
      %p137 = scmp.eq.s32.totalorder %s41, 9
      %p138 = por %p136, %p137
      %p139 = scmp.ne.s32.totalorder %s130, %s131
      %p140 = scmp.eq.s32.totalorder %s41, 0
      %p141 = por %p139, %p140
      %p142 = scmp.ne.s32.totalorder %s130, %s131
      %p143 = scmp.eq.s32.totalorder %s42, 9
      %p144 = por %p142, %p143
      %p146 = scmp.ne.s32.totalorder %s131, %s145
      %p147 = scmp.eq.s32.totalorder %s42, 0
      %p148 = por %p146, %p147
      %s150 = sadd.s32 %s149, 1
      %p153 = scmp.eq.s32.totalorder %s36, 9
      %p154 = scmp.ne.s32.totalorder %s149, %s151
      %p155 = scmp.eq.s32.totalorder %s36, 0
      %p156 = por %p154, %p155
      %p157 = scmp.ne.s32.totalorder %s149, %s151
      %p158 = scmp.eq.s32.totalorder %s41, 9
      %p159 = por %p157, %p158
      %p160 = scmp.ne.s32.totalorder %s151, %s152
      %p161 = scmp.eq.s32.totalorder %s41, 0
      %p162 = por %p160, %p161
      %p163 = scmp.ne.s32.totalorder %s151, %s152
      %p164 = scmp.eq.s32.totalorder %s42, 9
      %p165 = por %p163, %p164
      %p167 = scmp.ne.s32.totalorder %s152, %s166
      %p168 = scmp.eq.s32.totalorder %s42, 0
      %p169 = por %p167, %p168
      %s171 = sadd.s32 %s170, 1
      %p174 = scmp.eq.s32.totalorder %s36, 9
      %p175 = scmp.ne.s32.totalorder %s170, %s172
      %p176 = scmp.eq.s32.totalorder %s36, 0
      %p177 = por %p175, %p176
      %p178 = scmp.ne.s32.totalorder %s170, %s172
      %p179 = scmp.eq.s32.totalorder %s41, 9
      %p180 = por %p178, %p179
      %p181 = scmp.ne.s32.totalorder %s172, %s173
      %p182 = scmp.eq.s32.totalorder %s41, 0
      %p183 = por %p181, %p182
      %p184 = scmp.ne.s32.totalorder %s172, %s173
      %p185 = scmp.eq.s32.totalorder %s42, 9
      %p186 = por %p184, %p185
      %p188 = scmp.ne.s32.totalorder %s173, %s187
      %p189 = scmp.eq.s32.totalorder %s42, 0
      %p190 = por %p188, %p189
      %s192 = sadd.s32 %s191, 1
      %p195 = scmp.eq.s32.totalorder %s36, 9
      %p196 = scmp.ne.s32.totalorder %s191, %s193
      %p197 = scmp.eq.s32.totalorder %s36, 0
      %p198 = por %p196, %p197
      %p199 = scmp.ne.s32.totalorder %s191, %s193
      %p200 = scmp.eq.s32.totalorder %s41, 9
      %p201 = por %p199, %p200
      %p202 = scmp.ne.s32.totalorder %s193, %s194
      %p203 = scmp.eq.s32.totalorder %s41, 0
      %p204 = por %p202, %p203
      %p205 = scmp.ne.s32.totalorder %s193, %s194
      %p206 = scmp.eq.s32.totalorder %s42, 9
      %p207 = por %p205, %p206
      %p209 = scmp.ne.s32.totalorder %s194, %s208
      %p210 = scmp.eq.s32.totalorder %s42, 0
      %p211 = por %p209, %p210
      %s213 = sadd.s32 %s212, 1
      %p216 = scmp.eq.s32.totalorder %s36, 9
      %p217 = scmp.ne.s32.totalorder %s212, %s214
      %p218 = scmp.eq.s32.totalorder %s36, 0
      %p219 = por %p217, %p218
      %p220 = scmp.ne.s32.totalorder %s212, %s214
      %p221 = scmp.eq.s32.totalorder %s41, 9
      %p222 = por %p220, %p221
      %p223 = scmp.ne.s32.totalorder %s214, %s215
      %p224 = scmp.eq.s32.totalorder %s41, 0
      %p225 = por %p223, %p224
      %p226 = scmp.ne.s32.totalorder %s214, %s215
      %p227 = scmp.eq.s32.totalorder %s42, 9
      %p228 = por %p226, %p227
      %p230 = scmp.ne.s32.totalorder %s215, %s229
      %p231 = scmp.eq.s32.totalorder %s42, 0
      %p232 = por %p230, %p231
      %s234 = sadd.s32 %s233, 1
      %p237 = scmp.eq.s32.totalorder %s36, 9
      %p238 = scmp.ne.s32.totalorder %s233, %s235
      %p239 = scmp.eq.s32.totalorder %s36, 0
      %p240 = por %p238, %p239
      %p241 = scmp.ne.s32.totalorder %s233, %s235
      %p242 = scmp.eq.s32.totalorder %s41, 9
      %p243 = por %p241, %p242
      %p244 = scmp.ne.s32.totalorder %s235, %s236
      %p245 = scmp.eq.s32.totalorder %s41, 0
      %p246 = por %p244, %p245
      %p247 = scmp.ne.s32.totalorder %s235, %s236
      %p248 = scmp.eq.s32.totalorder %s42, 9
      %p249 = por %p247, %p248
      %p251 = scmp.ne.s32.totalorder %s236, %s250
      %p252 = scmp.eq.s32.totalorder %s42, 0
      %p253 = por %p251, %p252
      %s255 = sadd.s32 %s254, 1
      %p258 = scmp.eq.s32.totalorder %s36, 9
      %p259 = scmp.ne.s32.totalorder %s254, %s256
      %p260 = scmp.eq.s32.totalorder %s36, 0
      %p261 = por %p259, %p260
      %p262 = scmp.ne.s32.totalorder %s254, %s256
      %p263 = scmp.eq.s32.totalorder %s41, 9
      %p264 = por %p262, %p263
      %p265 = scmp.ne.s32.totalorder %s256, %s257
      %p266 = scmp.eq.s32.totalorder %s41, 0
      %p267 = por %p265, %p266
      %p268 = scmp.ne.s32.totalorder %s256, %s257
      %p269 = scmp.eq.s32.totalorder %s42, 9
      %p270 = por %p268, %p269
      %p272 = scmp.ne.s32.totalorder %s257, %s271
      %p273 = scmp.eq.s32.totalorder %s42, 0
      %p274 = por %p272, %p273
      %s276 = sadd.s32 %s275, 1
      %p279 = scmp.eq.s32.totalorder %s36, 9
      %p280 = scmp.ne.s32.totalorder %s275, %s277
      %p281 = scmp.eq.s32.totalorder %s36, 0
      %p282 = por %p280, %p281
      %p283 = scmp.ne.s32.totalorder %s275, %s277
      %p284 = scmp.eq.s32.totalorder %s41, 9
      %p285 = por %p283, %p284
      %p286 = scmp.ne.s32.totalorder %s277, %s278
      %p287 = scmp.eq.s32.totalorder %s41, 0
      %p288 = por %p286, %p287
      %p289 = scmp.ne.s32.totalorder %s277, %s278
      %p290 = scmp.eq.s32.totalorder %s42, 9
      %p291 = por %p289, %p290
      %p293 = scmp.ne.s32.totalorder %s278, %s292
      %p294 = scmp.eq.s32.totalorder %s42, 0
      %p295 = por %p293, %p294
      %s297 = sadd.s32 %s296, 1
      %p300 = scmp.eq.s32.totalorder %s36, 9
      %p301 = scmp.ne.s32.totalorder %s296, %s298
      %p302 = scmp.eq.s32.totalorder %s36, 0
      %p303 = por %p301, %p302
      %p304 = scmp.ne.s32.totalorder %s296, %s298
      %p305 = scmp.eq.s32.totalorder %s41, 9
      %p306 = por %p304, %p305
      %p307 = scmp.ne.s32.totalorder %s298, %s299
      %p308 = scmp.eq.s32.totalorder %s41, 0
      %p309 = por %p307, %p308
      %p310 = scmp.ne.s32.totalorder %s298, %s299
      %p311 = scmp.eq.s32.totalorder %s42, 9
      %p312 = por %p310, %p311
      %p314 = scmp.ne.s32.totalorder %s299, %s313
      %p315 = scmp.eq.s32.totalorder %s42, 0
      %p316 = por %p314, %p315
      %s318 = sadd.s32 %s317, 1
      %p321 = scmp.eq.s32.totalorder %s36, 9
      %p322 = scmp.ne.s32.totalorder %s317, %s319
      %p323 = scmp.eq.s32.totalorder %s36, 0
      %p324 = por %p322, %p323
      %p325 = scmp.ne.s32.totalorder %s317, %s319
      %p326 = scmp.eq.s32.totalorder %s41, 9
      %p327 = por %p325, %p326
      %p328 = scmp.ne.s32.totalorder %s319, %s320
      %p329 = scmp.eq.s32.totalorder %s41, 0
      %p330 = por %p328, %p329
      %p331 = scmp.ne.s32.totalorder %s319, %s320
      %p332 = scmp.eq.s32.totalorder %s42, 9
      %p333 = por %p331, %p332
      %p335 = scmp.ne.s32.totalorder %s320, %s334
      %p336 = scmp.eq.s32.totalorder %s42, 0
      %p337 = por %p335, %p336
      %s338 = ssub.s32 %s36, %s43
      %p339 = scmp.eq.s32.totalorder %s338, 0
      %s341 = sadd.s32 %s340, 1
      %s342 = scalar_select %p339, %s340, %s341
      %p345 = pneg %p339
      %p346 = scmp.eq.s32.totalorder %s36, 9
      %p347 = por %p345, %p346
      %p348 = scmp.ne.s32.totalorder %s340, %s343
      %p349 = scmp.eq.s32.totalorder %s36, 0
      %p350 = por %p348, %p349
      %p351 = scmp.ne.s32.totalorder %s340, %s343
      %p352 = scmp.eq.s32.totalorder %s41, 9
      %p353 = por %p351, %p352
      %p354 = scmp.ne.s32.totalorder %s343, %s344
      %p355 = scmp.eq.s32.totalorder %s41, 0
      %p356 = por %p354, %p355
      %p357 = scmp.ne.s32.totalorder %s343, %s344
      %p358 = scmp.eq.s32.totalorder %s42, 9
      %p359 = por %p357, %p358
      %p361 = scmp.ne.s32.totalorder %s344, %s360
      %p362 = scmp.eq.s32.totalorder %s42, 0
      %p363 = por %p361, %p362
      %s364 = ssub.s32 %s36, %s43
      %p365 = scmp.eq.s32.totalorder %s364, 0
      %s367 = sadd.s32 %s366, 1
      %s368 = scalar_select %p365, %s366, %s367
      %p371 = pneg %p365
      %p372 = scmp.eq.s32.totalorder %s36, 9
      %p373 = por %p371, %p372
      %p374 = scmp.ne.s32.totalorder %s366, %s369
      %p375 = scmp.eq.s32.totalorder %s36, 0
      %p376 = por %p374, %p375
      %p377 = scmp.ne.s32.totalorder %s366, %s369
      %p378 = scmp.eq.s32.totalorder %s41, 9
      %p379 = por %p377, %p378
      %p380 = scmp.ne.s32.totalorder %s369, %s370
      %p381 = scmp.eq.s32.totalorder %s41, 0
      %p382 = por %p380, %p381
      %p383 = scmp.ne.s32.totalorder %s369, %s370
      %p384 = scmp.eq.s32.totalorder %s42, 9
      %p385 = por %p383, %p384
      %p387 = scmp.ne.s32.totalorder %s370, %s386
      %p388 = scmp.eq.s32.totalorder %s42, 0
      %p389 = por %p387, %p388
      %s390 = ssub.s32 %s36, %s43
      %p391 = scmp.eq.s32.totalorder %s390, 0
      %s393 = sadd.s32 %s392, 1
      %s394 = scalar_select %p391, %s392, %s393
      %p397 = pneg %p391
      %p398 = scmp.eq.s32.totalorder %s36, 9
      %p399 = por %p397, %p398
      %p400 = scmp.ne.s32.totalorder %s392, %s395
      %p401 = scmp.eq.s32.totalorder %s36, 0
      %p402 = por %p400, %p401
      %p403 = scmp.ne.s32.totalorder %s392, %s395
      %p404 = scmp.eq.s32.totalorder %s41, 9
      %p405 = por %p403, %p404
      %p406 = scmp.ne.s32.totalorder %s395, %s396
      %p407 = scmp.eq.s32.totalorder %s41, 0
      %p408 = por %p406, %p407
      %p409 = scmp.ne.s32.totalorder %s395, %s396
      %p410 = scmp.eq.s32.totalorder %s42, 9
      %p411 = por %p409, %p410
      %p413 = scmp.ne.s32.totalorder %s396, %s412
      %p414 = scmp.eq.s32.totalorder %s42, 0
      %p415 = por %p413, %p414
      %s417 = sadd.s32 %s416, 1
      %p420 = scmp.eq.s32.totalorder %s36, 9
      %p421 = scmp.ne.s32.totalorder %s416, %s418
      %p422 = scmp.eq.s32.totalorder %s36, 0
      %p423 = por %p421, %p422
      %p424 = scmp.ne.s32.totalorder %s416, %s418
      %p425 = scmp.eq.s32.totalorder %s41, 9
      %p426 = por %p424, %p425
      %p427 = scmp.ne.s32.totalorder %s418, %s419
      %p428 = scmp.eq.s32.totalorder %s41, 0
      %p429 = por %p427, %p428
      %p430 = scmp.ne.s32.totalorder %s418, %s419
      %p431 = scmp.eq.s32.totalorder %s42, 9
      %p432 = por %p430, %p431
      %p434 = scmp.ne.s32.totalorder %s419, %s433
      %p435 = scmp.eq.s32.totalorder %s42, 0
      %p436 = por %p434, %p435
      %s438 = sadd.s32 %s437, 1
      %p441 = scmp.eq.s32.totalorder %s36, 9
      %p442 = scmp.ne.s32.totalorder %s437, %s439
      %p443 = scmp.eq.s32.totalorder %s36, 0
      %p444 = por %p442, %p443
      %p445 = scmp.ne.s32.totalorder %s437, %s439
      %p446 = scmp.eq.s32.totalorder %s41, 9
      %p447 = por %p445, %p446
      %p448 = scmp.ne.s32.totalorder %s439, %s440
      %p449 = scmp.eq.s32.totalorder %s41, 0
      %p450 = por %p448, %p449
      %p451 = scmp.ne.s32.totalorder %s439, %s440
      %p452 = scmp.eq.s32.totalorder %s42, 9
      %p453 = por %p451, %p452
      %p455 = scmp.ne.s32.totalorder %s440, %s454
      %p456 = scmp.eq.s32.totalorder %s42, 0
      %p457 = por %p455, %p456
      %p458 = scmp.le.s32.totalorder 1, %s36
      %p459 = scmp.lt.s32.totalorder %s36, 11
      %p460 = pnand %p458, %p459
      %p461 = pneg %p460
      // Predicated region
      $region9: #{vae_forward.1} parent=5 // pred_check
        _
      $region10: #{vae_forward.1} parent=5 // pred_check_branch
        %463 = sbr.rel (%p460) target = $region12
      $region11: #{vae_forward.1} parent=5 // pred_region
        %s464 = ssub.s32 %s36, 1
        // Predicated region
        $region13: #{vae_forward.1} parent=11 // pred_check
          %p465 = pneg %p57
        $region14: #{vae_forward.1} parent=11 // pred_check_branch
          %467 = sbr.rel (%p465) target = $region16
        $region15: #{vae_forward.1} parent=11 // pred_region
          _
        $region16: #{vae_forward.1} parent=11 // pred_fallthru
          _
        // Predicated region
        $region17: #{vae_forward.1} parent=11 // pred_check
          %p468 = pneg %p78
        $region18: #{vae_forward.1} parent=11 // pred_check_branch
          %470 = sbr.rel (%p468) target = $region20
        $region19: #{vae_forward.1} parent=11 // pred_region
          _
        $region20: #{vae_forward.1} parent=11 // pred_fallthru
          _
        // Predicated region
        $region21: #{vae_forward.1} parent=11 // pred_check
          %p471 = pneg %p99
        $region22: #{vae_forward.1} parent=11 // pred_check_branch
          %473 = sbr.rel (%p471) target = $region24
        $region23: #{vae_forward.1} parent=11 // pred_region
          %475 = vsyncadd [#allocation4], 0
          %s477 = sshll.u32 %s2, 4
          %s478 = int_to_ptr.hbm [resolvable:$true] %s477
          %s479 = sshll.u32 [#allocation3], 4
          %s480 = int_to_ptr.vmem [resolvable:$true] %s479
          %482 = dma.hbm_to_vmem [thread:$0]  %s478, 128, %s480, [#allocation4]
        $region24: #{vae_forward.1} parent=11 // pred_fallthru
          _
        // Predicated region
        $region25: #{vae_forward.1} parent=11 // pred_check
          %p483 = pneg %p120
        $region26: #{vae_forward.1} parent=11 // pred_check_branch
          %485 = sbr.rel (%p483) target = $region28
        $region27: #{vae_forward.1} parent=11 // pred_region
          %487 = vsyncadd [#allocation7], 0
          %s488 = sshll.u32 %s3, 4
          %s489 = int_to_ptr.hbm [resolvable:$true] %s488
          %s490 = sshll.u32 [#allocation6], 4
          %s491 = int_to_ptr.vmem [resolvable:$true] %s490
          %496 = dma.hbm_to_vmem [thread:$0]  %s489, 81920, %s491, [#allocation7], 128, 128, 8
        $region28: #{vae_forward.1} parent=11 // pred_fallthru
          _
        // Predicated region
        $region29: #{vae_forward.1} parent=11 // pred_check
          %p497 = pneg %p141
        $region30: #{vae_forward.1} parent=11 // pred_check_branch
          %499 = sbr.rel (%p497) target = $region32
        $region31: #{vae_forward.1} parent=11 // pred_region
          %501 = vsyncadd [#allocation7], 0
          %s503 = sshll.u32 %s4, 4
          %s504 = int_to_ptr.hbm [resolvable:$true] %s503
          %s505 = sshll.u32 [#allocation8], 4
          %s506 = int_to_ptr.vmem [resolvable:$true] %s505
          %508 = dma.hbm_to_vmem [thread:$0]  %s504, 32, %s506, [#allocation7]
        $region32: #{vae_forward.1} parent=11 // pred_fallthru
          _
        // Predicated region
        $region33: #{vae_forward.1} parent=11 // pred_check
          %p509 = pneg %p162
        $region34: #{vae_forward.1} parent=11 // pred_check_branch
          %511 = sbr.rel (%p509) target = $region36
        $region35: #{vae_forward.1} parent=11 // pred_region
          %513 = vsyncadd [#allocation10], 0
          %s514 = sshll.u32 %s5, 4
          %s515 = int_to_ptr.hbm [resolvable:$true] %s514
          %s516 = sshll.u32 [#allocation9], 4
          %s517 = int_to_ptr.vmem [resolvable:$true] %s516
          %522 = dma.hbm_to_vmem [thread:$0]  %s515, 4096, %s517, [#allocation10], 128, 128, 8
        $region36: #{vae_forward.1} parent=11 // pred_fallthru
          _
        // Predicated region
        $region37: #{vae_forward.1} parent=11 // pred_check
          %p523 = pneg %p183
        $region38: #{vae_forward.1} parent=11 // pred_check_branch
          %525 = sbr.rel (%p523) target = $region40
        $region39: #{vae_forward.1} parent=11 // pred_region
          %527 = vsyncadd [#allocation10], 0
          %s529 = sshll.u32 %s6, 4
          %s530 = int_to_ptr.hbm [resolvable:$true] %s529
          %s531 = sshll.u32 [#allocation11], 4
          %s532 = int_to_ptr.vmem [resolvable:$true] %s531
          %534 = dma.hbm_to_vmem [thread:$0]  %s530, 16, %s532, [#allocation10]
        $region40: #{vae_forward.1} parent=11 // pred_fallthru
          _
        // Predicated region
        $region41: #{vae_forward.1} parent=11 // pred_check
          %p535 = pneg %p204
        $region42: #{vae_forward.1} parent=11 // pred_check_branch
          %537 = sbr.rel (%p535) target = $region44
        $region43: #{vae_forward.1} parent=11 // pred_region
          %539 = vsyncadd [#allocation13], 0
          %s540 = sshll.u32 %s7, 4
          %s541 = int_to_ptr.hbm [resolvable:$true] %s540
          %s542 = sshll.u32 [#allocation12], 4
          %s543 = int_to_ptr.vmem [resolvable:$true] %s542
          %548 = dma.hbm_to_vmem [thread:$0]  %s541, 2048, %s543, [#allocation13], 128, 128, 8
        $region44: #{vae_forward.1} parent=11 // pred_fallthru
          _
        // Predicated region
        $region45: #{vae_forward.1} parent=11 // pred_check
          %p549 = pneg %p225
        $region46: #{vae_forward.1} parent=11 // pred_check_branch
          %551 = sbr.rel (%p549) target = $region48
        $region47: #{vae_forward.1} parent=11 // pred_region
          %553 = vsyncadd [#allocation13], 0
          %s555 = sshll.u32 %s8, 4
          %s556 = int_to_ptr.hbm [resolvable:$true] %s555
          %s557 = sshll.u32 [#allocation14], 4
          %s558 = int_to_ptr.vmem [resolvable:$true] %s557
          %560 = dma.hbm_to_vmem [thread:$0]  %s556, 16, %s558, [#allocation13]
        $region48: #{vae_forward.1} parent=11 // pred_fallthru
          _
        // Predicated region
        $region49: #{vae_forward.1} parent=11 // pred_check
          %p561 = pneg %p246
        $region50: #{vae_forward.1} parent=11 // pred_check_branch
          %563 = sbr.rel (%p561) target = $region52
        $region51: #{vae_forward.1} parent=11 // pred_region
          %565 = vsyncadd [#allocation16], 0
          %s566 = sshll.u32 %s9, 4
          %s567 = int_to_ptr.hbm [resolvable:$true] %s566
          %s568 = sshll.u32 [#allocation15], 4
          %s569 = int_to_ptr.vmem [resolvable:$true] %s568
          %574 = dma.hbm_to_vmem [thread:$0]  %s567, 1024, %s569, [#allocation16], 128, 128, 8
        $region52: #{vae_forward.1} parent=11 // pred_fallthru
          _
        // Predicated region
        $region53: #{vae_forward.1} parent=11 // pred_check
          %p575 = pneg %p267
        $region54: #{vae_forward.1} parent=11 // pred_check_branch
          %577 = sbr.rel (%p575) target = $region56
        $region55: #{vae_forward.1} parent=11 // pred_region
          %579 = vsyncadd [#allocation16], 0
          %s581 = sshll.u32 %s10, 4
          %s582 = int_to_ptr.hbm [resolvable:$true] %s581
          %s583 = sshll.u32 [#allocation17], 4
          %s584 = int_to_ptr.vmem [resolvable:$true] %s583
          %586 = dma.hbm_to_vmem [thread:$0]  %s582, 16, %s584, [#allocation16]
        $region56: #{vae_forward.1} parent=11 // pred_fallthru
          _
        // Predicated region
        $region57: #{vae_forward.1} parent=11 // pred_check
          %p587 = pneg %p288
        $region58: #{vae_forward.1} parent=11 // pred_check_branch
          %589 = sbr.rel (%p587) target = $region60
        $region59: #{vae_forward.1} parent=11 // pred_region
          %591 = vsyncadd [#allocation19], 0
          %s593 = sshll.u32 %s11, 4
          %s594 = int_to_ptr.hbm [resolvable:$true] %s593
          %s595 = sshll.u32 [#allocation18], 4
          %s596 = int_to_ptr.vmem [resolvable:$true] %s595
          %598 = dma.hbm_to_vmem [thread:$0]  %s594, 16, %s596, [#allocation19]
        $region60: #{vae_forward.1} parent=11 // pred_fallthru
          _
        // Predicated region
        $region61: #{vae_forward.1} parent=11 // pred_check
          %p599 = pneg %p309
        $region62: #{vae_forward.1} parent=11 // pred_check_branch
          %601 = sbr.rel (%p599) target = $region64
        $region63: #{vae_forward.1} parent=11 // pred_region
          %603 = vsyncadd [#allocation19], 0
          %s604 = sshll.u32 %s12, 4
          %s605 = int_to_ptr.hbm [resolvable:$true] %s604
          %s606 = sshll.u32 [#allocation20], 4
          %s607 = int_to_ptr.vmem [resolvable:$true] %s606
          %612 = dma.hbm_to_vmem [thread:$0]  %s605, 4096, %s607, [#allocation19], 256, 256, 16
        $region64: #{vae_forward.1} parent=11 // pred_fallthru
          _
        // Predicated region
        $region65: #{vae_forward.1} parent=11 // pred_check
          %p613 = pneg %p330
        $region66: #{vae_forward.1} parent=11 // pred_check_branch
          %615 = sbr.rel (%p613) target = $region68
        $region67: #{vae_forward.1} parent=11 // pred_region
          %617 = vsyncadd [#allocation22], 0
          %s619 = sshll.u32 %s13, 4
          %s620 = int_to_ptr.hbm [resolvable:$true] %s619
          %s621 = sshll.u32 [#allocation21], 4
          %s622 = int_to_ptr.vmem [resolvable:$true] %s621
          %624 = dma.hbm_to_vmem [thread:$0]  %s620, 32, %s622, [#allocation22]
        $region68: #{vae_forward.1} parent=11 // pred_fallthru
          _
      $region12: #{vae_forward.1} parent=5 // pred_fallthru
        _
      %p625 = scmp.lt.s32.totalorder %s36, 10
      // Predicated region
      $region69: #{vae_forward.1} parent=5 // pred_check
        %p626 = pneg %p625
      $region70: #{vae_forward.1} parent=5 // pred_check_branch
        %628 = sbr.rel (%p626) target = $region72
      $region71: #{vae_forward.1} parent=5 // pred_region
        // Predicated region
        $region73: #{vae_forward.1} parent=71 // pred_check
          %p629 = pneg %p350
        $region74: #{vae_forward.1} parent=71 // pred_check_branch
          %631 = sbr.rel (%p629) target = $region76
        $region75: #{vae_forward.1} parent=71 // pred_region
          %s632 = sand.u32 %s36, 1
          %s633 = scalar_lea.sflag [#allocation4], %s632
          %s634 = sand.u32 %s340, 1
          %s635 = smul.addr %s634, 512
          %s636 = scalar_lea.vmem [#allocation23], %s635
          %s637 = smul.u32 4, %s36
          %639 = vsyncadd %s633, 0
          %s640 = smul.addr %s637, 4
          %s641 = scalar_lea.hbm %s14, %s640
          %s642 = sshll.u32 %s641, 4
          %s643 = int_to_ptr.hbm [resolvable:$true] %s642
          %s644 = sshll.u32 %s636, 4
          %s645 = int_to_ptr.vmem [resolvable:$true] %s644
          %650 = dma.hbm_to_vmem [thread:$0]  %s643, 8192, %s645, %s633, 2560, 256, 16
        $region76: #{vae_forward.1} parent=71 // pred_fallthru
          _
        // Predicated region
        $region77: #{vae_forward.1} parent=71 // pred_check
          %p651 = pneg %p376
        $region78: #{vae_forward.1} parent=71 // pred_check_branch
          %653 = sbr.rel (%p651) target = $region80
        $region79: #{vae_forward.1} parent=71 // pred_region
          %s654 = sand.u32 %s36, 1
          %s655 = scalar_lea.sflag [#allocation4], %s654
          %s656 = sand.u32 %s366, 1
          %s657 = smul.addr %s656, 4
          %s658 = scalar_lea.vmem [#allocation24], %s657
          %s659 = smul.u32 4, %s36
          %661 = vsyncadd %s655, 0
          %s662 = scalar_lea.hbm %s15, %s659
          %s664 = sshll.u32 %s662, 4
          %s665 = int_to_ptr.hbm [resolvable:$true] %s664
          %s666 = sshll.u32 %s658, 4
          %s667 = int_to_ptr.vmem [resolvable:$true] %s666
          %669 = dma.hbm_to_vmem [thread:$0]  %s665, 64, %s667, %s655
        $region80: #{vae_forward.1} parent=71 // pred_fallthru
          _
      $region72: #{vae_forward.1} parent=5 // pred_fallthru
        _
      %p670 = scmp.le.s32.totalorder 1, %s36
      %p671 = scmp.lt.s32.totalorder %s36, 11
      %p672 = pnand %p670, %p671
      %p673 = pneg %p672
      // Predicated region
      $region81: #{vae_forward.1} parent=5 // pred_check
        _
      $region82: #{vae_forward.1} parent=5 // pred_check_branch
        %675 = sbr.rel (%p672) target = $region84
      $region83: #{vae_forward.1} parent=5 // pred_region
        %s676 = ssub.s32 %s36, 1
        // Predicated region
        $region85: #{vae_forward.1} parent=83 // pred_check
          %p677 = pneg %p99
        $region86: #{vae_forward.1} parent=83 // pred_check_branch
          %679 = sbr.rel (%p677) target = $region88
        $region87: #{vae_forward.1} parent=83 // pred_region
          %681 = dma.done [#allocation4], 128
        $region88: #{vae_forward.1} parent=83 // pred_fallthru
          _
        // Predicated region
        $region89: #{vae_forward.1} parent=83 // pred_check
          %p682 = pneg %p120
        $region90: #{vae_forward.1} parent=83 // pred_check_branch
          %684 = sbr.rel (%p682) target = $region92
        $region91: #{vae_forward.1} parent=83 // pred_region
          %686 = dma.done [#allocation7], 81920
        $region92: #{vae_forward.1} parent=83 // pred_fallthru
          _
        // Predicated region
        $region93: #{vae_forward.1} parent=83 // pred_check
          %p687 = pneg %p141
        $region94: #{vae_forward.1} parent=83 // pred_check_branch
          %689 = sbr.rel (%p687) target = $region96
        $region95: #{vae_forward.1} parent=83 // pred_region
          %691 = dma.done [#allocation7], 32
        $region96: #{vae_forward.1} parent=83 // pred_fallthru
          _
        // Predicated region
        $region97: #{vae_forward.1} parent=83 // pred_check
          %p692 = pneg %p162
        $region98: #{vae_forward.1} parent=83 // pred_check_branch
          %694 = sbr.rel (%p692) target = $region100
        $region99: #{vae_forward.1} parent=83 // pred_region
          %696 = dma.done [#allocation10], 4096
        $region100: #{vae_forward.1} parent=83 // pred_fallthru
          _
        // Predicated region
        $region101: #{vae_forward.1} parent=83 // pred_check
          %p697 = pneg %p183
        $region102: #{vae_forward.1} parent=83 // pred_check_branch
          %699 = sbr.rel (%p697) target = $region104
        $region103: #{vae_forward.1} parent=83 // pred_region
          %701 = dma.done [#allocation10], 16
        $region104: #{vae_forward.1} parent=83 // pred_fallthru
          _
        // Predicated region
        $region105: #{vae_forward.1} parent=83 // pred_check
          %p702 = pneg %p204
        $region106: #{vae_forward.1} parent=83 // pred_check_branch
          %704 = sbr.rel (%p702) target = $region108
        $region107: #{vae_forward.1} parent=83 // pred_region
          %706 = dma.done [#allocation13], 2048
        $region108: #{vae_forward.1} parent=83 // pred_fallthru
          _
        // Predicated region
        $region109: #{vae_forward.1} parent=83 // pred_check
          %p707 = pneg %p225
        $region110: #{vae_forward.1} parent=83 // pred_check_branch
          %709 = sbr.rel (%p707) target = $region112
        $region111: #{vae_forward.1} parent=83 // pred_region
          %711 = dma.done [#allocation13], 16
        $region112: #{vae_forward.1} parent=83 // pred_fallthru
          _
        // Predicated region
        $region113: #{vae_forward.1} parent=83 // pred_check
          %p712 = pneg %p246
        $region114: #{vae_forward.1} parent=83 // pred_check_branch
          %714 = sbr.rel (%p712) target = $region116
        $region115: #{vae_forward.1} parent=83 // pred_region
          %716 = dma.done [#allocation16], 1024
        $region116: #{vae_forward.1} parent=83 // pred_fallthru
          _
        // Predicated region
        $region117: #{vae_forward.1} parent=83 // pred_check
          %p717 = pneg %p267
        $region118: #{vae_forward.1} parent=83 // pred_check_branch
          %719 = sbr.rel (%p717) target = $region120
        $region119: #{vae_forward.1} parent=83 // pred_region
          %721 = dma.done [#allocation16], 16
        $region120: #{vae_forward.1} parent=83 // pred_fallthru
          _
        // Predicated region
        $region121: #{vae_forward.1} parent=83 // pred_check
          %p722 = pneg %p288
        $region122: #{vae_forward.1} parent=83 // pred_check_branch
          %724 = sbr.rel (%p722) target = $region124
        $region123: #{vae_forward.1} parent=83 // pred_region
          %726 = dma.done [#allocation19], 16
        $region124: #{vae_forward.1} parent=83 // pred_fallthru
          _
        // Predicated region
        $region125: #{vae_forward.1} parent=83 // pred_check
          %p727 = pneg %p309
        $region126: #{vae_forward.1} parent=83 // pred_check_branch
          %729 = sbr.rel (%p727) target = $region128
        $region127: #{vae_forward.1} parent=83 // pred_region
          %731 = dma.done [#allocation19], 4096
        $region128: #{vae_forward.1} parent=83 // pred_fallthru
          _
        // Predicated region
        $region129: #{vae_forward.1} parent=83 // pred_check
          %p732 = pneg %p330
        $region130: #{vae_forward.1} parent=83 // pred_check_branch
          %734 = sbr.rel (%p732) target = $region132
        $region131: #{vae_forward.1} parent=83 // pred_region
          %736 = dma.done [#allocation22], 32
        $region132: #{vae_forward.1} parent=83 // pred_fallthru
          _
        %s737 = sand.u32 %s41, 1
        %s738 = scalar_lea.sflag [#allocation4], %s737
        %s739 = sand.u32 %s343, 1
        %s740 = smul.addr %s739, 512
        %s741 = scalar_lea.vmem [#allocation23], %s740
        // Predicated region
        $region133: #{vae_forward.1} parent=83 // pred_check
          %p742 = pneg %p356
        $region134: #{vae_forward.1} parent=83 // pred_check_branch
          %744 = sbr.rel (%p742) target = $region136
        $region135: #{vae_forward.1} parent=83 // pred_region
          %746 = dma.done %s738, 8192
        $region136: #{vae_forward.1} parent=83 // pred_fallthru
          _
        %s747 = sand.u32 %s41, 1
        %s748 = scalar_lea.sflag [#allocation4], %s747
        %s749 = sand.u32 %s369, 1
        %s750 = smul.addr %s749, 4
        %s751 = scalar_lea.vmem [#allocation24], %s750
        // Predicated region
        $region137: #{vae_forward.1} parent=83 // pred_check
          %p752 = pneg %p382
        $region138: #{vae_forward.1} parent=83 // pred_check_branch
          %754 = sbr.rel (%p752) target = $region140
        $region139: #{vae_forward.1} parent=83 // pred_region
          %756 = dma.done %s748, 64
        $region140: #{vae_forward.1} parent=83 // pred_fallthru
          _
        %p757 = pneg %p57
        %p758 = pneg %p54
        %p759 = pneg %p78
        %p760 = pneg %p75
        %p761 = pneg %p99
        %p762 = pneg %p96
        %p763 = pneg %p120
        %p764 = pneg %p117
        %p765 = pneg %p141
        %p766 = pneg %p138
        %p767 = pneg %p162
        %p768 = pneg %p159
        %p769 = pneg %p183
        %p770 = pneg %p180
        %p771 = pneg %p204
        %p772 = pneg %p201
        %p773 = pneg %p225
        %p774 = pneg %p222
        %p775 = pneg %p246
        %p776 = pneg %p243
        %p777 = pneg %p267
        %p778 = pneg %p264
        %p779 = pneg %p288
        %p780 = pneg %p285
        %p781 = pneg %p309
        %p782 = pneg %p306
        %p783 = pneg %p330
        %p784 = pneg %p327
        %s785 = sand.u32 %s41, 1
        %s786 = scalar_lea.sflag [#allocation4], %s785
        %s787 = sand.u32 %s343, 1
        %s788 = smul.addr %s787, 512
        %s789 = scalar_lea.vmem [#allocation23], %s788
        %p790 = pneg %p356
        %p791 = pneg %p353
        %s792 = sand.u32 %s41, 1
        %s793 = scalar_lea.sflag [#allocation4], %s792
        %s794 = sand.u32 %s369, 1
        %s795 = smul.addr %s794, 4
        %s796 = scalar_lea.vmem [#allocation24], %s795
        %p797 = pneg %p382
        %p798 = pneg %p379
        %p799 = pneg %p408
        %p800 = pneg %p405
        %s801 = sand.u32 %s395, 1
        %s802 = scalar_lea.sflag [#allocation5], %s801
        %s803 = sand.u32 %s395, 1
        %s804 = smul.addr %s803, 32
        %s805 = scalar_lea.vmem [#allocation25], %s804
        %p806 = pneg %p429
        %p807 = pneg %p426
        %p808 = pneg %p450
        %p809 = pneg %p447
        %s810 = smul.u32 4, %s41
        %s811 = smul.u32 4, %s41
        %s812 = smul.u32 4, %s41
        %p813 = scmp.eq.s32.totalorder %s41, 0
        // Predicated region
        $region141: #{vae_forward.1} parent=83 // pred_check
          %p814 = pneg %p813
        $region142: #{vae_forward.1} parent=83 // pred_check_branch
          %816 = sbr.rel (%p814) target = $region144
        $region143: #{vae_forward.1} parent=83 // pred_region
          %v817 = vld [vmem:[%s0] sm:$0xff]
          %v818 = vld [vmem:[%s0 + $0x8] sm:$0xff]
          %v819 = vld [vmem:[%s0 + $0x10] sm:$0xff]
          %v820 = vld [vmem:[%s0 + $0x18] sm:$0xff]
          %v821 = vld [vmem:[%s0 + $0x20] sm:$0xff]
          %v822 = vld [vmem:[%s0 + $0x28] sm:$0xff]
          %v823 = vld [vmem:[%s0 + $0x30] sm:$0xff]
          %v824 = vld [vmem:[%s0 + $0x38] sm:$0xff]
          %v825 = vld [vmem:[%s0 + $0x40] sm:$0xff]
          %v826 = vld [vmem:[%s0 + $0x48] sm:$0xff]
          %v827 = vld [vmem:[%s0 + $0x50] sm:$0xff]
          %v828 = vld [vmem:[%s0 + $0x58] sm:$0xff]
          %v829 = vld [vmem:[%s0 + $0x60] sm:$0xff]
          %v830 = vld [vmem:[%s0 + $0x68] sm:$0xff]
          %v831 = vld [vmem:[%s0 + $0x70] sm:$0xff]
          %v832 = vld [vmem:[%s0 + $0x78] sm:$0xff]
          %v833 = vld [vmem:[%s0 + $0x80] sm:$0xff]
          %v834 = vld [vmem:[%s0 + $0x88] sm:$0xff]
          %v835 = vld [vmem:[%s0 + $0x90] sm:$0xff]
          %v836 = vld [vmem:[%s0 + $0x98] sm:$0xff]
          %v837 = vld [vmem:[#allocation6] sm:$0xff]
          %v838 = vld [vmem:[#allocation6 + $0x8] sm:$0xff]
          %v839 = vld [vmem:[#allocation6 + $0x10] sm:$0xff]
          %v840 = vld [vmem:[#allocation6 + $0x18] sm:$0xff]
          %v841 = vld [vmem:[#allocation6 + $0x20] sm:$0xff]
          %v842 = vld [vmem:[#allocation6 + $0x28] sm:$0xff]
          %v843 = vld [vmem:[#allocation6 + $0x30] sm:$0xff]
          %v844 = vld [vmem:[#allocation6 + $0x38] sm:$0xff]
          %v845 = vld [vmem:[#allocation6 + $0x40] sm:$0xff]
          %v846 = vld [vmem:[#allocation6 + $0x48] sm:$0xff]
          %v847 = vld [vmem:[#allocation6 + $0x50] sm:$0xff]
          %v848 = vld [vmem:[#allocation6 + $0x58] sm:$0xff]
          %v849 = vld [vmem:[#allocation6 + $0x60] sm:$0xff]
          %v850 = vld [vmem:[#allocation6 + $0x68] sm:$0xff]
          %v851 = vld [vmem:[#allocation6 + $0x70] sm:$0xff]
          %v852 = vld [vmem:[#allocation6 + $0x78] sm:$0xff]
          %v853 = vld [vmem:[#allocation6 + $0x80] sm:$0xff]
          %v854 = vld [vmem:[#allocation6 + $0x88] sm:$0xff]
          %v855 = vld [vmem:[#allocation6 + $0x90] sm:$0xff]
          %v856 = vld [vmem:[#allocation6 + $0x98] sm:$0xff]
          %v857 = vld [vmem:[#allocation6 + $0xa0] sm:$0xff]
          %v858 = vld [vmem:[#allocation6 + $0xa8] sm:$0xff]
          %v859 = vld [vmem:[#allocation6 + $0xb0] sm:$0xff]
          %v860 = vld [vmem:[#allocation6 + $0xb8] sm:$0xff]
          %v861 = vld [vmem:[#allocation6 + $0xc0] sm:$0xff]
          %v862 = vld [vmem:[#allocation6 + $0xc8] sm:$0xff]
          %v863 = vld [vmem:[#allocation6 + $0xd0] sm:$0xff]
          %v864 = vld [vmem:[#allocation6 + $0xd8] sm:$0xff]
          %v865 = vld [vmem:[#allocation6 + $0xe0] sm:$0xff]
          %v866 = vld [vmem:[#allocation6 + $0xe8] sm:$0xff]
          %v867 = vld [vmem:[#allocation6 + $0xf0] sm:$0xff]
          %v868 = vld [vmem:[#allocation6 + $0xf8] sm:$0xff]
          %v869 = vld [vmem:[#allocation6 + $0x100] sm:$0xff]
          %v870 = vld [vmem:[#allocation6 + $0x108] sm:$0xff]
          %v871 = vld [vmem:[#allocation6 + $0x110] sm:$0xff]
          %v872 = vld [vmem:[#allocation6 + $0x118] sm:$0xff]
          %v873 = vld [vmem:[#allocation6 + $0x120] sm:$0xff]
          %v874 = vld [vmem:[#allocation6 + $0x128] sm:$0xff]
          %v875 = vld [vmem:[#allocation6 + $0x130] sm:$0xff]
          %v876 = vld [vmem:[#allocation6 + $0x138] sm:$0xff]
          %v877 = vld [vmem:[#allocation6 + $0x140] sm:$0xff]
          %v878 = vld [vmem:[#allocation6 + $0x148] sm:$0xff]
          %v879 = vld [vmem:[#allocation6 + $0x150] sm:$0xff]
          %v880 = vld [vmem:[#allocation6 + $0x158] sm:$0xff]
          %v881 = vld [vmem:[#allocation6 + $0x160] sm:$0xff]
          %v882 = vld [vmem:[#allocation6 + $0x168] sm:$0xff]
          %v883 = vld [vmem:[#allocation6 + $0x170] sm:$0xff]
          %v884 = vld [vmem:[#allocation6 + $0x178] sm:$0xff]
          %v885 = vld [vmem:[#allocation6 + $0x180] sm:$0xff]
          %v886 = vld [vmem:[#allocation6 + $0x188] sm:$0xff]
          %v887 = vld [vmem:[#allocation6 + $0x190] sm:$0xff]
          %v888 = vld [vmem:[#allocation6 + $0x198] sm:$0xff]
          %v889 = vld [vmem:[#allocation6 + $0x1a0] sm:$0xff]
          %v890 = vld [vmem:[#allocation6 + $0x1a8] sm:$0xff]
          %v891 = vld [vmem:[#allocation6 + $0x1b0] sm:$0xff]
          %v892 = vld [vmem:[#allocation6 + $0x1b8] sm:$0xff]
          %v893 = vld [vmem:[#allocation6 + $0x1c0] sm:$0xff]
          %v894 = vld [vmem:[#allocation6 + $0x1c8] sm:$0xff]
          %v895 = vld [vmem:[#allocation6 + $0x1d0] sm:$0xff]
          %v896 = vld [vmem:[#allocation6 + $0x1d8] sm:$0xff]
          %v897 = vld [vmem:[#allocation6 + $0x1e0] sm:$0xff]
          %v898 = vld [vmem:[#allocation6 + $0x1e8] sm:$0xff]
          %v899 = vld [vmem:[#allocation6 + $0x1f0] sm:$0xff]
          %v900 = vld [vmem:[#allocation6 + $0x1f8] sm:$0xff]
          %v901 = vld [vmem:[#allocation6 + $0x200] sm:$0xff]
          %v902 = vld [vmem:[#allocation6 + $0x208] sm:$0xff]
          %v903 = vld [vmem:[#allocation6 + $0x210] sm:$0xff]
          %v904 = vld [vmem:[#allocation6 + $0x218] sm:$0xff]
          %v905 = vld [vmem:[#allocation6 + $0x220] sm:$0xff]
          %v906 = vld [vmem:[#allocation6 + $0x228] sm:$0xff]
          %v907 = vld [vmem:[#allocation6 + $0x230] sm:$0xff]
          %v908 = vld [vmem:[#allocation6 + $0x238] sm:$0xff]
          %v909 = vld [vmem:[#allocation6 + $0x240] sm:$0xff]
          %v910 = vld [vmem:[#allocation6 + $0x248] sm:$0xff]
          %v911 = vld [vmem:[#allocation6 + $0x250] sm:$0xff]
          %v912 = vld [vmem:[#allocation6 + $0x258] sm:$0xff]
          %v913 = vld [vmem:[#allocation6 + $0x260] sm:$0xff]
          %v914 = vld [vmem:[#allocation6 + $0x268] sm:$0xff]
          %v915 = vld [vmem:[#allocation6 + $0x270] sm:$0xff]
          %v916 = vld [vmem:[#allocation6 + $0x278] sm:$0xff]
          %v917 = vld [vmem:[#allocation6 + $0x280] sm:$0xff]
          %v918 = vld [vmem:[#allocation6 + $0x288] sm:$0xff]
          %v919 = vld [vmem:[#allocation6 + $0x290] sm:$0xff]
          %v920 = vld [vmem:[#allocation6 + $0x298] sm:$0xff]
          %v921 = vld [vmem:[#allocation6 + $0x2a0] sm:$0xff]
          %v922 = vld [vmem:[#allocation6 + $0x2a8] sm:$0xff]
          %v923 = vld [vmem:[#allocation6 + $0x2b0] sm:$0xff]
          %v924 = vld [vmem:[#allocation6 + $0x2b8] sm:$0xff]
          %v925 = vld [vmem:[#allocation6 + $0x2c0] sm:$0xff]
          %v926 = vld [vmem:[#allocation6 + $0x2c8] sm:$0xff]
          %v927 = vld [vmem:[#allocation6 + $0x2d0] sm:$0xff]
          %v928 = vld [vmem:[#allocation6 + $0x2d8] sm:$0xff]
          %v929 = vld [vmem:[#allocation6 + $0x2e0] sm:$0xff]
          %v930 = vld [vmem:[#allocation6 + $0x2e8] sm:$0xff]
          %v931 = vld [vmem:[#allocation6 + $0x2f0] sm:$0xff]
          %v932 = vld [vmem:[#allocation6 + $0x2f8] sm:$0xff]
          %v933 = vld [vmem:[#allocation6 + $0x300] sm:$0xff]
          %v934 = vld [vmem:[#allocation6 + $0x308] sm:$0xff]
          %v935 = vld [vmem:[#allocation6 + $0x310] sm:$0xff]
          %v936 = vld [vmem:[#allocation6 + $0x318] sm:$0xff]
          %v937 = vld [vmem:[#allocation6 + $0x320] sm:$0xff]
          %v938 = vld [vmem:[#allocation6 + $0x328] sm:$0xff]
          %v939 = vld [vmem:[#allocation6 + $0x330] sm:$0xff]
          %v940 = vld [vmem:[#allocation6 + $0x338] sm:$0xff]
          %v941 = vld [vmem:[#allocation6 + $0x340] sm:$0xff]
          %v942 = vld [vmem:[#allocation6 + $0x348] sm:$0xff]
          %v943 = vld [vmem:[#allocation6 + $0x350] sm:$0xff]
          %v944 = vld [vmem:[#allocation6 + $0x358] sm:$0xff]
          %v945 = vld [vmem:[#allocation6 + $0x360] sm:$0xff]
          %v946 = vld [vmem:[#allocation6 + $0x368] sm:$0xff]
          %v947 = vld [vmem:[#allocation6 + $0x370] sm:$0xff]
          %v948 = vld [vmem:[#allocation6 + $0x378] sm:$0xff]
          %v949 = vld [vmem:[#allocation6 + $0x380] sm:$0xff]
          %v950 = vld [vmem:[#allocation6 + $0x388] sm:$0xff]
          %v951 = vld [vmem:[#allocation6 + $0x390] sm:$0xff]
          %v952 = vld [vmem:[#allocation6 + $0x398] sm:$0xff]
          %v953 = vld [vmem:[#allocation6 + $0x3a0] sm:$0xff]
          %v954 = vld [vmem:[#allocation6 + $0x3a8] sm:$0xff]
          %v955 = vld [vmem:[#allocation6 + $0x3b0] sm:$0xff]
          %v956 = vld [vmem:[#allocation6 + $0x3b8] sm:$0xff]
          %v957 = vld [vmem:[#allocation6 + $0x3c0] sm:$0xff]
          %v958 = vld [vmem:[#allocation6 + $0x3c8] sm:$0xff]
          %v959 = vld [vmem:[#allocation6 + $0x3d0] sm:$0xff]
          %v960 = vld [vmem:[#allocation6 + $0x3d8] sm:$0xff]
          %v961 = vld [vmem:[#allocation6 + $0x3e0] sm:$0xff]
          %v962 = vld [vmem:[#allocation6 + $0x3e8] sm:$0xff]
          %v963 = vld [vmem:[#allocation6 + $0x3f0] sm:$0xff]
          %v964 = vld [vmem:[#allocation6 + $0x3f8] sm:$0xff]
          %v965 = vld [vmem:[#allocation6 + $0x400] sm:$0xff]
          %v966 = vld [vmem:[#allocation6 + $0x408] sm:$0xff]
          %v967 = vld [vmem:[#allocation6 + $0x410] sm:$0xff]
          %v968 = vld [vmem:[#allocation6 + $0x418] sm:$0xff]
          %v969 = vld [vmem:[#allocation6 + $0x420] sm:$0xff]
          %v970 = vld [vmem:[#allocation6 + $0x428] sm:$0xff]
          %v971 = vld [vmem:[#allocation6 + $0x430] sm:$0xff]
          %v972 = vld [vmem:[#allocation6 + $0x438] sm:$0xff]
          %v973 = vld [vmem:[#allocation6 + $0x440] sm:$0xff]
          %v974 = vld [vmem:[#allocation6 + $0x448] sm:$0xff]
          %v975 = vld [vmem:[#allocation6 + $0x450] sm:$0xff]
          %v976 = vld [vmem:[#allocation6 + $0x458] sm:$0xff]
          %v977 = vld [vmem:[#allocation6 + $0x460] sm:$0xff]
          %v978 = vld [vmem:[#allocation6 + $0x468] sm:$0xff]
          %v979 = vld [vmem:[#allocation6 + $0x470] sm:$0xff]
          %v980 = vld [vmem:[#allocation6 + $0x478] sm:$0xff]
          %v981 = vld [vmem:[#allocation6 + $0x480] sm:$0xff]
          %v982 = vld [vmem:[#allocation6 + $0x488] sm:$0xff]
          %v983 = vld [vmem:[#allocation6 + $0x490] sm:$0xff]
          %v984 = vld [vmem:[#allocation6 + $0x498] sm:$0xff]
          %v985 = vld [vmem:[#allocation6 + $0x4a0] sm:$0xff]
          %v986 = vld [vmem:[#allocation6 + $0x4a8] sm:$0xff]
          %v987 = vld [vmem:[#allocation6 + $0x4b0] sm:$0xff]
          %v988 = vld [vmem:[#allocation6 + $0x4b8] sm:$0xff]
          %v989 = vld [vmem:[#allocation6 + $0x4c0] sm:$0xff]
          %v990 = vld [vmem:[#allocation6 + $0x4c8] sm:$0xff]
          %v991 = vld [vmem:[#allocation6 + $0x4d0] sm:$0xff]
          %v992 = vld [vmem:[#allocation6 + $0x4d8] sm:$0xff]
          %v993 = vld [vmem:[#allocation6 + $0x4e0] sm:$0xff]
          %v994 = vld [vmem:[#allocation6 + $0x4e8] sm:$0xff]
          %v995 = vld [vmem:[#allocation6 + $0x4f0] sm:$0xff]
          %v996 = vld [vmem:[#allocation6 + $0x4f8] sm:$0xff]
          %v997 = vld [vmem:[#allocation6 + $0x500] sm:$0xff]
          %v998 = vld [vmem:[#allocation6 + $0x508] sm:$0xff]
          %v999 = vld [vmem:[#allocation6 + $0x510] sm:$0xff]
          %v1000 = vld [vmem:[#allocation6 + $0x518] sm:$0xff]
          %v1001 = vld [vmem:[#allocation6 + $0x520] sm:$0xff]
          %v1002 = vld [vmem:[#allocation6 + $0x528] sm:$0xff]
          %v1003 = vld [vmem:[#allocation6 + $0x530] sm:$0xff]
          %v1004 = vld [vmem:[#allocation6 + $0x538] sm:$0xff]
          %v1005 = vld [vmem:[#allocation6 + $0x540] sm:$0xff]
          %v1006 = vld [vmem:[#allocation6 + $0x548] sm:$0xff]
          %v1007 = vld [vmem:[#allocation6 + $0x550] sm:$0xff]
          %v1008 = vld [vmem:[#allocation6 + $0x558] sm:$0xff]
          %v1009 = vld [vmem:[#allocation6 + $0x560] sm:$0xff]
          %v1010 = vld [vmem:[#allocation6 + $0x568] sm:$0xff]
          %v1011 = vld [vmem:[#allocation6 + $0x570] sm:$0xff]
          %v1012 = vld [vmem:[#allocation6 + $0x578] sm:$0xff]
          %v1013 = vld [vmem:[#allocation6 + $0x580] sm:$0xff]
          %v1014 = vld [vmem:[#allocation6 + $0x588] sm:$0xff]
          %v1015 = vld [vmem:[#allocation6 + $0x590] sm:$0xff]
          %v1016 = vld [vmem:[#allocation6 + $0x598] sm:$0xff]
          %v1017 = vld [vmem:[#allocation6 + $0x5a0] sm:$0xff]
          %v1018 = vld [vmem:[#allocation6 + $0x5a8] sm:$0xff]
          %v1019 = vld [vmem:[#allocation6 + $0x5b0] sm:$0xff]
          %v1020 = vld [vmem:[#allocation6 + $0x5b8] sm:$0xff]
          %v1021 = vld [vmem:[#allocation6 + $0x5c0] sm:$0xff]
          %v1022 = vld [vmem:[#allocation6 + $0x5c8] sm:$0xff]
          %v1023 = vld [vmem:[#allocation6 + $0x5d0] sm:$0xff]
          %v1024 = vld [vmem:[#allocation6 + $0x5d8] sm:$0xff]
          %v1025 = vld [vmem:[#allocation6 + $0x5e0] sm:$0xff]
          %v1026 = vld [vmem:[#allocation6 + $0x5e8] sm:$0xff]
          %v1027 = vld [vmem:[#allocation6 + $0x5f0] sm:$0xff]
          %v1028 = vld [vmem:[#allocation6 + $0x5f8] sm:$0xff]
          %v1029 = vld [vmem:[#allocation6 + $0x600] sm:$0xff]
          %v1030 = vld [vmem:[#allocation6 + $0x608] sm:$0xff]
          %v1031 = vld [vmem:[#allocation6 + $0x610] sm:$0xff]
          %v1032 = vld [vmem:[#allocation6 + $0x618] sm:$0xff]
          %v1033 = vld [vmem:[#allocation6 + $0x620] sm:$0xff]
          %v1034 = vld [vmem:[#allocation6 + $0x628] sm:$0xff]
          %v1035 = vld [vmem:[#allocation6 + $0x630] sm:$0xff]
          %v1036 = vld [vmem:[#allocation6 + $0x638] sm:$0xff]
          %v1037 = vld [vmem:[#allocation6 + $0x640] sm:$0xff]
          %v1038 = vld [vmem:[#allocation6 + $0x648] sm:$0xff]
          %v1039 = vld [vmem:[#allocation6 + $0x650] sm:$0xff]
          %v1040 = vld [vmem:[#allocation6 + $0x658] sm:$0xff]
          %v1041 = vld [vmem:[#allocation6 + $0x660] sm:$0xff]
          %v1042 = vld [vmem:[#allocation6 + $0x668] sm:$0xff]
          %v1043 = vld [vmem:[#allocation6 + $0x670] sm:$0xff]
          %v1044 = vld [vmem:[#allocation6 + $0x678] sm:$0xff]
          %v1045 = vld [vmem:[#allocation6 + $0x680] sm:$0xff]
          %v1046 = vld [vmem:[#allocation6 + $0x688] sm:$0xff]
          %v1047 = vld [vmem:[#allocation6 + $0x690] sm:$0xff]
          %v1048 = vld [vmem:[#allocation6 + $0x698] sm:$0xff]
          %v1049 = vld [vmem:[#allocation6 + $0x6a0] sm:$0xff]
          %v1050 = vld [vmem:[#allocation6 + $0x6a8] sm:$0xff]
          %v1051 = vld [vmem:[#allocation6 + $0x6b0] sm:$0xff]
          %v1052 = vld [vmem:[#allocation6 + $0x6b8] sm:$0xff]
          %v1053 = vld [vmem:[#allocation6 + $0x6c0] sm:$0xff]
          %v1054 = vld [vmem:[#allocation6 + $0x6c8] sm:$0xff]
          %v1055 = vld [vmem:[#allocation6 + $0x6d0] sm:$0xff]
          %v1056 = vld [vmem:[#allocation6 + $0x6d8] sm:$0xff]
          %v1057 = vld [vmem:[#allocation6 + $0x6e0] sm:$0xff]
          %v1058 = vld [vmem:[#allocation6 + $0x6e8] sm:$0xff]
          %v1059 = vld [vmem:[#allocation6 + $0x6f0] sm:$0xff]
          %v1060 = vld [vmem:[#allocation6 + $0x6f8] sm:$0xff]
          %v1061 = vld [vmem:[#allocation6 + $0x700] sm:$0xff]
          %v1062 = vld [vmem:[#allocation6 + $0x708] sm:$0xff]
          %v1063 = vld [vmem:[#allocation6 + $0x710] sm:$0xff]
          %v1064 = vld [vmem:[#allocation6 + $0x718] sm:$0xff]
          %v1065 = vld [vmem:[#allocation6 + $0x720] sm:$0xff]
          %v1066 = vld [vmem:[#allocation6 + $0x728] sm:$0xff]
          %v1067 = vld [vmem:[#allocation6 + $0x730] sm:$0xff]
          %v1068 = vld [vmem:[#allocation6 + $0x738] sm:$0xff]
          %v1069 = vld [vmem:[#allocation6 + $0x740] sm:$0xff]
          %v1070 = vld [vmem:[#allocation6 + $0x748] sm:$0xff]
          %v1071 = vld [vmem:[#allocation6 + $0x750] sm:$0xff]
          %v1072 = vld [vmem:[#allocation6 + $0x758] sm:$0xff]
          %v1073 = vld [vmem:[#allocation6 + $0x760] sm:$0xff]
          %v1074 = vld [vmem:[#allocation6 + $0x768] sm:$0xff]
          %v1075 = vld [vmem:[#allocation6 + $0x770] sm:$0xff]
          %v1076 = vld [vmem:[#allocation6 + $0x778] sm:$0xff]
          %v1077 = vld [vmem:[#allocation6 + $0x780] sm:$0xff]
          %v1078 = vld [vmem:[#allocation6 + $0x788] sm:$0xff]
          %v1079 = vld [vmem:[#allocation6 + $0x790] sm:$0xff]
          %v1080 = vld [vmem:[#allocation6 + $0x798] sm:$0xff]
          %v1081 = vld [vmem:[#allocation6 + $0x7a0] sm:$0xff]
          %v1082 = vld [vmem:[#allocation6 + $0x7a8] sm:$0xff]
          %v1083 = vld [vmem:[#allocation6 + $0x7b0] sm:$0xff]
          %v1084 = vld [vmem:[#allocation6 + $0x7b8] sm:$0xff]
          %v1085 = vld [vmem:[#allocation6 + $0x7c0] sm:$0xff]
          %v1086 = vld [vmem:[#allocation6 + $0x7c8] sm:$0xff]
          %v1087 = vld [vmem:[#allocation6 + $0x7d0] sm:$0xff]
          %v1088 = vld [vmem:[#allocation6 + $0x7d8] sm:$0xff]
          %v1089 = vld [vmem:[#allocation6 + $0x7e0] sm:$0xff]
          %v1090 = vld [vmem:[#allocation6 + $0x7e8] sm:$0xff]
          %v1091 = vld [vmem:[#allocation6 + $0x7f0] sm:$0xff]
          %v1092 = vld [vmem:[#allocation6 + $0x7f8] sm:$0xff]
          %v1093 = vld [vmem:[#allocation6 + $0x800] sm:$0xff]
          %v1094 = vld [vmem:[#allocation6 + $0x808] sm:$0xff]
          %v1095 = vld [vmem:[#allocation6 + $0x810] sm:$0xff]
          %v1096 = vld [vmem:[#allocation6 + $0x818] sm:$0xff]
          %v1097 = vld [vmem:[#allocation6 + $0x820] sm:$0xff]
          %v1098 = vld [vmem:[#allocation6 + $0x828] sm:$0xff]
          %v1099 = vld [vmem:[#allocation6 + $0x830] sm:$0xff]
          %v1100 = vld [vmem:[#allocation6 + $0x838] sm:$0xff]
          %v1101 = vld [vmem:[#allocation6 + $0x840] sm:$0xff]
          %v1102 = vld [vmem:[#allocation6 + $0x848] sm:$0xff]
          %v1103 = vld [vmem:[#allocation6 + $0x850] sm:$0xff]
          %v1104 = vld [vmem:[#allocation6 + $0x858] sm:$0xff]
          %v1105 = vld [vmem:[#allocation6 + $0x860] sm:$0xff]
          %v1106 = vld [vmem:[#allocation6 + $0x868] sm:$0xff]
          %v1107 = vld [vmem:[#allocation6 + $0x870] sm:$0xff]
          %v1108 = vld [vmem:[#allocation6 + $0x878] sm:$0xff]
          %v1109 = vld [vmem:[#allocation6 + $0x880] sm:$0xff]
          %v1110 = vld [vmem:[#allocation6 + $0x888] sm:$0xff]
          %v1111 = vld [vmem:[#allocation6 + $0x890] sm:$0xff]
          %v1112 = vld [vmem:[#allocation6 + $0x898] sm:$0xff]
          %v1113 = vld [vmem:[#allocation6 + $0x8a0] sm:$0xff]
          %v1114 = vld [vmem:[#allocation6 + $0x8a8] sm:$0xff]
          %v1115 = vld [vmem:[#allocation6 + $0x8b0] sm:$0xff]
          %v1116 = vld [vmem:[#allocation6 + $0x8b8] sm:$0xff]
          %v1117 = vld [vmem:[#allocation6 + $0x8c0] sm:$0xff]
          %v1118 = vld [vmem:[#allocation6 + $0x8c8] sm:$0xff]
          %v1119 = vld [vmem:[#allocation6 + $0x8d0] sm:$0xff]
          %v1120 = vld [vmem:[#allocation6 + $0x8d8] sm:$0xff]
          %v1121 = vld [vmem:[#allocation6 + $0x8e0] sm:$0xff]
          %v1122 = vld [vmem:[#allocation6 + $0x8e8] sm:$0xff]
          %v1123 = vld [vmem:[#allocation6 + $0x8f0] sm:$0xff]
          %v1124 = vld [vmem:[#allocation6 + $0x8f8] sm:$0xff]
          %v1125 = vld [vmem:[#allocation6 + $0x900] sm:$0xff]
          %v1126 = vld [vmem:[#allocation6 + $0x908] sm:$0xff]
          %v1127 = vld [vmem:[#allocation6 + $0x910] sm:$0xff]
          %v1128 = vld [vmem:[#allocation6 + $0x918] sm:$0xff]
          %v1129 = vld [vmem:[#allocation6 + $0x920] sm:$0xff]
          %v1130 = vld [vmem:[#allocation6 + $0x928] sm:$0xff]
          %v1131 = vld [vmem:[#allocation6 + $0x930] sm:$0xff]
          %v1132 = vld [vmem:[#allocation6 + $0x938] sm:$0xff]
          %v1133 = vld [vmem:[#allocation6 + $0x940] sm:$0xff]
          %v1134 = vld [vmem:[#allocation6 + $0x948] sm:$0xff]
          %v1135 = vld [vmem:[#allocation6 + $0x950] sm:$0xff]
          %v1136 = vld [vmem:[#allocation6 + $0x958] sm:$0xff]
          %v1137 = vld [vmem:[#allocation6 + $0x960] sm:$0xff]
          %v1138 = vld [vmem:[#allocation6 + $0x968] sm:$0xff]
          %v1139 = vld [vmem:[#allocation6 + $0x970] sm:$0xff]
          %v1140 = vld [vmem:[#allocation6 + $0x978] sm:$0xff]
          %v1141 = vld [vmem:[#allocation6 + $0x980] sm:$0xff]
          %v1142 = vld [vmem:[#allocation6 + $0x988] sm:$0xff]
          %v1143 = vld [vmem:[#allocation6 + $0x990] sm:$0xff]
          %v1144 = vld [vmem:[#allocation6 + $0x998] sm:$0xff]
          %v1145 = vld [vmem:[#allocation6 + $0x9a0] sm:$0xff]
          %v1146 = vld [vmem:[#allocation6 + $0x9a8] sm:$0xff]
          %v1147 = vld [vmem:[#allocation6 + $0x9b0] sm:$0xff]
          %v1148 = vld [vmem:[#allocation6 + $0x9b8] sm:$0xff]
          %v1149 = vld [vmem:[#allocation6 + $0x9c0] sm:$0xff]
          %v1150 = vld [vmem:[#allocation6 + $0x9c8] sm:$0xff]
          %v1151 = vld [vmem:[#allocation6 + $0x9d0] sm:$0xff]
          %v1152 = vld [vmem:[#allocation6 + $0x9d8] sm:$0xff]
          %v1153 = vld [vmem:[#allocation6 + $0x9e0] sm:$0xff]
          %v1154 = vld [vmem:[#allocation6 + $0x9e8] sm:$0xff]
          %v1155 = vld [vmem:[#allocation6 + $0x9f0] sm:$0xff]
          %v1156 = vld [vmem:[#allocation6 + $0x9f8] sm:$0xff]
          %v1157 = vld [vmem:[#allocation6 + $0xa00] sm:$0xff]
          %v1158 = vld [vmem:[#allocation6 + $0xa08] sm:$0xff]
          %v1159 = vld [vmem:[#allocation6 + $0xa10] sm:$0xff]
          %v1160 = vld [vmem:[#allocation6 + $0xa18] sm:$0xff]
          %v1161 = vld [vmem:[#allocation6 + $0xa20] sm:$0xff]
          %v1162 = vld [vmem:[#allocation6 + $0xa28] sm:$0xff]
          %v1163 = vld [vmem:[#allocation6 + $0xa30] sm:$0xff]
          %v1164 = vld [vmem:[#allocation6 + $0xa38] sm:$0xff]
          %v1165 = vld [vmem:[#allocation6 + $0xa40] sm:$0xff]
          %v1166 = vld [vmem:[#allocation6 + $0xa48] sm:$0xff]
          %v1167 = vld [vmem:[#allocation6 + $0xa50] sm:$0xff]
          %v1168 = vld [vmem:[#allocation6 + $0xa58] sm:$0xff]
          %v1169 = vld [vmem:[#allocation6 + $0xa60] sm:$0xff]
          %v1170 = vld [vmem:[#allocation6 + $0xa68] sm:$0xff]
          %v1171 = vld [vmem:[#allocation6 + $0xa70] sm:$0xff]
          %v1172 = vld [vmem:[#allocation6 + $0xa78] sm:$0xff]
          %v1173 = vld [vmem:[#allocation6 + $0xa80] sm:$0xff]
          %v1174 = vld [vmem:[#allocation6 + $0xa88] sm:$0xff]
          %v1175 = vld [vmem:[#allocation6 + $0xa90] sm:$0xff]
          %v1176 = vld [vmem:[#allocation6 + $0xa98] sm:$0xff]
          %v1177 = vld [vmem:[#allocation6 + $0xaa0] sm:$0xff]
          %v1178 = vld [vmem:[#allocation6 + $0xaa8] sm:$0xff]
          %v1179 = vld [vmem:[#allocation6 + $0xab0] sm:$0xff]
          %v1180 = vld [vmem:[#allocation6 + $0xab8] sm:$0xff]
          %v1181 = vld [vmem:[#allocation6 + $0xac0] sm:$0xff]
          %v1182 = vld [vmem:[#allocation6 + $0xac8] sm:$0xff]
          %v1183 = vld [vmem:[#allocation6 + $0xad0] sm:$0xff]
          %v1184 = vld [vmem:[#allocation6 + $0xad8] sm:$0xff]
          %v1185 = vld [vmem:[#allocation6 + $0xae0] sm:$0xff]
          %v1186 = vld [vmem:[#allocation6 + $0xae8] sm:$0xff]
          %v1187 = vld [vmem:[#allocation6 + $0xaf0] sm:$0xff]
          %v1188 = vld [vmem:[#allocation6 + $0xaf8] sm:$0xff]
          %v1189 = vld [vmem:[#allocation6 + $0xb00] sm:$0xff]
          %v1190 = vld [vmem:[#allocation6 + $0xb08] sm:$0xff]
          %v1191 = vld [vmem:[#allocation6 + $0xb10] sm:$0xff]
          %v1192 = vld [vmem:[#allocation6 + $0xb18] sm:$0xff]
          %v1193 = vld [vmem:[#allocation6 + $0xb20] sm:$0xff]
          %v1194 = vld [vmem:[#allocation6 + $0xb28] sm:$0xff]
          %v1195 = vld [vmem:[#allocation6 + $0xb30] sm:$0xff]
          %v1196 = vld [vmem:[#allocation6 + $0xb38] sm:$0xff]
          %v1197 = vld [vmem:[#allocation6 + $0xb40] sm:$0xff]
          %v1198 = vld [vmem:[#allocation6 + $0xb48] sm:$0xff]
          %v1199 = vld [vmem:[#allocation6 + $0xb50] sm:$0xff]
          %v1200 = vld [vmem:[#allocation6 + $0xb58] sm:$0xff]
          %v1201 = vld [vmem:[#allocation6 + $0xb60] sm:$0xff]
          %v1202 = vld [vmem:[#allocation6 + $0xb68] sm:$0xff]
          %v1203 = vld [vmem:[#allocation6 + $0xb70] sm:$0xff]
          %v1204 = vld [vmem:[#allocation6 + $0xb78] sm:$0xff]
          %v1205 = vld [vmem:[#allocation6 + $0xb80] sm:$0xff]
          %v1206 = vld [vmem:[#allocation6 + $0xb88] sm:$0xff]
          %v1207 = vld [vmem:[#allocation6 + $0xb90] sm:$0xff]
          %v1208 = vld [vmem:[#allocation6 + $0xb98] sm:$0xff]
          %v1209 = vld [vmem:[#allocation6 + $0xba0] sm:$0xff]
          %v1210 = vld [vmem:[#allocation6 + $0xba8] sm:$0xff]
          %v1211 = vld [vmem:[#allocation6 + $0xbb0] sm:$0xff]
          %v1212 = vld [vmem:[#allocation6 + $0xbb8] sm:$0xff]
          %v1213 = vld [vmem:[#allocation6 + $0xbc0] sm:$0xff]
          %v1214 = vld [vmem:[#allocation6 + $0xbc8] sm:$0xff]
          %v1215 = vld [vmem:[#allocation6 + $0xbd0] sm:$0xff]
          %v1216 = vld [vmem:[#allocation6 + $0xbd8] sm:$0xff]
          %v1217 = vld [vmem:[#allocation6 + $0xbe0] sm:$0xff]
          %v1218 = vld [vmem:[#allocation6 + $0xbe8] sm:$0xff]
          %v1219 = vld [vmem:[#allocation6 + $0xbf0] sm:$0xff]
          %v1220 = vld [vmem:[#allocation6 + $0xbf8] sm:$0xff]
          %v1221 = vld [vmem:[#allocation6 + $0xc00] sm:$0xff]
          %v1222 = vld [vmem:[#allocation6 + $0xc08] sm:$0xff]
          %v1223 = vld [vmem:[#allocation6 + $0xc10] sm:$0xff]
          %v1224 = vld [vmem:[#allocation6 + $0xc18] sm:$0xff]
          %v1225 = vld [vmem:[#allocation6 + $0xc20] sm:$0xff]
          %v1226 = vld [vmem:[#allocation6 + $0xc28] sm:$0xff]
          %v1227 = vld [vmem:[#allocation6 + $0xc30] sm:$0xff]
          %v1228 = vld [vmem:[#allocation6 + $0xc38] sm:$0xff]
          %v1229 = vld [vmem:[#allocation6 + $0xc40] sm:$0xff]
          %v1230 = vld [vmem:[#allocation6 + $0xc48] sm:$0xff]
          %v1231 = vld [vmem:[#allocation6 + $0xc50] sm:$0xff]
          %v1232 = vld [vmem:[#allocation6 + $0xc58] sm:$0xff]
          %v1233 = vld [vmem:[#allocation6 + $0xc60] sm:$0xff]
          %v1234 = vld [vmem:[#allocation6 + $0xc68] sm:$0xff]
          %v1235 = vld [vmem:[#allocation6 + $0xc70] sm:$0xff]
          %v1236 = vld [vmem:[#allocation6 + $0xc78] sm:$0xff]
          %v1237 = vld [vmem:[#allocation6 + $0xc80] sm:$0xff]
          %v1238 = vld [vmem:[#allocation6 + $0xc88] sm:$0xff]
          %v1239 = vld [vmem:[#allocation6 + $0xc90] sm:$0xff]
          %v1240 = vld [vmem:[#allocation6 + $0xc98] sm:$0xff]
          %v1241 = vld [vmem:[#allocation6 + $0xca0] sm:$0xff]
          %v1242 = vld [vmem:[#allocation6 + $0xca8] sm:$0xff]
          %v1243 = vld [vmem:[#allocation6 + $0xcb0] sm:$0xff]
          %v1244 = vld [vmem:[#allocation6 + $0xcb8] sm:$0xff]
          %v1245 = vld [vmem:[#allocation6 + $0xcc0] sm:$0xff]
          %v1246 = vld [vmem:[#allocation6 + $0xcc8] sm:$0xff]
          %v1247 = vld [vmem:[#allocation6 + $0xcd0] sm:$0xff]
          %v1248 = vld [vmem:[#allocation6 + $0xcd8] sm:$0xff]
          %v1249 = vld [vmem:[#allocation6 + $0xce0] sm:$0xff]
          %v1250 = vld [vmem:[#allocation6 + $0xce8] sm:$0xff]
          %v1251 = vld [vmem:[#allocation6 + $0xcf0] sm:$0xff]
          %v1252 = vld [vmem:[#allocation6 + $0xcf8] sm:$0xff]
          %v1253 = vld [vmem:[#allocation6 + $0xd00] sm:$0xff]
          %v1254 = vld [vmem:[#allocation6 + $0xd08] sm:$0xff]
          %v1255 = vld [vmem:[#allocation6 + $0xd10] sm:$0xff]
          %v1256 = vld [vmem:[#allocation6 + $0xd18] sm:$0xff]
          %v1257 = vld [vmem:[#allocation6 + $0xd20] sm:$0xff]
          %v1258 = vld [vmem:[#allocation6 + $0xd28] sm:$0xff]
          %v1259 = vld [vmem:[#allocation6 + $0xd30] sm:$0xff]
          %v1260 = vld [vmem:[#allocation6 + $0xd38] sm:$0xff]
          %v1261 = vld [vmem:[#allocation6 + $0xd40] sm:$0xff]
          %v1262 = vld [vmem:[#allocation6 + $0xd48] sm:$0xff]
          %v1263 = vld [vmem:[#allocation6 + $0xd50] sm:$0xff]
          %v1264 = vld [vmem:[#allocation6 + $0xd58] sm:$0xff]
          %v1265 = vld [vmem:[#allocation6 + $0xd60] sm:$0xff]
          %v1266 = vld [vmem:[#allocation6 + $0xd68] sm:$0xff]
          %v1267 = vld [vmem:[#allocation6 + $0xd70] sm:$0xff]
          %v1268 = vld [vmem:[#allocation6 + $0xd78] sm:$0xff]
          %v1269 = vld [vmem:[#allocation6 + $0xd80] sm:$0xff]
          %v1270 = vld [vmem:[#allocation6 + $0xd88] sm:$0xff]
          %v1271 = vld [vmem:[#allocation6 + $0xd90] sm:$0xff]
          %v1272 = vld [vmem:[#allocation6 + $0xd98] sm:$0xff]
          %v1273 = vld [vmem:[#allocation6 + $0xda0] sm:$0xff]
          %v1274 = vld [vmem:[#allocation6 + $0xda8] sm:$0xff]
          %v1275 = vld [vmem:[#allocation6 + $0xdb0] sm:$0xff]
          %v1276 = vld [vmem:[#allocation6 + $0xdb8] sm:$0xff]
          %v1277 = vld [vmem:[#allocation6 + $0xdc0] sm:$0xff]
          %v1278 = vld [vmem:[#allocation6 + $0xdc8] sm:$0xff]
          %v1279 = vld [vmem:[#allocation6 + $0xdd0] sm:$0xff]
          %v1280 = vld [vmem:[#allocation6 + $0xdd8] sm:$0xff]
          %v1281 = vld [vmem:[#allocation6 + $0xde0] sm:$0xff]
          %v1282 = vld [vmem:[#allocation6 + $0xde8] sm:$0xff]
          %v1283 = vld [vmem:[#allocation6 + $0xdf0] sm:$0xff]
          %v1284 = vld [vmem:[#allocation6 + $0xdf8] sm:$0xff]
          %v1285 = vld [vmem:[#allocation6 + $0xe00] sm:$0xff]
          %v1286 = vld [vmem:[#allocation6 + $0xe08] sm:$0xff]
          %v1287 = vld [vmem:[#allocation6 + $0xe10] sm:$0xff]
          %v1288 = vld [vmem:[#allocation6 + $0xe18] sm:$0xff]
          %v1289 = vld [vmem:[#allocation6 + $0xe20] sm:$0xff]
          %v1290 = vld [vmem:[#allocation6 + $0xe28] sm:$0xff]
          %v1291 = vld [vmem:[#allocation6 + $0xe30] sm:$0xff]
          %v1292 = vld [vmem:[#allocation6 + $0xe38] sm:$0xff]
          %v1293 = vld [vmem:[#allocation6 + $0xe40] sm:$0xff]
          %v1294 = vld [vmem:[#allocation6 + $0xe48] sm:$0xff]
          %v1295 = vld [vmem:[#allocation6 + $0xe50] sm:$0xff]
          %v1296 = vld [vmem:[#allocation6 + $0xe58] sm:$0xff]
          %v1297 = vld [vmem:[#allocation6 + $0xe60] sm:$0xff]
          %v1298 = vld [vmem:[#allocation6 + $0xe68] sm:$0xff]
          %v1299 = vld [vmem:[#allocation6 + $0xe70] sm:$0xff]
          %v1300 = vld [vmem:[#allocation6 + $0xe78] sm:$0xff]
          %v1301 = vld [vmem:[#allocation6 + $0xe80] sm:$0xff]
          %v1302 = vld [vmem:[#allocation6 + $0xe88] sm:$0xff]
          %v1303 = vld [vmem:[#allocation6 + $0xe90] sm:$0xff]
          %v1304 = vld [vmem:[#allocation6 + $0xe98] sm:$0xff]
          %v1305 = vld [vmem:[#allocation6 + $0xea0] sm:$0xff]
          %v1306 = vld [vmem:[#allocation6 + $0xea8] sm:$0xff]
          %v1307 = vld [vmem:[#allocation6 + $0xeb0] sm:$0xff]
          %v1308 = vld [vmem:[#allocation6 + $0xeb8] sm:$0xff]
          %v1309 = vld [vmem:[#allocation6 + $0xec0] sm:$0xff]
          %v1310 = vld [vmem:[#allocation6 + $0xec8] sm:$0xff]
          %v1311 = vld [vmem:[#allocation6 + $0xed0] sm:$0xff]
          %v1312 = vld [vmem:[#allocation6 + $0xed8] sm:$0xff]
          %v1313 = vld [vmem:[#allocation6 + $0xee0] sm:$0xff]
          %v1314 = vld [vmem:[#allocation6 + $0xee8] sm:$0xff]
          %v1315 = vld [vmem:[#allocation6 + $0xef0] sm:$0xff]
          %v1316 = vld [vmem:[#allocation6 + $0xef8] sm:$0xff]
          %v1317 = vld [vmem:[#allocation6 + $0xf00] sm:$0xff]
          %v1318 = vld [vmem:[#allocation6 + $0xf08] sm:$0xff]
          %v1319 = vld [vmem:[#allocation6 + $0xf10] sm:$0xff]
          %v1320 = vld [vmem:[#allocation6 + $0xf18] sm:$0xff]
          %v1321 = vld [vmem:[#allocation6 + $0xf20] sm:$0xff]
          %v1322 = vld [vmem:[#allocation6 + $0xf28] sm:$0xff]
          %v1323 = vld [vmem:[#allocation6 + $0xf30] sm:$0xff]
          %v1324 = vld [vmem:[#allocation6 + $0xf38] sm:$0xff]
          %v1325 = vld [vmem:[#allocation6 + $0xf40] sm:$0xff]
          %v1326 = vld [vmem:[#allocation6 + $0xf48] sm:$0xff]
          %v1327 = vld [vmem:[#allocation6 + $0xf50] sm:$0xff]
          %v1328 = vld [vmem:[#allocation6 + $0xf58] sm:$0xff]
          %v1329 = vld [vmem:[#allocation6 + $0xf60] sm:$0xff]
          %v1330 = vld [vmem:[#allocation6 + $0xf68] sm:$0xff]
          %v1331 = vld [vmem:[#allocation6 + $0xf70] sm:$0xff]
          %v1332 = vld [vmem:[#allocation6 + $0xf78] sm:$0xff]
          %v1333 = vld [vmem:[#allocation6 + $0xf80] sm:$0xff]
          %v1334 = vld [vmem:[#allocation6 + $0xf88] sm:$0xff]
          %v1335 = vld [vmem:[#allocation6 + $0xf90] sm:$0xff]
          %v1336 = vld [vmem:[#allocation6 + $0xf98] sm:$0xff]
          %v1337 = vld [vmem:[#allocation6 + $0xfa0] sm:$0xff]
          %v1338 = vld [vmem:[#allocation6 + $0xfa8] sm:$0xff]
          %v1339 = vld [vmem:[#allocation6 + $0xfb0] sm:$0xff]
          %v1340 = vld [vmem:[#allocation6 + $0xfb8] sm:$0xff]
          %v1341 = vld [vmem:[#allocation6 + $0xfc0] sm:$0xff]
          %v1342 = vld [vmem:[#allocation6 + $0xfc8] sm:$0xff]
          %v1343 = vld [vmem:[#allocation6 + $0xfd0] sm:$0xff]
          %v1344 = vld [vmem:[#allocation6 + $0xfd8] sm:$0xff]
          %v1345 = vld [vmem:[#allocation6 + $0xfe0] sm:$0xff]
          %v1346 = vld [vmem:[#allocation6 + $0xfe8] sm:$0xff]
          %v1347 = vld [vmem:[#allocation6 + $0xff0] sm:$0xff]
          %v1348 = vld [vmem:[#allocation6 + $0xff8] sm:$0xff]
          %v1349 = vld [vmem:[#allocation6 + $0x1000] sm:$0xff]
          %v1350 = vld [vmem:[#allocation6 + $0x1008] sm:$0xff]
          %v1351 = vld [vmem:[#allocation6 + $0x1010] sm:$0xff]
          %v1352 = vld [vmem:[#allocation6 + $0x1018] sm:$0xff]
          %v1353 = vld [vmem:[#allocation6 + $0x1020] sm:$0xff]
          %v1354 = vld [vmem:[#allocation6 + $0x1028] sm:$0xff]
          %v1355 = vld [vmem:[#allocation6 + $0x1030] sm:$0xff]
          %v1356 = vld [vmem:[#allocation6 + $0x1038] sm:$0xff]
          %v1357 = vld [vmem:[#allocation6 + $0x1040] sm:$0xff]
          %v1358 = vld [vmem:[#allocation6 + $0x1048] sm:$0xff]
          %v1359 = vld [vmem:[#allocation6 + $0x1050] sm:$0xff]
          %v1360 = vld [vmem:[#allocation6 + $0x1058] sm:$0xff]
          %v1361 = vld [vmem:[#allocation6 + $0x1060] sm:$0xff]
          %v1362 = vld [vmem:[#allocation6 + $0x1068] sm:$0xff]
          %v1363 = vld [vmem:[#allocation6 + $0x1070] sm:$0xff]
          %v1364 = vld [vmem:[#allocation6 + $0x1078] sm:$0xff]
          %v1365 = vld [vmem:[#allocation6 + $0x1080] sm:$0xff]
          %v1366 = vld [vmem:[#allocation6 + $0x1088] sm:$0xff]
          %v1367 = vld [vmem:[#allocation6 + $0x1090] sm:$0xff]
          %v1368 = vld [vmem:[#allocation6 + $0x1098] sm:$0xff]
          %v1369 = vld [vmem:[#allocation6 + $0x10a0] sm:$0xff]
          %v1370 = vld [vmem:[#allocation6 + $0x10a8] sm:$0xff]
          %v1371 = vld [vmem:[#allocation6 + $0x10b0] sm:$0xff]
          %v1372 = vld [vmem:[#allocation6 + $0x10b8] sm:$0xff]
          %v1373 = vld [vmem:[#allocation6 + $0x10c0] sm:$0xff]
          %v1374 = vld [vmem:[#allocation6 + $0x10c8] sm:$0xff]
          %v1375 = vld [vmem:[#allocation6 + $0x10d0] sm:$0xff]
          %v1376 = vld [vmem:[#allocation6 + $0x10d8] sm:$0xff]
          %v1377 = vld [vmem:[#allocation6 + $0x10e0] sm:$0xff]
          %v1378 = vld [vmem:[#allocation6 + $0x10e8] sm:$0xff]
          %v1379 = vld [vmem:[#allocation6 + $0x10f0] sm:$0xff]
          %v1380 = vld [vmem:[#allocation6 + $0x10f8] sm:$0xff]
          %v1381 = vld [vmem:[#allocation6 + $0x1100] sm:$0xff]
          %v1382 = vld [vmem:[#allocation6 + $0x1108] sm:$0xff]
          %v1383 = vld [vmem:[#allocation6 + $0x1110] sm:$0xff]
          %v1384 = vld [vmem:[#allocation6 + $0x1118] sm:$0xff]
          %v1385 = vld [vmem:[#allocation6 + $0x1120] sm:$0xff]
          %v1386 = vld [vmem:[#allocation6 + $0x1128] sm:$0xff]
          %v1387 = vld [vmem:[#allocation6 + $0x1130] sm:$0xff]
          %v1388 = vld [vmem:[#allocation6 + $0x1138] sm:$0xff]
          %v1389 = vld [vmem:[#allocation6 + $0x1140] sm:$0xff]
          %v1390 = vld [vmem:[#allocation6 + $0x1148] sm:$0xff]
          %v1391 = vld [vmem:[#allocation6 + $0x1150] sm:$0xff]
          %v1392 = vld [vmem:[#allocation6 + $0x1158] sm:$0xff]
          %v1393 = vld [vmem:[#allocation6 + $0x1160] sm:$0xff]
          %v1394 = vld [vmem:[#allocation6 + $0x1168] sm:$0xff]
          %v1395 = vld [vmem:[#allocation6 + $0x1170] sm:$0xff]
          %v1396 = vld [vmem:[#allocation6 + $0x1178] sm:$0xff]
          %v1397 = vld [vmem:[#allocation6 + $0x1180] sm:$0xff]
          %v1398 = vld [vmem:[#allocation6 + $0x1188] sm:$0xff]
          %v1399 = vld [vmem:[#allocation6 + $0x1190] sm:$0xff]
          %v1400 = vld [vmem:[#allocation6 + $0x1198] sm:$0xff]
          %v1401 = vld [vmem:[#allocation6 + $0x11a0] sm:$0xff]
          %v1402 = vld [vmem:[#allocation6 + $0x11a8] sm:$0xff]
          %v1403 = vld [vmem:[#allocation6 + $0x11b0] sm:$0xff]
          %v1404 = vld [vmem:[#allocation6 + $0x11b8] sm:$0xff]
          %v1405 = vld [vmem:[#allocation6 + $0x11c0] sm:$0xff]
          %v1406 = vld [vmem:[#allocation6 + $0x11c8] sm:$0xff]
          %v1407 = vld [vmem:[#allocation6 + $0x11d0] sm:$0xff]
          %v1408 = vld [vmem:[#allocation6 + $0x11d8] sm:$0xff]
          %v1409 = vld [vmem:[#allocation6 + $0x11e0] sm:$0xff]
          %v1410 = vld [vmem:[#allocation6 + $0x11e8] sm:$0xff]
          %v1411 = vld [vmem:[#allocation6 + $0x11f0] sm:$0xff]
          %v1412 = vld [vmem:[#allocation6 + $0x11f8] sm:$0xff]
          %v1413 = vld [vmem:[#allocation6 + $0x1200] sm:$0xff]
          %v1414 = vld [vmem:[#allocation6 + $0x1208] sm:$0xff]
          %v1415 = vld [vmem:[#allocation6 + $0x1210] sm:$0xff]
          %v1416 = vld [vmem:[#allocation6 + $0x1218] sm:$0xff]
          %v1417 = vld [vmem:[#allocation6 + $0x1220] sm:$0xff]
          %v1418 = vld [vmem:[#allocation6 + $0x1228] sm:$0xff]
          %v1419 = vld [vmem:[#allocation6 + $0x1230] sm:$0xff]
          %v1420 = vld [vmem:[#allocation6 + $0x1238] sm:$0xff]
          %v1421 = vld [vmem:[#allocation6 + $0x1240] sm:$0xff]
          %v1422 = vld [vmem:[#allocation6 + $0x1248] sm:$0xff]
          %v1423 = vld [vmem:[#allocation6 + $0x1250] sm:$0xff]
          %v1424 = vld [vmem:[#allocation6 + $0x1258] sm:$0xff]
          %v1425 = vld [vmem:[#allocation6 + $0x1260] sm:$0xff]
          %v1426 = vld [vmem:[#allocation6 + $0x1268] sm:$0xff]
          %v1427 = vld [vmem:[#allocation6 + $0x1270] sm:$0xff]
          %v1428 = vld [vmem:[#allocation6 + $0x1278] sm:$0xff]
          %v1429 = vld [vmem:[#allocation6 + $0x1280] sm:$0xff]
          %v1430 = vld [vmem:[#allocation6 + $0x1288] sm:$0xff]
          %v1431 = vld [vmem:[#allocation6 + $0x1290] sm:$0xff]
          %v1432 = vld [vmem:[#allocation6 + $0x1298] sm:$0xff]
          %v1433 = vld [vmem:[#allocation6 + $0x12a0] sm:$0xff]
          %v1434 = vld [vmem:[#allocation6 + $0x12a8] sm:$0xff]
          %v1435 = vld [vmem:[#allocation6 + $0x12b0] sm:$0xff]
          %v1436 = vld [vmem:[#allocation6 + $0x12b8] sm:$0xff]
          %v1437 = vld [vmem:[#allocation6 + $0x12c0] sm:$0xff]
          %v1438 = vld [vmem:[#allocation6 + $0x12c8] sm:$0xff]
          %v1439 = vld [vmem:[#allocation6 + $0x12d0] sm:$0xff]
          %v1440 = vld [vmem:[#allocation6 + $0x12d8] sm:$0xff]
          %v1441 = vld [vmem:[#allocation6 + $0x12e0] sm:$0xff]
          %v1442 = vld [vmem:[#allocation6 + $0x12e8] sm:$0xff]
          %v1443 = vld [vmem:[#allocation6 + $0x12f0] sm:$0xff]
          %v1444 = vld [vmem:[#allocation6 + $0x12f8] sm:$0xff]
          %v1445 = vld [vmem:[#allocation6 + $0x1300] sm:$0xff]
          %v1446 = vld [vmem:[#allocation6 + $0x1308] sm:$0xff]
          %v1447 = vld [vmem:[#allocation6 + $0x1310] sm:$0xff]
          %v1448 = vld [vmem:[#allocation6 + $0x1318] sm:$0xff]
          %v1449 = vld [vmem:[#allocation6 + $0x1320] sm:$0xff]
          %v1450 = vld [vmem:[#allocation6 + $0x1328] sm:$0xff]
          %v1451 = vld [vmem:[#allocation6 + $0x1330] sm:$0xff]
          %v1452 = vld [vmem:[#allocation6 + $0x1338] sm:$0xff]
          %v1453 = vld [vmem:[#allocation6 + $0x1340] sm:$0xff]
          %v1454 = vld [vmem:[#allocation6 + $0x1348] sm:$0xff]
          %v1455 = vld [vmem:[#allocation6 + $0x1350] sm:$0xff]
          %v1456 = vld [vmem:[#allocation6 + $0x1358] sm:$0xff]
          %v1457 = vld [vmem:[#allocation6 + $0x1360] sm:$0xff]
          %v1458 = vld [vmem:[#allocation6 + $0x1368] sm:$0xff]
          %v1459 = vld [vmem:[#allocation6 + $0x1370] sm:$0xff]
          %v1460 = vld [vmem:[#allocation6 + $0x1378] sm:$0xff]
          %v1461 = vld [vmem:[#allocation6 + $0x1380] sm:$0xff]
          %v1462 = vld [vmem:[#allocation6 + $0x1388] sm:$0xff]
          %v1463 = vld [vmem:[#allocation6 + $0x1390] sm:$0xff]
          %v1464 = vld [vmem:[#allocation6 + $0x1398] sm:$0xff]
          %v1465 = vld [vmem:[#allocation6 + $0x13a0] sm:$0xff]
          %v1466 = vld [vmem:[#allocation6 + $0x13a8] sm:$0xff]
          %v1467 = vld [vmem:[#allocation6 + $0x13b0] sm:$0xff]
          %v1468 = vld [vmem:[#allocation6 + $0x13b8] sm:$0xff]
          %v1469 = vld [vmem:[#allocation6 + $0x13c0] sm:$0xff]
          %v1470 = vld [vmem:[#allocation6 + $0x13c8] sm:$0xff]
          %v1471 = vld [vmem:[#allocation6 + $0x13d0] sm:$0xff]
          %v1472 = vld [vmem:[#allocation6 + $0x13d8] sm:$0xff]
          %v1473 = vld [vmem:[#allocation6 + $0x13e0] sm:$0xff]
          %v1474 = vld [vmem:[#allocation6 + $0x13e8] sm:$0xff]
          %v1475 = vld [vmem:[#allocation6 + $0x13f0] sm:$0xff]
          %v1476 = vld [vmem:[#allocation6 + $0x13f8] sm:$0xff]
          %v1477 = vld [vmem:[#allocation8] sm:$0x3]
          %v1479 = vperm.slane %v1477, 0
          %v1480 = vperm.slane %v1477, 1
          %v1503 = vunpack.c.l.b16 %v817
          %v1504 = vunpack.c.h.b16 %v817
          %v1505 = vunpack.c.l.b16 %v818
          %v1506 = vunpack.c.h.b16 %v818
          %v1507 = vunpack.c.l.b16 %v819
          %v1508 = vunpack.c.h.b16 %v819
          %v1509 = vunpack.c.l.b16 %v820
          %v1510 = vunpack.c.h.b16 %v820
          %v1511 = vunpack.c.l.b16 %v821
          %v1512 = vunpack.c.h.b16 %v821
          %v1513 = vunpack.c.l.b16 %v822
          %v1514 = vunpack.c.h.b16 %v822
          %v1515 = vunpack.c.l.b16 %v823
          %v1516 = vunpack.c.h.b16 %v823
          %v1517 = vunpack.c.l.b16 %v824
          %v1518 = vunpack.c.h.b16 %v824
          %v1519 = vunpack.c.l.b16 %v825
          %v1520 = vunpack.c.h.b16 %v825
          %v1521 = vunpack.c.l.b16 %v826
          %v1522 = vunpack.c.h.b16 %v826
          %v1523 = vunpack.c.l.b16 %v827
          %v1524 = vunpack.c.h.b16 %v827
          %v1525 = vunpack.c.l.b16 %v828
          %v1526 = vunpack.c.h.b16 %v828
          %v1527 = vunpack.c.l.b16 %v829
          %v1528 = vunpack.c.h.b16 %v829
          %v1529 = vunpack.c.l.b16 %v830
          %v1530 = vunpack.c.h.b16 %v830
          %v1531 = vunpack.c.l.b16 %v831
          %v1532 = vunpack.c.h.b16 %v831
          %v1533 = vunpack.c.l.b16 %v832
          %v1534 = vunpack.c.h.b16 %v832
          %v1535 = vunpack.c.l.b16 %v833
          %v1536 = vunpack.c.h.b16 %v833
          %v1537 = vunpack.c.l.b16 %v834
          %v1538 = vunpack.c.h.b16 %v834
          %v1539 = vunpack.c.l.b16 %v835
          %v1540 = vunpack.c.h.b16 %v835
          %v1541 = vunpack.c.l.b16 %v836
          %v1542 = vunpack.c.h.b16 %v836
          %v1543 = vpack.c.b16 %v1503, %v1503
          %v1544 = vpack.c.b16 %v1504, %v1504
          %v1545 = vpack.c.b16 %v1505, %v1505
          %v1546 = vpack.c.b16 %v1506, %v1506
          %v1547 = vpack.c.b16 %v1507, %v1507
          %v1548 = vpack.c.b16 %v1508, %v1508
          %v1549 = vpack.c.b16 %v1509, %v1509
          %v1550 = vpack.c.b16 %v1510, %v1510
          %v1551 = vpack.c.b16 %v1511, %v1511
          %v1552 = vpack.c.b16 %v1512, %v1512
          %v1553 = vpack.c.b16 %v1513, %v1513
          %v1554 = vpack.c.b16 %v1514, %v1514
          %v1555 = vpack.c.b16 %v1515, %v1515
          %v1556 = vpack.c.b16 %v1516, %v1516
          %v1557 = vpack.c.b16 %v1517, %v1517
          %v1558 = vpack.c.b16 %v1518, %v1518
          %v1559 = vpack.c.b16 %v1519, %v1519
          %v1560 = vpack.c.b16 %v1520, %v1520
          %v1561 = vpack.c.b16 %v1521, %v1521
          %v1562 = vpack.c.b16 %v1522, %v1522
          %v1563 = vpack.c.b16 %v1523, %v1523
          %v1564 = vpack.c.b16 %v1524, %v1524
          %v1565 = vpack.c.b16 %v1525, %v1525
          %v1566 = vpack.c.b16 %v1526, %v1526
          %v1567 = vpack.c.b16 %v1527, %v1527
          %v1568 = vpack.c.b16 %v1528, %v1528
          %v1569 = vpack.c.b16 %v1529, %v1529
          %v1570 = vpack.c.b16 %v1530, %v1530
          %v1571 = vpack.c.b16 %v1531, %v1531
          %v1572 = vpack.c.b16 %v1532, %v1532
          %v1573 = vpack.c.b16 %v1533, %v1533
          %v1574 = vpack.c.b16 %v1534, %v1534
          %v1575 = vpack.c.b16 %v1535, %v1535
          %v1576 = vpack.c.b16 %v1536, %v1536
          %v1577 = vpack.c.b16 %v1537, %v1537
          %v1578 = vpack.c.b16 %v1538, %v1538
          %v1579 = vpack.c.b16 %v1539, %v1539
          %v1580 = vpack.c.b16 %v1540, %v1540
          %v1581 = vpack.c.b16 %v1541, %v1541
          %v1582 = vpack.c.b16 %v1542, %v1542
          %v2263 = vunpack.c.l.b16 %v837
          %v2264 = vunpack.c.h.b16 %v837
          %v2265 = vunpack.c.l.b16 %v838
          %v2266 = vunpack.c.h.b16 %v838
          %v2267 = vunpack.c.l.b16 %v839
          %v2268 = vunpack.c.h.b16 %v839
          %v2269 = vunpack.c.l.b16 %v840
          %v2270 = vunpack.c.h.b16 %v840
          %v2271 = vunpack.c.l.b16 %v841
          %v2272 = vunpack.c.h.b16 %v841
          %v2273 = vunpack.c.l.b16 %v842
          %v2274 = vunpack.c.h.b16 %v842
          %v2275 = vunpack.c.l.b16 %v843
          %v2276 = vunpack.c.h.b16 %v843
          %v2277 = vunpack.c.l.b16 %v844
          %v2278 = vunpack.c.h.b16 %v844
          %v2279 = vunpack.c.l.b16 %v845
          %v2280 = vunpack.c.h.b16 %v845
          %v2281 = vunpack.c.l.b16 %v846
          %v2282 = vunpack.c.h.b16 %v846
          %v2283 = vunpack.c.l.b16 %v847
          %v2284 = vunpack.c.h.b16 %v847
          %v2285 = vunpack.c.l.b16 %v848
          %v2286 = vunpack.c.h.b16 %v848
          %v2287 = vunpack.c.l.b16 %v849
          %v2288 = vunpack.c.h.b16 %v849
          %v2289 = vunpack.c.l.b16 %v850
          %v2290 = vunpack.c.h.b16 %v850
          %v2291 = vunpack.c.l.b16 %v851
          %v2292 = vunpack.c.h.b16 %v851
          %v2293 = vunpack.c.l.b16 %v852
          %v2294 = vunpack.c.h.b16 %v852
          %v2295 = vunpack.c.l.b16 %v853
          %v2296 = vunpack.c.h.b16 %v853
          %v2297 = vunpack.c.l.b16 %v854
          %v2298 = vunpack.c.h.b16 %v854
          %v2299 = vunpack.c.l.b16 %v855
          %v2300 = vunpack.c.h.b16 %v855
          %v2301 = vunpack.c.l.b16 %v856
          %v2302 = vunpack.c.h.b16 %v856
          %v2303 = vunpack.c.l.b16 %v857
          %v2304 = vunpack.c.h.b16 %v857
          %v2305 = vunpack.c.l.b16 %v858
          %v2306 = vunpack.c.h.b16 %v858
          %v2307 = vunpack.c.l.b16 %v859
          %v2308 = vunpack.c.h.b16 %v859
          %v2309 = vunpack.c.l.b16 %v860
          %v2310 = vunpack.c.h.b16 %v860
          %v2311 = vunpack.c.l.b16 %v861
          %v2312 = vunpack.c.h.b16 %v861
          %v2313 = vunpack.c.l.b16 %v862
          %v2314 = vunpack.c.h.b16 %v862
          %v2315 = vunpack.c.l.b16 %v863
          %v2316 = vunpack.c.h.b16 %v863
          %v2317 = vunpack.c.l.b16 %v864
          %v2318 = vunpack.c.h.b16 %v864
          %v2319 = vunpack.c.l.b16 %v865
          %v2320 = vunpack.c.h.b16 %v865
          %v2321 = vunpack.c.l.b16 %v866
          %v2322 = vunpack.c.h.b16 %v866
          %v2323 = vunpack.c.l.b16 %v867
          %v2324 = vunpack.c.h.b16 %v867
          %v2325 = vunpack.c.l.b16 %v868
          %v2326 = vunpack.c.h.b16 %v868
          %v2327 = vunpack.c.l.b16 %v869
          %v2328 = vunpack.c.h.b16 %v869
          %v2329 = vunpack.c.l.b16 %v870
          %v2330 = vunpack.c.h.b16 %v870
          %v2331 = vunpack.c.l.b16 %v871
          %v2332 = vunpack.c.h.b16 %v871
          %v2333 = vunpack.c.l.b16 %v872
          %v2334 = vunpack.c.h.b16 %v872
          %v2335 = vunpack.c.l.b16 %v873
          %v2336 = vunpack.c.h.b16 %v873
          %v2337 = vunpack.c.l.b16 %v874
          %v2338 = vunpack.c.h.b16 %v874
          %v2339 = vunpack.c.l.b16 %v875
          %v2340 = vunpack.c.h.b16 %v875
          %v2341 = vunpack.c.l.b16 %v876
          %v2342 = vunpack.c.h.b16 %v876
          %v2343 = vunpack.c.l.b16 %v877
          %v2344 = vunpack.c.h.b16 %v877
          %v2345 = vunpack.c.l.b16 %v878
          %v2346 = vunpack.c.h.b16 %v878
          %v2347 = vunpack.c.l.b16 %v879
          %v2348 = vunpack.c.h.b16 %v879
          %v2349 = vunpack.c.l.b16 %v880
          %v2350 = vunpack.c.h.b16 %v880
          %v2351 = vunpack.c.l.b16 %v881
          %v2352 = vunpack.c.h.b16 %v881
          %v2353 = vunpack.c.l.b16 %v882
          %v2354 = vunpack.c.h.b16 %v882
          %v2355 = vunpack.c.l.b16 %v883
          %v2356 = vunpack.c.h.b16 %v883
          %v2357 = vunpack.c.l.b16 %v884
          %v2358 = vunpack.c.h.b16 %v884
          %v2359 = vunpack.c.l.b16 %v885
          %v2360 = vunpack.c.h.b16 %v885
          %v2361 = vunpack.c.l.b16 %v886
          %v2362 = vunpack.c.h.b16 %v886
          %v2363 = vunpack.c.l.b16 %v887
          %v2364 = vunpack.c.h.b16 %v887
          %v2365 = vunpack.c.l.b16 %v888
          %v2366 = vunpack.c.h.b16 %v888
          %v2367 = vunpack.c.l.b16 %v889
          %v2368 = vunpack.c.h.b16 %v889
          %v2369 = vunpack.c.l.b16 %v890
          %v2370 = vunpack.c.h.b16 %v890
          %v2371 = vunpack.c.l.b16 %v891
          %v2372 = vunpack.c.h.b16 %v891
          %v2373 = vunpack.c.l.b16 %v892
          %v2374 = vunpack.c.h.b16 %v892
          %v2375 = vunpack.c.l.b16 %v893
          %v2376 = vunpack.c.h.b16 %v893
          %v2377 = vunpack.c.l.b16 %v894
          %v2378 = vunpack.c.h.b16 %v894
          %v2379 = vunpack.c.l.b16 %v895
          %v2380 = vunpack.c.h.b16 %v895
          %v2381 = vunpack.c.l.b16 %v896
          %v2382 = vunpack.c.h.b16 %v896
          %v2383 = vunpack.c.l.b16 %v897
          %v2384 = vunpack.c.h.b16 %v897
          %v2385 = vunpack.c.l.b16 %v898
          %v2386 = vunpack.c.h.b16 %v898
          %v2387 = vunpack.c.l.b16 %v899
          %v2388 = vunpack.c.h.b16 %v899
          %v2389 = vunpack.c.l.b16 %v900
          %v2390 = vunpack.c.h.b16 %v900
          %v2391 = vunpack.c.l.b16 %v901
          %v2392 = vunpack.c.h.b16 %v901
          %v2393 = vunpack.c.l.b16 %v902
          %v2394 = vunpack.c.h.b16 %v902
          %v2395 = vunpack.c.l.b16 %v903
          %v2396 = vunpack.c.h.b16 %v903
          %v2397 = vunpack.c.l.b16 %v904
          %v2398 = vunpack.c.h.b16 %v904
          %v2399 = vunpack.c.l.b16 %v905
          %v2400 = vunpack.c.h.b16 %v905
          %v2401 = vunpack.c.l.b16 %v906
          %v2402 = vunpack.c.h.b16 %v906
          %v2403 = vunpack.c.l.b16 %v907
          %v2404 = vunpack.c.h.b16 %v907
          %v2405 = vunpack.c.l.b16 %v908
          %v2406 = vunpack.c.h.b16 %v908
          %v2407 = vunpack.c.l.b16 %v909
          %v2408 = vunpack.c.h.b16 %v909
          %v2409 = vunpack.c.l.b16 %v910
          %v2410 = vunpack.c.h.b16 %v910
          %v2411 = vunpack.c.l.b16 %v911
          %v2412 = vunpack.c.h.b16 %v911
          %v2413 = vunpack.c.l.b16 %v912
          %v2414 = vunpack.c.h.b16 %v912
          %v2415 = vunpack.c.l.b16 %v913
          %v2416 = vunpack.c.h.b16 %v913
          %v2417 = vunpack.c.l.b16 %v914
          %v2418 = vunpack.c.h.b16 %v914
          %v2419 = vunpack.c.l.b16 %v915
          %v2420 = vunpack.c.h.b16 %v915
          %v2421 = vunpack.c.l.b16 %v916
          %v2422 = vunpack.c.h.b16 %v916
          %v2423 = vunpack.c.l.b16 %v917
          %v2424 = vunpack.c.h.b16 %v917
          %v2425 = vunpack.c.l.b16 %v918
          %v2426 = vunpack.c.h.b16 %v918
          %v2427 = vunpack.c.l.b16 %v919
          %v2428 = vunpack.c.h.b16 %v919
          %v2429 = vunpack.c.l.b16 %v920
          %v2430 = vunpack.c.h.b16 %v920
          %v2431 = vunpack.c.l.b16 %v921
          %v2432 = vunpack.c.h.b16 %v921
          %v2433 = vunpack.c.l.b16 %v922
          %v2434 = vunpack.c.h.b16 %v922
          %v2435 = vunpack.c.l.b16 %v923
          %v2436 = vunpack.c.h.b16 %v923
          %v2437 = vunpack.c.l.b16 %v924
          %v2438 = vunpack.c.h.b16 %v924
          %v2439 = vunpack.c.l.b16 %v925
          %v2440 = vunpack.c.h.b16 %v925
          %v2441 = vunpack.c.l.b16 %v926
          %v2442 = vunpack.c.h.b16 %v926
          %v2443 = vunpack.c.l.b16 %v927
          %v2444 = vunpack.c.h.b16 %v927
          %v2445 = vunpack.c.l.b16 %v928
          %v2446 = vunpack.c.h.b16 %v928
          %v2447 = vunpack.c.l.b16 %v929
          %v2448 = vunpack.c.h.b16 %v929
          %v2449 = vunpack.c.l.b16 %v930
          %v2450 = vunpack.c.h.b16 %v930
          %v2451 = vunpack.c.l.b16 %v931
          %v2452 = vunpack.c.h.b16 %v931
          %v2453 = vunpack.c.l.b16 %v932
          %v2454 = vunpack.c.h.b16 %v932
          %v2455 = vunpack.c.l.b16 %v933
          %v2456 = vunpack.c.h.b16 %v933
          %v2457 = vunpack.c.l.b16 %v934
          %v2458 = vunpack.c.h.b16 %v934
          %v2459 = vunpack.c.l.b16 %v935
          %v2460 = vunpack.c.h.b16 %v935
          %v2461 = vunpack.c.l.b16 %v936
          %v2462 = vunpack.c.h.b16 %v936
          %v2463 = vunpack.c.l.b16 %v937
          %v2464 = vunpack.c.h.b16 %v937
          %v2465 = vunpack.c.l.b16 %v938
          %v2466 = vunpack.c.h.b16 %v938
          %v2467 = vunpack.c.l.b16 %v939
          %v2468 = vunpack.c.h.b16 %v939
          %v2469 = vunpack.c.l.b16 %v940
          %v2470 = vunpack.c.h.b16 %v940
          %v2471 = vunpack.c.l.b16 %v941
          %v2472 = vunpack.c.h.b16 %v941
          %v2473 = vunpack.c.l.b16 %v942
          %v2474 = vunpack.c.h.b16 %v942
          %v2475 = vunpack.c.l.b16 %v943
          %v2476 = vunpack.c.h.b16 %v943
          %v2477 = vunpack.c.l.b16 %v944
          %v2478 = vunpack.c.h.b16 %v944
          %v2479 = vunpack.c.l.b16 %v945
          %v2480 = vunpack.c.h.b16 %v945
          %v2481 = vunpack.c.l.b16 %v946
          %v2482 = vunpack.c.h.b16 %v946
          %v2483 = vunpack.c.l.b16 %v947
          %v2484 = vunpack.c.h.b16 %v947
          %v2485 = vunpack.c.l.b16 %v948
          %v2486 = vunpack.c.h.b16 %v948
          %v2487 = vunpack.c.l.b16 %v949
          %v2488 = vunpack.c.h.b16 %v949
          %v2489 = vunpack.c.l.b16 %v950
          %v2490 = vunpack.c.h.b16 %v950
          %v2491 = vunpack.c.l.b16 %v951
          %v2492 = vunpack.c.h.b16 %v951
          %v2493 = vunpack.c.l.b16 %v952
          %v2494 = vunpack.c.h.b16 %v952
          %v2495 = vunpack.c.l.b16 %v953
          %v2496 = vunpack.c.h.b16 %v953
          %v2497 = vunpack.c.l.b16 %v954
          %v2498 = vunpack.c.h.b16 %v954
          %v2499 = vunpack.c.l.b16 %v955
          %v2500 = vunpack.c.h.b16 %v955
          %v2501 = vunpack.c.l.b16 %v956
          %v2502 = vunpack.c.h.b16 %v956
          %v2503 = vunpack.c.l.b16 %v957
          %v2504 = vunpack.c.h.b16 %v957
          %v2505 = vunpack.c.l.b16 %v958
          %v2506 = vunpack.c.h.b16 %v958
          %v2507 = vunpack.c.l.b16 %v959
          %v2508 = vunpack.c.h.b16 %v959
          %v2509 = vunpack.c.l.b16 %v960
          %v2510 = vunpack.c.h.b16 %v960
          %v2511 = vunpack.c.l.b16 %v961
          %v2512 = vunpack.c.h.b16 %v961
          %v2513 = vunpack.c.l.b16 %v962
          %v2514 = vunpack.c.h.b16 %v962
          %v2515 = vunpack.c.l.b16 %v963
          %v2516 = vunpack.c.h.b16 %v963
          %v2517 = vunpack.c.l.b16 %v964
          %v2518 = vunpack.c.h.b16 %v964
          %v2519 = vunpack.c.l.b16 %v965
          %v2520 = vunpack.c.h.b16 %v965
          %v2521 = vunpack.c.l.b16 %v966
          %v2522 = vunpack.c.h.b16 %v966
          %v2523 = vunpack.c.l.b16 %v967
          %v2524 = vunpack.c.h.b16 %v967
          %v2525 = vunpack.c.l.b16 %v968
          %v2526 = vunpack.c.h.b16 %v968
          %v2527 = vunpack.c.l.b16 %v969
          %v2528 = vunpack.c.h.b16 %v969
          %v2529 = vunpack.c.l.b16 %v970
          %v2530 = vunpack.c.h.b16 %v970
          %v2531 = vunpack.c.l.b16 %v971
          %v2532 = vunpack.c.h.b16 %v971
          %v2533 = vunpack.c.l.b16 %v972
          %v2534 = vunpack.c.h.b16 %v972
          %v2535 = vunpack.c.l.b16 %v973
          %v2536 = vunpack.c.h.b16 %v973
          %v2537 = vunpack.c.l.b16 %v974
          %v2538 = vunpack.c.h.b16 %v974
          %v2539 = vunpack.c.l.b16 %v975
          %v2540 = vunpack.c.h.b16 %v975
          %v2541 = vunpack.c.l.b16 %v976
          %v2542 = vunpack.c.h.b16 %v976
          %v2543 = vunpack.c.l.b16 %v977
          %v2544 = vunpack.c.h.b16 %v977
          %v2545 = vunpack.c.l.b16 %v978
          %v2546 = vunpack.c.h.b16 %v978
          %v2547 = vunpack.c.l.b16 %v979
          %v2548 = vunpack.c.h.b16 %v979
          %v2549 = vunpack.c.l.b16 %v980
          %v2550 = vunpack.c.h.b16 %v980
          %v2551 = vunpack.c.l.b16 %v981
          %v2552 = vunpack.c.h.b16 %v981
          %v2553 = vunpack.c.l.b16 %v982
          %v2554 = vunpack.c.h.b16 %v982
          %v2555 = vunpack.c.l.b16 %v983
          %v2556 = vunpack.c.h.b16 %v983
          %v2557 = vunpack.c.l.b16 %v984
          %v2558 = vunpack.c.h.b16 %v984
          %v2559 = vunpack.c.l.b16 %v985
          %v2560 = vunpack.c.h.b16 %v985
          %v2561 = vunpack.c.l.b16 %v986
          %v2562 = vunpack.c.h.b16 %v986
          %v2563 = vunpack.c.l.b16 %v987
          %v2564 = vunpack.c.h.b16 %v987
          %v2565 = vunpack.c.l.b16 %v988
          %v2566 = vunpack.c.h.b16 %v988
          %v2567 = vunpack.c.l.b16 %v989
          %v2568 = vunpack.c.h.b16 %v989
          %v2569 = vunpack.c.l.b16 %v990
          %v2570 = vunpack.c.h.b16 %v990
          %v2571 = vunpack.c.l.b16 %v991
          %v2572 = vunpack.c.h.b16 %v991
          %v2573 = vunpack.c.l.b16 %v992
          %v2574 = vunpack.c.h.b16 %v992
          %v2575 = vunpack.c.l.b16 %v993
          %v2576 = vunpack.c.h.b16 %v993
          %v2577 = vunpack.c.l.b16 %v994
          %v2578 = vunpack.c.h.b16 %v994
          %v2579 = vunpack.c.l.b16 %v995
          %v2580 = vunpack.c.h.b16 %v995
          %v2581 = vunpack.c.l.b16 %v996
          %v2582 = vunpack.c.h.b16 %v996
          %v2583 = vunpack.c.l.b16 %v997
          %v2584 = vunpack.c.h.b16 %v997
          %v2585 = vunpack.c.l.b16 %v998
          %v2586 = vunpack.c.h.b16 %v998
          %v2587 = vunpack.c.l.b16 %v999
          %v2588 = vunpack.c.h.b16 %v999
          %v2589 = vunpack.c.l.b16 %v1000
          %v2590 = vunpack.c.h.b16 %v1000
          %v2591 = vunpack.c.l.b16 %v1001
          %v2592 = vunpack.c.h.b16 %v1001
          %v2593 = vunpack.c.l.b16 %v1002
          %v2594 = vunpack.c.h.b16 %v1002
          %v2595 = vunpack.c.l.b16 %v1003
          %v2596 = vunpack.c.h.b16 %v1003
          %v2597 = vunpack.c.l.b16 %v1004
          %v2598 = vunpack.c.h.b16 %v1004
          %v2599 = vunpack.c.l.b16 %v1005
          %v2600 = vunpack.c.h.b16 %v1005
          %v2601 = vunpack.c.l.b16 %v1006
          %v2602 = vunpack.c.h.b16 %v1006
          %v2603 = vunpack.c.l.b16 %v1007
          %v2604 = vunpack.c.h.b16 %v1007
          %v2605 = vunpack.c.l.b16 %v1008
          %v2606 = vunpack.c.h.b16 %v1008
          %v2607 = vunpack.c.l.b16 %v1009
          %v2608 = vunpack.c.h.b16 %v1009
          %v2609 = vunpack.c.l.b16 %v1010
          %v2610 = vunpack.c.h.b16 %v1010
          %v2611 = vunpack.c.l.b16 %v1011
          %v2612 = vunpack.c.h.b16 %v1011
          %v2613 = vunpack.c.l.b16 %v1012
          %v2614 = vunpack.c.h.b16 %v1012
          %v2615 = vunpack.c.l.b16 %v1013
          %v2616 = vunpack.c.h.b16 %v1013
          %v2617 = vunpack.c.l.b16 %v1014
          %v2618 = vunpack.c.h.b16 %v1014
          %v2619 = vunpack.c.l.b16 %v1015
          %v2620 = vunpack.c.h.b16 %v1015
          %v2621 = vunpack.c.l.b16 %v1016
          %v2622 = vunpack.c.h.b16 %v1016
          %v2623 = vunpack.c.l.b16 %v1017
          %v2624 = vunpack.c.h.b16 %v1017
          %v2625 = vunpack.c.l.b16 %v1018
          %v2626 = vunpack.c.h.b16 %v1018
          %v2627 = vunpack.c.l.b16 %v1019
          %v2628 = vunpack.c.h.b16 %v1019
          %v2629 = vunpack.c.l.b16 %v1020
          %v2630 = vunpack.c.h.b16 %v1020
          %v2631 = vunpack.c.l.b16 %v1021
          %v2632 = vunpack.c.h.b16 %v1021
          %v2633 = vunpack.c.l.b16 %v1022
          %v2634 = vunpack.c.h.b16 %v1022
          %v2635 = vunpack.c.l.b16 %v1023
          %v2636 = vunpack.c.h.b16 %v1023
          %v2637 = vunpack.c.l.b16 %v1024
          %v2638 = vunpack.c.h.b16 %v1024
          %v2639 = vunpack.c.l.b16 %v1025
          %v2640 = vunpack.c.h.b16 %v1025
          %v2641 = vunpack.c.l.b16 %v1026
          %v2642 = vunpack.c.h.b16 %v1026
          %v2643 = vunpack.c.l.b16 %v1027
          %v2644 = vunpack.c.h.b16 %v1027
          %v2645 = vunpack.c.l.b16 %v1028
          %v2646 = vunpack.c.h.b16 %v1028
          %v2647 = vunpack.c.l.b16 %v1029
          %v2648 = vunpack.c.h.b16 %v1029
          %v2649 = vunpack.c.l.b16 %v1030
          %v2650 = vunpack.c.h.b16 %v1030
          %v2651 = vunpack.c.l.b16 %v1031
          %v2652 = vunpack.c.h.b16 %v1031
          %v2653 = vunpack.c.l.b16 %v1032
          %v2654 = vunpack.c.h.b16 %v1032
          %v2655 = vunpack.c.l.b16 %v1033
          %v2656 = vunpack.c.h.b16 %v1033
          %v2657 = vunpack.c.l.b16 %v1034
          %v2658 = vunpack.c.h.b16 %v1034
          %v2659 = vunpack.c.l.b16 %v1035
          %v2660 = vunpack.c.h.b16 %v1035
          %v2661 = vunpack.c.l.b16 %v1036
          %v2662 = vunpack.c.h.b16 %v1036
          %v2663 = vunpack.c.l.b16 %v1037
          %v2664 = vunpack.c.h.b16 %v1037
          %v2665 = vunpack.c.l.b16 %v1038
          %v2666 = vunpack.c.h.b16 %v1038
          %v2667 = vunpack.c.l.b16 %v1039
          %v2668 = vunpack.c.h.b16 %v1039
          %v2669 = vunpack.c.l.b16 %v1040
          %v2670 = vunpack.c.h.b16 %v1040
          %v2671 = vunpack.c.l.b16 %v1041
          %v2672 = vunpack.c.h.b16 %v1041
          %v2673 = vunpack.c.l.b16 %v1042
          %v2674 = vunpack.c.h.b16 %v1042
          %v2675 = vunpack.c.l.b16 %v1043
          %v2676 = vunpack.c.h.b16 %v1043
          %v2677 = vunpack.c.l.b16 %v1044
          %v2678 = vunpack.c.h.b16 %v1044
          %v2679 = vunpack.c.l.b16 %v1045
          %v2680 = vunpack.c.h.b16 %v1045
          %v2681 = vunpack.c.l.b16 %v1046
          %v2682 = vunpack.c.h.b16 %v1046
          %v2683 = vunpack.c.l.b16 %v1047
          %v2684 = vunpack.c.h.b16 %v1047
          %v2685 = vunpack.c.l.b16 %v1048
          %v2686 = vunpack.c.h.b16 %v1048
          %v2687 = vunpack.c.l.b16 %v1049
          %v2688 = vunpack.c.h.b16 %v1049
          %v2689 = vunpack.c.l.b16 %v1050
          %v2690 = vunpack.c.h.b16 %v1050
          %v2691 = vunpack.c.l.b16 %v1051
          %v2692 = vunpack.c.h.b16 %v1051
          %v2693 = vunpack.c.l.b16 %v1052
          %v2694 = vunpack.c.h.b16 %v1052
          %v2695 = vunpack.c.l.b16 %v1053
          %v2696 = vunpack.c.h.b16 %v1053
          %v2697 = vunpack.c.l.b16 %v1054
          %v2698 = vunpack.c.h.b16 %v1054
          %v2699 = vunpack.c.l.b16 %v1055
          %v2700 = vunpack.c.h.b16 %v1055
          %v2701 = vunpack.c.l.b16 %v1056
          %v2702 = vunpack.c.h.b16 %v1056
          %v2703 = vunpack.c.l.b16 %v1057
          %v2704 = vunpack.c.h.b16 %v1057
          %v2705 = vunpack.c.l.b16 %v1058
          %v2706 = vunpack.c.h.b16 %v1058
          %v2707 = vunpack.c.l.b16 %v1059
          %v2708 = vunpack.c.h.b16 %v1059
          %v2709 = vunpack.c.l.b16 %v1060
          %v2710 = vunpack.c.h.b16 %v1060
          %v2711 = vunpack.c.l.b16 %v1061
          %v2712 = vunpack.c.h.b16 %v1061
          %v2713 = vunpack.c.l.b16 %v1062
          %v2714 = vunpack.c.h.b16 %v1062
          %v2715 = vunpack.c.l.b16 %v1063
          %v2716 = vunpack.c.h.b16 %v1063
          %v2717 = vunpack.c.l.b16 %v1064
          %v2718 = vunpack.c.h.b16 %v1064
          %v2719 = vunpack.c.l.b16 %v1065
          %v2720 = vunpack.c.h.b16 %v1065
          %v2721 = vunpack.c.l.b16 %v1066
          %v2722 = vunpack.c.h.b16 %v1066
          %v2723 = vunpack.c.l.b16 %v1067
          %v2724 = vunpack.c.h.b16 %v1067
          %v2725 = vunpack.c.l.b16 %v1068
          %v2726 = vunpack.c.h.b16 %v1068
          %v2727 = vunpack.c.l.b16 %v1069
          %v2728 = vunpack.c.h.b16 %v1069
          %v2729 = vunpack.c.l.b16 %v1070
          %v2730 = vunpack.c.h.b16 %v1070
          %v2731 = vunpack.c.l.b16 %v1071
          %v2732 = vunpack.c.h.b16 %v1071
          %v2733 = vunpack.c.l.b16 %v1072
          %v2734 = vunpack.c.h.b16 %v1072
          %v2735 = vunpack.c.l.b16 %v1073
          %v2736 = vunpack.c.h.b16 %v1073
          %v2737 = vunpack.c.l.b16 %v1074
          %v2738 = vunpack.c.h.b16 %v1074
          %v2739 = vunpack.c.l.b16 %v1075
          %v2740 = vunpack.c.h.b16 %v1075
          %v2741 = vunpack.c.l.b16 %v1076
          %v2742 = vunpack.c.h.b16 %v1076
          %v2743 = vunpack.c.l.b16 %v1077
          %v2744 = vunpack.c.h.b16 %v1077
          %v2745 = vunpack.c.l.b16 %v1078
          %v2746 = vunpack.c.h.b16 %v1078
          %v2747 = vunpack.c.l.b16 %v1079
          %v2748 = vunpack.c.h.b16 %v1079
          %v2749 = vunpack.c.l.b16 %v1080
          %v2750 = vunpack.c.h.b16 %v1080
          %v2751 = vunpack.c.l.b16 %v1081
          %v2752 = vunpack.c.h.b16 %v1081
          %v2753 = vunpack.c.l.b16 %v1082
          %v2754 = vunpack.c.h.b16 %v1082
          %v2755 = vunpack.c.l.b16 %v1083
          %v2756 = vunpack.c.h.b16 %v1083
          %v2757 = vunpack.c.l.b16 %v1084
          %v2758 = vunpack.c.h.b16 %v1084
          %v2759 = vunpack.c.l.b16 %v1085
          %v2760 = vunpack.c.h.b16 %v1085
          %v2761 = vunpack.c.l.b16 %v1086
          %v2762 = vunpack.c.h.b16 %v1086
          %v2763 = vunpack.c.l.b16 %v1087
          %v2764 = vunpack.c.h.b16 %v1087
          %v2765 = vunpack.c.l.b16 %v1088
          %v2766 = vunpack.c.h.b16 %v1088
          %v2767 = vunpack.c.l.b16 %v1089
          %v2768 = vunpack.c.h.b16 %v1089
          %v2769 = vunpack.c.l.b16 %v1090
          %v2770 = vunpack.c.h.b16 %v1090
          %v2771 = vunpack.c.l.b16 %v1091
          %v2772 = vunpack.c.h.b16 %v1091
          %v2773 = vunpack.c.l.b16 %v1092
          %v2774 = vunpack.c.h.b16 %v1092
          %v2775 = vunpack.c.l.b16 %v1093
          %v2776 = vunpack.c.h.b16 %v1093
          %v2777 = vunpack.c.l.b16 %v1094
          %v2778 = vunpack.c.h.b16 %v1094
          %v2779 = vunpack.c.l.b16 %v1095
          %v2780 = vunpack.c.h.b16 %v1095
          %v2781 = vunpack.c.l.b16 %v1096
          %v2782 = vunpack.c.h.b16 %v1096
          %v2783 = vunpack.c.l.b16 %v1097
          %v2784 = vunpack.c.h.b16 %v1097
          %v2785 = vunpack.c.l.b16 %v1098
          %v2786 = vunpack.c.h.b16 %v1098
          %v2787 = vunpack.c.l.b16 %v1099
          %v2788 = vunpack.c.h.b16 %v1099
          %v2789 = vunpack.c.l.b16 %v1100
          %v2790 = vunpack.c.h.b16 %v1100
          %v2791 = vunpack.c.l.b16 %v1101
          %v2792 = vunpack.c.h.b16 %v1101
          %v2793 = vunpack.c.l.b16 %v1102
          %v2794 = vunpack.c.h.b16 %v1102
          %v2795 = vunpack.c.l.b16 %v1103
          %v2796 = vunpack.c.h.b16 %v1103
          %v2797 = vunpack.c.l.b16 %v1104
          %v2798 = vunpack.c.h.b16 %v1104
          %v2799 = vunpack.c.l.b16 %v1105
          %v2800 = vunpack.c.h.b16 %v1105
          %v2801 = vunpack.c.l.b16 %v1106
          %v2802 = vunpack.c.h.b16 %v1106
          %v2803 = vunpack.c.l.b16 %v1107
          %v2804 = vunpack.c.h.b16 %v1107
          %v2805 = vunpack.c.l.b16 %v1108
          %v2806 = vunpack.c.h.b16 %v1108
          %v2807 = vunpack.c.l.b16 %v1109
          %v2808 = vunpack.c.h.b16 %v1109
          %v2809 = vunpack.c.l.b16 %v1110
          %v2810 = vunpack.c.h.b16 %v1110
          %v2811 = vunpack.c.l.b16 %v1111
          %v2812 = vunpack.c.h.b16 %v1111
          %v2813 = vunpack.c.l.b16 %v1112
          %v2814 = vunpack.c.h.b16 %v1112
          %v2815 = vunpack.c.l.b16 %v1113
          %v2816 = vunpack.c.h.b16 %v1113
          %v2817 = vunpack.c.l.b16 %v1114
          %v2818 = vunpack.c.h.b16 %v1114
          %v2819 = vunpack.c.l.b16 %v1115
          %v2820 = vunpack.c.h.b16 %v1115
          %v2821 = vunpack.c.l.b16 %v1116
          %v2822 = vunpack.c.h.b16 %v1116
          %v2823 = vunpack.c.l.b16 %v1117
          %v2824 = vunpack.c.h.b16 %v1117
          %v2825 = vunpack.c.l.b16 %v1118
          %v2826 = vunpack.c.h.b16 %v1118
          %v2827 = vunpack.c.l.b16 %v1119
          %v2828 = vunpack.c.h.b16 %v1119
          %v2829 = vunpack.c.l.b16 %v1120
          %v2830 = vunpack.c.h.b16 %v1120
          %v2831 = vunpack.c.l.b16 %v1121
          %v2832 = vunpack.c.h.b16 %v1121
          %v2833 = vunpack.c.l.b16 %v1122
          %v2834 = vunpack.c.h.b16 %v1122
          %v2835 = vunpack.c.l.b16 %v1123
          %v2836 = vunpack.c.h.b16 %v1123
          %v2837 = vunpack.c.l.b16 %v1124
          %v2838 = vunpack.c.h.b16 %v1124
          %v2839 = vunpack.c.l.b16 %v1125
          %v2840 = vunpack.c.h.b16 %v1125
          %v2841 = vunpack.c.l.b16 %v1126
          %v2842 = vunpack.c.h.b16 %v1126
          %v2843 = vunpack.c.l.b16 %v1127
          %v2844 = vunpack.c.h.b16 %v1127
          %v2845 = vunpack.c.l.b16 %v1128
          %v2846 = vunpack.c.h.b16 %v1128
          %v2847 = vunpack.c.l.b16 %v1129
          %v2848 = vunpack.c.h.b16 %v1129
          %v2849 = vunpack.c.l.b16 %v1130
          %v2850 = vunpack.c.h.b16 %v1130
          %v2851 = vunpack.c.l.b16 %v1131
          %v2852 = vunpack.c.h.b16 %v1131
          %v2853 = vunpack.c.l.b16 %v1132
          %v2854 = vunpack.c.h.b16 %v1132
          %v2855 = vunpack.c.l.b16 %v1133
          %v2856 = vunpack.c.h.b16 %v1133
          %v2857 = vunpack.c.l.b16 %v1134
          %v2858 = vunpack.c.h.b16 %v1134
          %v2859 = vunpack.c.l.b16 %v1135
          %v2860 = vunpack.c.h.b16 %v1135
          %v2861 = vunpack.c.l.b16 %v1136
          %v2862 = vunpack.c.h.b16 %v1136
          %v2863 = vunpack.c.l.b16 %v1137
          %v2864 = vunpack.c.h.b16 %v1137
          %v2865 = vunpack.c.l.b16 %v1138
          %v2866 = vunpack.c.h.b16 %v1138
          %v2867 = vunpack.c.l.b16 %v1139
          %v2868 = vunpack.c.h.b16 %v1139
          %v2869 = vunpack.c.l.b16 %v1140
          %v2870 = vunpack.c.h.b16 %v1140
          %v2871 = vunpack.c.l.b16 %v1141
          %v2872 = vunpack.c.h.b16 %v1141
          %v2873 = vunpack.c.l.b16 %v1142
          %v2874 = vunpack.c.h.b16 %v1142
          %v2875 = vunpack.c.l.b16 %v1143
          %v2876 = vunpack.c.h.b16 %v1143
          %v2877 = vunpack.c.l.b16 %v1144
          %v2878 = vunpack.c.h.b16 %v1144
          %v2879 = vunpack.c.l.b16 %v1145
          %v2880 = vunpack.c.h.b16 %v1145
          %v2881 = vunpack.c.l.b16 %v1146
          %v2882 = vunpack.c.h.b16 %v1146
          %v2883 = vunpack.c.l.b16 %v1147
          %v2884 = vunpack.c.h.b16 %v1147
          %v2885 = vunpack.c.l.b16 %v1148
          %v2886 = vunpack.c.h.b16 %v1148
          %v2887 = vunpack.c.l.b16 %v1149
          %v2888 = vunpack.c.h.b16 %v1149
          %v2889 = vunpack.c.l.b16 %v1150
          %v2890 = vunpack.c.h.b16 %v1150
          %v2891 = vunpack.c.l.b16 %v1151
          %v2892 = vunpack.c.h.b16 %v1151
          %v2893 = vunpack.c.l.b16 %v1152
          %v2894 = vunpack.c.h.b16 %v1152
          %v2895 = vunpack.c.l.b16 %v1153
          %v2896 = vunpack.c.h.b16 %v1153
          %v2897 = vunpack.c.l.b16 %v1154
          %v2898 = vunpack.c.h.b16 %v1154
          %v2899 = vunpack.c.l.b16 %v1155
          %v2900 = vunpack.c.h.b16 %v1155
          %v2901 = vunpack.c.l.b16 %v1156
          %v2902 = vunpack.c.h.b16 %v1156
          %v2903 = vunpack.c.l.b16 %v1157
          %v2904 = vunpack.c.h.b16 %v1157
          %v2905 = vunpack.c.l.b16 %v1158
          %v2906 = vunpack.c.h.b16 %v1158
          %v2907 = vunpack.c.l.b16 %v1159
          %v2908 = vunpack.c.h.b16 %v1159
          %v2909 = vunpack.c.l.b16 %v1160
          %v2910 = vunpack.c.h.b16 %v1160
          %v2911 = vunpack.c.l.b16 %v1161
          %v2912 = vunpack.c.h.b16 %v1161
          %v2913 = vunpack.c.l.b16 %v1162
          %v2914 = vunpack.c.h.b16 %v1162
          %v2915 = vunpack.c.l.b16 %v1163
          %v2916 = vunpack.c.h.b16 %v1163
          %v2917 = vunpack.c.l.b16 %v1164
          %v2918 = vunpack.c.h.b16 %v1164
          %v2919 = vunpack.c.l.b16 %v1165
          %v2920 = vunpack.c.h.b16 %v1165
          %v2921 = vunpack.c.l.b16 %v1166
          %v2922 = vunpack.c.h.b16 %v1166
          %v2923 = vunpack.c.l.b16 %v1167
          %v2924 = vunpack.c.h.b16 %v1167
          %v2925 = vunpack.c.l.b16 %v1168
          %v2926 = vunpack.c.h.b16 %v1168
          %v2927 = vunpack.c.l.b16 %v1169
          %v2928 = vunpack.c.h.b16 %v1169
          %v2929 = vunpack.c.l.b16 %v1170
          %v2930 = vunpack.c.h.b16 %v1170
          %v2931 = vunpack.c.l.b16 %v1171
          %v2932 = vunpack.c.h.b16 %v1171
          %v2933 = vunpack.c.l.b16 %v1172
          %v2934 = vunpack.c.h.b16 %v1172
          %v2935 = vunpack.c.l.b16 %v1173
          %v2936 = vunpack.c.h.b16 %v1173
          %v2937 = vunpack.c.l.b16 %v1174
          %v2938 = vunpack.c.h.b16 %v1174
          %v2939 = vunpack.c.l.b16 %v1175
          %v2940 = vunpack.c.h.b16 %v1175
          %v2941 = vunpack.c.l.b16 %v1176
          %v2942 = vunpack.c.h.b16 %v1176
          %v2943 = vunpack.c.l.b16 %v1177
          %v2944 = vunpack.c.h.b16 %v1177
          %v2945 = vunpack.c.l.b16 %v1178
          %v2946 = vunpack.c.h.b16 %v1178
          %v2947 = vunpack.c.l.b16 %v1179
          %v2948 = vunpack.c.h.b16 %v1179
          %v2949 = vunpack.c.l.b16 %v1180
          %v2950 = vunpack.c.h.b16 %v1180
          %v2951 = vunpack.c.l.b16 %v1181
          %v2952 = vunpack.c.h.b16 %v1181
          %v2953 = vunpack.c.l.b16 %v1182
          %v2954 = vunpack.c.h.b16 %v1182
          %v2955 = vunpack.c.l.b16 %v1183
          %v2956 = vunpack.c.h.b16 %v1183
          %v2957 = vunpack.c.l.b16 %v1184
          %v2958 = vunpack.c.h.b16 %v1184
          %v2959 = vunpack.c.l.b16 %v1185
          %v2960 = vunpack.c.h.b16 %v1185
          %v2961 = vunpack.c.l.b16 %v1186
          %v2962 = vunpack.c.h.b16 %v1186
          %v2963 = vunpack.c.l.b16 %v1187
          %v2964 = vunpack.c.h.b16 %v1187
          %v2965 = vunpack.c.l.b16 %v1188
          %v2966 = vunpack.c.h.b16 %v1188
          %v2967 = vunpack.c.l.b16 %v1189
          %v2968 = vunpack.c.h.b16 %v1189
          %v2969 = vunpack.c.l.b16 %v1190
          %v2970 = vunpack.c.h.b16 %v1190
          %v2971 = vunpack.c.l.b16 %v1191
          %v2972 = vunpack.c.h.b16 %v1191
          %v2973 = vunpack.c.l.b16 %v1192
          %v2974 = vunpack.c.h.b16 %v1192
          %v2975 = vunpack.c.l.b16 %v1193
          %v2976 = vunpack.c.h.b16 %v1193
          %v2977 = vunpack.c.l.b16 %v1194
          %v2978 = vunpack.c.h.b16 %v1194
          %v2979 = vunpack.c.l.b16 %v1195
          %v2980 = vunpack.c.h.b16 %v1195
          %v2981 = vunpack.c.l.b16 %v1196
          %v2982 = vunpack.c.h.b16 %v1196
          %v2983 = vunpack.c.l.b16 %v1197
          %v2984 = vunpack.c.h.b16 %v1197
          %v2985 = vunpack.c.l.b16 %v1198
          %v2986 = vunpack.c.h.b16 %v1198
          %v2987 = vunpack.c.l.b16 %v1199
          %v2988 = vunpack.c.h.b16 %v1199
          %v2989 = vunpack.c.l.b16 %v1200
          %v2990 = vunpack.c.h.b16 %v1200
          %v2991 = vunpack.c.l.b16 %v1201
          %v2992 = vunpack.c.h.b16 %v1201
          %v2993 = vunpack.c.l.b16 %v1202
          %v2994 = vunpack.c.h.b16 %v1202
          %v2995 = vunpack.c.l.b16 %v1203
          %v2996 = vunpack.c.h.b16 %v1203
          %v2997 = vunpack.c.l.b16 %v1204
          %v2998 = vunpack.c.h.b16 %v1204
          %v2999 = vunpack.c.l.b16 %v1205
          %v3000 = vunpack.c.h.b16 %v1205
          %v3001 = vunpack.c.l.b16 %v1206
          %v3002 = vunpack.c.h.b16 %v1206
          %v3003 = vunpack.c.l.b16 %v1207
          %v3004 = vunpack.c.h.b16 %v1207
          %v3005 = vunpack.c.l.b16 %v1208
          %v3006 = vunpack.c.h.b16 %v1208
          %v3007 = vunpack.c.l.b16 %v1209
          %v3008 = vunpack.c.h.b16 %v1209
          %v3009 = vunpack.c.l.b16 %v1210
          %v3010 = vunpack.c.h.b16 %v1210
          %v3011 = vunpack.c.l.b16 %v1211
          %v3012 = vunpack.c.h.b16 %v1211
          %v3013 = vunpack.c.l.b16 %v1212
          %v3014 = vunpack.c.h.b16 %v1212
          %v3015 = vunpack.c.l.b16 %v1213
          %v3016 = vunpack.c.h.b16 %v1213
          %v3017 = vunpack.c.l.b16 %v1214
          %v3018 = vunpack.c.h.b16 %v1214
          %v3019 = vunpack.c.l.b16 %v1215
          %v3020 = vunpack.c.h.b16 %v1215
          %v3021 = vunpack.c.l.b16 %v1216
          %v3022 = vunpack.c.h.b16 %v1216
          %v3023 = vunpack.c.l.b16 %v1217
          %v3024 = vunpack.c.h.b16 %v1217
          %v3025 = vunpack.c.l.b16 %v1218
          %v3026 = vunpack.c.h.b16 %v1218
          %v3027 = vunpack.c.l.b16 %v1219
          %v3028 = vunpack.c.h.b16 %v1219
          %v3029 = vunpack.c.l.b16 %v1220
          %v3030 = vunpack.c.h.b16 %v1220
          %v3031 = vunpack.c.l.b16 %v1221
          %v3032 = vunpack.c.h.b16 %v1221
          %v3033 = vunpack.c.l.b16 %v1222
          %v3034 = vunpack.c.h.b16 %v1222
          %v3035 = vunpack.c.l.b16 %v1223
          %v3036 = vunpack.c.h.b16 %v1223
          %v3037 = vunpack.c.l.b16 %v1224
          %v3038 = vunpack.c.h.b16 %v1224
          %v3039 = vunpack.c.l.b16 %v1225
          %v3040 = vunpack.c.h.b16 %v1225
          %v3041 = vunpack.c.l.b16 %v1226
          %v3042 = vunpack.c.h.b16 %v1226
          %v3043 = vunpack.c.l.b16 %v1227
          %v3044 = vunpack.c.h.b16 %v1227
          %v3045 = vunpack.c.l.b16 %v1228
          %v3046 = vunpack.c.h.b16 %v1228
          %v3047 = vunpack.c.l.b16 %v1229
          %v3048 = vunpack.c.h.b16 %v1229
          %v3049 = vunpack.c.l.b16 %v1230
          %v3050 = vunpack.c.h.b16 %v1230
          %v3051 = vunpack.c.l.b16 %v1231
          %v3052 = vunpack.c.h.b16 %v1231
          %v3053 = vunpack.c.l.b16 %v1232
          %v3054 = vunpack.c.h.b16 %v1232
          %v3055 = vunpack.c.l.b16 %v1233
          %v3056 = vunpack.c.h.b16 %v1233
          %v3057 = vunpack.c.l.b16 %v1234
          %v3058 = vunpack.c.h.b16 %v1234
          %v3059 = vunpack.c.l.b16 %v1235
          %v3060 = vunpack.c.h.b16 %v1235
          %v3061 = vunpack.c.l.b16 %v1236
          %v3062 = vunpack.c.h.b16 %v1236
          %v3063 = vunpack.c.l.b16 %v1237
          %v3064 = vunpack.c.h.b16 %v1237
          %v3065 = vunpack.c.l.b16 %v1238
          %v3066 = vunpack.c.h.b16 %v1238
          %v3067 = vunpack.c.l.b16 %v1239
          %v3068 = vunpack.c.h.b16 %v1239
          %v3069 = vunpack.c.l.b16 %v1240
          %v3070 = vunpack.c.h.b16 %v1240
          %v3071 = vunpack.c.l.b16 %v1241
          %v3072 = vunpack.c.h.b16 %v1241
          %v3073 = vunpack.c.l.b16 %v1242
          %v3074 = vunpack.c.h.b16 %v1242
          %v3075 = vunpack.c.l.b16 %v1243
          %v3076 = vunpack.c.h.b16 %v1243
          %v3077 = vunpack.c.l.b16 %v1244
          %v3078 = vunpack.c.h.b16 %v1244
          %v3079 = vunpack.c.l.b16 %v1245
          %v3080 = vunpack.c.h.b16 %v1245
          %v3081 = vunpack.c.l.b16 %v1246
          %v3082 = vunpack.c.h.b16 %v1246
          %v3083 = vunpack.c.l.b16 %v1247
          %v3084 = vunpack.c.h.b16 %v1247
          %v3085 = vunpack.c.l.b16 %v1248
          %v3086 = vunpack.c.h.b16 %v1248
          %v3087 = vunpack.c.l.b16 %v1249
          %v3088 = vunpack.c.h.b16 %v1249
          %v3089 = vunpack.c.l.b16 %v1250
          %v3090 = vunpack.c.h.b16 %v1250
          %v3091 = vunpack.c.l.b16 %v1251
          %v3092 = vunpack.c.h.b16 %v1251
          %v3093 = vunpack.c.l.b16 %v1252
          %v3094 = vunpack.c.h.b16 %v1252
          %v3095 = vunpack.c.l.b16 %v1253
          %v3096 = vunpack.c.h.b16 %v1253
          %v3097 = vunpack.c.l.b16 %v1254
          %v3098 = vunpack.c.h.b16 %v1254
          %v3099 = vunpack.c.l.b16 %v1255
          %v3100 = vunpack.c.h.b16 %v1255
          %v3101 = vunpack.c.l.b16 %v1256
          %v3102 = vunpack.c.h.b16 %v1256
          %v3103 = vunpack.c.l.b16 %v1257
          %v3104 = vunpack.c.h.b16 %v1257
          %v3105 = vunpack.c.l.b16 %v1258
          %v3106 = vunpack.c.h.b16 %v1258
          %v3107 = vunpack.c.l.b16 %v1259
          %v3108 = vunpack.c.h.b16 %v1259
          %v3109 = vunpack.c.l.b16 %v1260
          %v3110 = vunpack.c.h.b16 %v1260
          %v3111 = vunpack.c.l.b16 %v1261
          %v3112 = vunpack.c.h.b16 %v1261
          %v3113 = vunpack.c.l.b16 %v1262
          %v3114 = vunpack.c.h.b16 %v1262
          %v3115 = vunpack.c.l.b16 %v1263
          %v3116 = vunpack.c.h.b16 %v1263
          %v3117 = vunpack.c.l.b16 %v1264
          %v3118 = vunpack.c.h.b16 %v1264
          %v3119 = vunpack.c.l.b16 %v1265
          %v3120 = vunpack.c.h.b16 %v1265
          %v3121 = vunpack.c.l.b16 %v1266
          %v3122 = vunpack.c.h.b16 %v1266
          %v3123 = vunpack.c.l.b16 %v1267
          %v3124 = vunpack.c.h.b16 %v1267
          %v3125 = vunpack.c.l.b16 %v1268
          %v3126 = vunpack.c.h.b16 %v1268
          %v3127 = vunpack.c.l.b16 %v1269
          %v3128 = vunpack.c.h.b16 %v1269
          %v3129 = vunpack.c.l.b16 %v1270
          %v3130 = vunpack.c.h.b16 %v1270
          %v3131 = vunpack.c.l.b16 %v1271
          %v3132 = vunpack.c.h.b16 %v1271
          %v3133 = vunpack.c.l.b16 %v1272
          %v3134 = vunpack.c.h.b16 %v1272
          %v3135 = vunpack.c.l.b16 %v1273
          %v3136 = vunpack.c.h.b16 %v1273
          %v3137 = vunpack.c.l.b16 %v1274
          %v3138 = vunpack.c.h.b16 %v1274
          %v3139 = vunpack.c.l.b16 %v1275
          %v3140 = vunpack.c.h.b16 %v1275
          %v3141 = vunpack.c.l.b16 %v1276
          %v3142 = vunpack.c.h.b16 %v1276
          %v3143 = vunpack.c.l.b16 %v1277
          %v3144 = vunpack.c.h.b16 %v1277
          %v3145 = vunpack.c.l.b16 %v1278
          %v3146 = vunpack.c.h.b16 %v1278
          %v3147 = vunpack.c.l.b16 %v1279
          %v3148 = vunpack.c.h.b16 %v1279
          %v3149 = vunpack.c.l.b16 %v1280
          %v3150 = vunpack.c.h.b16 %v1280
          %v3151 = vunpack.c.l.b16 %v1281
          %v3152 = vunpack.c.h.b16 %v1281
          %v3153 = vunpack.c.l.b16 %v1282
          %v3154 = vunpack.c.h.b16 %v1282
          %v3155 = vunpack.c.l.b16 %v1283
          %v3156 = vunpack.c.h.b16 %v1283
          %v3157 = vunpack.c.l.b16 %v1284
          %v3158 = vunpack.c.h.b16 %v1284
          %v3159 = vunpack.c.l.b16 %v1285
          %v3160 = vunpack.c.h.b16 %v1285
          %v3161 = vunpack.c.l.b16 %v1286
          %v3162 = vunpack.c.h.b16 %v1286
          %v3163 = vunpack.c.l.b16 %v1287
          %v3164 = vunpack.c.h.b16 %v1287
          %v3165 = vunpack.c.l.b16 %v1288
          %v3166 = vunpack.c.h.b16 %v1288
          %v3167 = vunpack.c.l.b16 %v1289
          %v3168 = vunpack.c.h.b16 %v1289
          %v3169 = vunpack.c.l.b16 %v1290
          %v3170 = vunpack.c.h.b16 %v1290
          %v3171 = vunpack.c.l.b16 %v1291
          %v3172 = vunpack.c.h.b16 %v1291
          %v3173 = vunpack.c.l.b16 %v1292
          %v3174 = vunpack.c.h.b16 %v1292
          %v3175 = vunpack.c.l.b16 %v1293
          %v3176 = vunpack.c.h.b16 %v1293
          %v3177 = vunpack.c.l.b16 %v1294
          %v3178 = vunpack.c.h.b16 %v1294
          %v3179 = vunpack.c.l.b16 %v1295
          %v3180 = vunpack.c.h.b16 %v1295
          %v3181 = vunpack.c.l.b16 %v1296
          %v3182 = vunpack.c.h.b16 %v1296
          %v3183 = vunpack.c.l.b16 %v1297
          %v3184 = vunpack.c.h.b16 %v1297
          %v3185 = vunpack.c.l.b16 %v1298
          %v3186 = vunpack.c.h.b16 %v1298
          %v3187 = vunpack.c.l.b16 %v1299
          %v3188 = vunpack.c.h.b16 %v1299
          %v3189 = vunpack.c.l.b16 %v1300
          %v3190 = vunpack.c.h.b16 %v1300
          %v3191 = vunpack.c.l.b16 %v1301
          %v3192 = vunpack.c.h.b16 %v1301
          %v3193 = vunpack.c.l.b16 %v1302
          %v3194 = vunpack.c.h.b16 %v1302
          %v3195 = vunpack.c.l.b16 %v1303
          %v3196 = vunpack.c.h.b16 %v1303
          %v3197 = vunpack.c.l.b16 %v1304
          %v3198 = vunpack.c.h.b16 %v1304
          %v3199 = vunpack.c.l.b16 %v1305
          %v3200 = vunpack.c.h.b16 %v1305
          %v3201 = vunpack.c.l.b16 %v1306
          %v3202 = vunpack.c.h.b16 %v1306
          %v3203 = vunpack.c.l.b16 %v1307
          %v3204 = vunpack.c.h.b16 %v1307
          %v3205 = vunpack.c.l.b16 %v1308
          %v3206 = vunpack.c.h.b16 %v1308
          %v3207 = vunpack.c.l.b16 %v1309
          %v3208 = vunpack.c.h.b16 %v1309
          %v3209 = vunpack.c.l.b16 %v1310
          %v3210 = vunpack.c.h.b16 %v1310
          %v3211 = vunpack.c.l.b16 %v1311
          %v3212 = vunpack.c.h.b16 %v1311
          %v3213 = vunpack.c.l.b16 %v1312
          %v3214 = vunpack.c.h.b16 %v1312
          %v3215 = vunpack.c.l.b16 %v1313
          %v3216 = vunpack.c.h.b16 %v1313
          %v3217 = vunpack.c.l.b16 %v1314
          %v3218 = vunpack.c.h.b16 %v1314
          %v3219 = vunpack.c.l.b16 %v1315
          %v3220 = vunpack.c.h.b16 %v1315
          %v3221 = vunpack.c.l.b16 %v1316
          %v3222 = vunpack.c.h.b16 %v1316
          %v3223 = vunpack.c.l.b16 %v1317
          %v3224 = vunpack.c.h.b16 %v1317
          %v3225 = vunpack.c.l.b16 %v1318
          %v3226 = vunpack.c.h.b16 %v1318
          %v3227 = vunpack.c.l.b16 %v1319
          %v3228 = vunpack.c.h.b16 %v1319
          %v3229 = vunpack.c.l.b16 %v1320
          %v3230 = vunpack.c.h.b16 %v1320
          %v3231 = vunpack.c.l.b16 %v1321
          %v3232 = vunpack.c.h.b16 %v1321
          %v3233 = vunpack.c.l.b16 %v1322
          %v3234 = vunpack.c.h.b16 %v1322
          %v3235 = vunpack.c.l.b16 %v1323
          %v3236 = vunpack.c.h.b16 %v1323
          %v3237 = vunpack.c.l.b16 %v1324
          %v3238 = vunpack.c.h.b16 %v1324
          %v3239 = vunpack.c.l.b16 %v1325
          %v3240 = vunpack.c.h.b16 %v1325
          %v3241 = vunpack.c.l.b16 %v1326
          %v3242 = vunpack.c.h.b16 %v1326
          %v3243 = vunpack.c.l.b16 %v1327
          %v3244 = vunpack.c.h.b16 %v1327
          %v3245 = vunpack.c.l.b16 %v1328
          %v3246 = vunpack.c.h.b16 %v1328
          %v3247 = vunpack.c.l.b16 %v1329
          %v3248 = vunpack.c.h.b16 %v1329
          %v3249 = vunpack.c.l.b16 %v1330
          %v3250 = vunpack.c.h.b16 %v1330
          %v3251 = vunpack.c.l.b16 %v1331
          %v3252 = vunpack.c.h.b16 %v1331
          %v3253 = vunpack.c.l.b16 %v1332
          %v3254 = vunpack.c.h.b16 %v1332
          %v3255 = vunpack.c.l.b16 %v1333
          %v3256 = vunpack.c.h.b16 %v1333
          %v3257 = vunpack.c.l.b16 %v1334
          %v3258 = vunpack.c.h.b16 %v1334
          %v3259 = vunpack.c.l.b16 %v1335
          %v3260 = vunpack.c.h.b16 %v1335
          %v3261 = vunpack.c.l.b16 %v1336
          %v3262 = vunpack.c.h.b16 %v1336
          %v3263 = vunpack.c.l.b16 %v1337
          %v3264 = vunpack.c.h.b16 %v1337
          %v3265 = vunpack.c.l.b16 %v1338
          %v3266 = vunpack.c.h.b16 %v1338
          %v3267 = vunpack.c.l.b16 %v1339
          %v3268 = vunpack.c.h.b16 %v1339
          %v3269 = vunpack.c.l.b16 %v1340
          %v3270 = vunpack.c.h.b16 %v1340
          %v3271 = vunpack.c.l.b16 %v1341
          %v3272 = vunpack.c.h.b16 %v1341
          %v3273 = vunpack.c.l.b16 %v1342
          %v3274 = vunpack.c.h.b16 %v1342
          %v3275 = vunpack.c.l.b16 %v1343
          %v3276 = vunpack.c.h.b16 %v1343
          %v3277 = vunpack.c.l.b16 %v1344
          %v3278 = vunpack.c.h.b16 %v1344
          %v3279 = vunpack.c.l.b16 %v1345
          %v3280 = vunpack.c.h.b16 %v1345
          %v3281 = vunpack.c.l.b16 %v1346
          %v3282 = vunpack.c.h.b16 %v1346
          %v3283 = vunpack.c.l.b16 %v1347
          %v3284 = vunpack.c.h.b16 %v1347
          %v3285 = vunpack.c.l.b16 %v1348
          %v3286 = vunpack.c.h.b16 %v1348
          %v3287 = vunpack.c.l.b16 %v1349
          %v3288 = vunpack.c.h.b16 %v1349
          %v3289 = vunpack.c.l.b16 %v1350
          %v3290 = vunpack.c.h.b16 %v1350
          %v3291 = vunpack.c.l.b16 %v1351
          %v3292 = vunpack.c.h.b16 %v1351
          %v3293 = vunpack.c.l.b16 %v1352
          %v3294 = vunpack.c.h.b16 %v1352
          %v3295 = vunpack.c.l.b16 %v1353
          %v3296 = vunpack.c.h.b16 %v1353
          %v3297 = vunpack.c.l.b16 %v1354
          %v3298 = vunpack.c.h.b16 %v1354
          %v3299 = vunpack.c.l.b16 %v1355
          %v3300 = vunpack.c.h.b16 %v1355
          %v3301 = vunpack.c.l.b16 %v1356
          %v3302 = vunpack.c.h.b16 %v1356
          %v3303 = vunpack.c.l.b16 %v1357
          %v3304 = vunpack.c.h.b16 %v1357
          %v3305 = vunpack.c.l.b16 %v1358
          %v3306 = vunpack.c.h.b16 %v1358
          %v3307 = vunpack.c.l.b16 %v1359
          %v3308 = vunpack.c.h.b16 %v1359
          %v3309 = vunpack.c.l.b16 %v1360
          %v3310 = vunpack.c.h.b16 %v1360
          %v3311 = vunpack.c.l.b16 %v1361
          %v3312 = vunpack.c.h.b16 %v1361
          %v3313 = vunpack.c.l.b16 %v1362
          %v3314 = vunpack.c.h.b16 %v1362
          %v3315 = vunpack.c.l.b16 %v1363
          %v3316 = vunpack.c.h.b16 %v1363
          %v3317 = vunpack.c.l.b16 %v1364
          %v3318 = vunpack.c.h.b16 %v1364
          %v3319 = vunpack.c.l.b16 %v1365
          %v3320 = vunpack.c.h.b16 %v1365
          %v3321 = vunpack.c.l.b16 %v1366
          %v3322 = vunpack.c.h.b16 %v1366
          %v3323 = vunpack.c.l.b16 %v1367
          %v3324 = vunpack.c.h.b16 %v1367
          %v3325 = vunpack.c.l.b16 %v1368
          %v3326 = vunpack.c.h.b16 %v1368
          %v3327 = vunpack.c.l.b16 %v1369
          %v3328 = vunpack.c.h.b16 %v1369
          %v3329 = vunpack.c.l.b16 %v1370
          %v3330 = vunpack.c.h.b16 %v1370
          %v3331 = vunpack.c.l.b16 %v1371
          %v3332 = vunpack.c.h.b16 %v1371
          %v3333 = vunpack.c.l.b16 %v1372
          %v3334 = vunpack.c.h.b16 %v1372
          %v3335 = vunpack.c.l.b16 %v1373
          %v3336 = vunpack.c.h.b16 %v1373
          %v3337 = vunpack.c.l.b16 %v1374
          %v3338 = vunpack.c.h.b16 %v1374
          %v3339 = vunpack.c.l.b16 %v1375
          %v3340 = vunpack.c.h.b16 %v1375
          %v3341 = vunpack.c.l.b16 %v1376
          %v3342 = vunpack.c.h.b16 %v1376
          %v3343 = vunpack.c.l.b16 %v1377
          %v3344 = vunpack.c.h.b16 %v1377
          %v3345 = vunpack.c.l.b16 %v1378
          %v3346 = vunpack.c.h.b16 %v1378
          %v3347 = vunpack.c.l.b16 %v1379
          %v3348 = vunpack.c.h.b16 %v1379
          %v3349 = vunpack.c.l.b16 %v1380
          %v3350 = vunpack.c.h.b16 %v1380
          %v3351 = vunpack.c.l.b16 %v1381
          %v3352 = vunpack.c.h.b16 %v1381
          %v3353 = vunpack.c.l.b16 %v1382
          %v3354 = vunpack.c.h.b16 %v1382
          %v3355 = vunpack.c.l.b16 %v1383
          %v3356 = vunpack.c.h.b16 %v1383
          %v3357 = vunpack.c.l.b16 %v1384
          %v3358 = vunpack.c.h.b16 %v1384
          %v3359 = vunpack.c.l.b16 %v1385
          %v3360 = vunpack.c.h.b16 %v1385
          %v3361 = vunpack.c.l.b16 %v1386
          %v3362 = vunpack.c.h.b16 %v1386
          %v3363 = vunpack.c.l.b16 %v1387
          %v3364 = vunpack.c.h.b16 %v1387
          %v3365 = vunpack.c.l.b16 %v1388
          %v3366 = vunpack.c.h.b16 %v1388
          %v3367 = vunpack.c.l.b16 %v1389
          %v3368 = vunpack.c.h.b16 %v1389
          %v3369 = vunpack.c.l.b16 %v1390
          %v3370 = vunpack.c.h.b16 %v1390
          %v3371 = vunpack.c.l.b16 %v1391
          %v3372 = vunpack.c.h.b16 %v1391
          %v3373 = vunpack.c.l.b16 %v1392
          %v3374 = vunpack.c.h.b16 %v1392
          %v3375 = vunpack.c.l.b16 %v1393
          %v3376 = vunpack.c.h.b16 %v1393
          %v3377 = vunpack.c.l.b16 %v1394
          %v3378 = vunpack.c.h.b16 %v1394
          %v3379 = vunpack.c.l.b16 %v1395
          %v3380 = vunpack.c.h.b16 %v1395
          %v3381 = vunpack.c.l.b16 %v1396
          %v3382 = vunpack.c.h.b16 %v1396
          %v3383 = vunpack.c.l.b16 %v1397
          %v3384 = vunpack.c.h.b16 %v1397
          %v3385 = vunpack.c.l.b16 %v1398
          %v3386 = vunpack.c.h.b16 %v1398
          %v3387 = vunpack.c.l.b16 %v1399
          %v3388 = vunpack.c.h.b16 %v1399
          %v3389 = vunpack.c.l.b16 %v1400
          %v3390 = vunpack.c.h.b16 %v1400
          %v3391 = vunpack.c.l.b16 %v1401
          %v3392 = vunpack.c.h.b16 %v1401
          %v3393 = vunpack.c.l.b16 %v1402
          %v3394 = vunpack.c.h.b16 %v1402
          %v3395 = vunpack.c.l.b16 %v1403
          %v3396 = vunpack.c.h.b16 %v1403
          %v3397 = vunpack.c.l.b16 %v1404
          %v3398 = vunpack.c.h.b16 %v1404
          %v3399 = vunpack.c.l.b16 %v1405
          %v3400 = vunpack.c.h.b16 %v1405
          %v3401 = vunpack.c.l.b16 %v1406
          %v3402 = vunpack.c.h.b16 %v1406
          %v3403 = vunpack.c.l.b16 %v1407
          %v3404 = vunpack.c.h.b16 %v1407
          %v3405 = vunpack.c.l.b16 %v1408
          %v3406 = vunpack.c.h.b16 %v1408
          %v3407 = vunpack.c.l.b16 %v1409
          %v3408 = vunpack.c.h.b16 %v1409
          %v3409 = vunpack.c.l.b16 %v1410
          %v3410 = vunpack.c.h.b16 %v1410
          %v3411 = vunpack.c.l.b16 %v1411
          %v3412 = vunpack.c.h.b16 %v1411
          %v3413 = vunpack.c.l.b16 %v1412
          %v3414 = vunpack.c.h.b16 %v1412
          %v3415 = vunpack.c.l.b16 %v1413
          %v3416 = vunpack.c.h.b16 %v1413
          %v3417 = vunpack.c.l.b16 %v1414
          %v3418 = vunpack.c.h.b16 %v1414
          %v3419 = vunpack.c.l.b16 %v1415
          %v3420 = vunpack.c.h.b16 %v1415
          %v3421 = vunpack.c.l.b16 %v1416
          %v3422 = vunpack.c.h.b16 %v1416
          %v3423 = vunpack.c.l.b16 %v1417
          %v3424 = vunpack.c.h.b16 %v1417
          %v3425 = vunpack.c.l.b16 %v1418
          %v3426 = vunpack.c.h.b16 %v1418
          %v3427 = vunpack.c.l.b16 %v1419
          %v3428 = vunpack.c.h.b16 %v1419
          %v3429 = vunpack.c.l.b16 %v1420
          %v3430 = vunpack.c.h.b16 %v1420
          %v3431 = vunpack.c.l.b16 %v1421
          %v3432 = vunpack.c.h.b16 %v1421
          %v3433 = vunpack.c.l.b16 %v1422
          %v3434 = vunpack.c.h.b16 %v1422
          %v3435 = vunpack.c.l.b16 %v1423
          %v3436 = vunpack.c.h.b16 %v1423
          %v3437 = vunpack.c.l.b16 %v1424
          %v3438 = vunpack.c.h.b16 %v1424
          %v3439 = vunpack.c.l.b16 %v1425
          %v3440 = vunpack.c.h.b16 %v1425
          %v3441 = vunpack.c.l.b16 %v1426
          %v3442 = vunpack.c.h.b16 %v1426
          %v3443 = vunpack.c.l.b16 %v1427
          %v3444 = vunpack.c.h.b16 %v1427
          %v3445 = vunpack.c.l.b16 %v1428
          %v3446 = vunpack.c.h.b16 %v1428
          %v3447 = vunpack.c.l.b16 %v1429
          %v3448 = vunpack.c.h.b16 %v1429
          %v3449 = vunpack.c.l.b16 %v1430
          %v3450 = vunpack.c.h.b16 %v1430
          %v3451 = vunpack.c.l.b16 %v1431
          %v3452 = vunpack.c.h.b16 %v1431
          %v3453 = vunpack.c.l.b16 %v1432
          %v3454 = vunpack.c.h.b16 %v1432
          %v3455 = vunpack.c.l.b16 %v1433
          %v3456 = vunpack.c.h.b16 %v1433
          %v3457 = vunpack.c.l.b16 %v1434
          %v3458 = vunpack.c.h.b16 %v1434
          %v3459 = vunpack.c.l.b16 %v1435
          %v3460 = vunpack.c.h.b16 %v1435
          %v3461 = vunpack.c.l.b16 %v1436
          %v3462 = vunpack.c.h.b16 %v1436
          %v3463 = vunpack.c.l.b16 %v1437
          %v3464 = vunpack.c.h.b16 %v1437
          %v3465 = vunpack.c.l.b16 %v1438
          %v3466 = vunpack.c.h.b16 %v1438
          %v3467 = vunpack.c.l.b16 %v1439
          %v3468 = vunpack.c.h.b16 %v1439
          %v3469 = vunpack.c.l.b16 %v1440
          %v3470 = vunpack.c.h.b16 %v1440
          %v3471 = vunpack.c.l.b16 %v1441
          %v3472 = vunpack.c.h.b16 %v1441
          %v3473 = vunpack.c.l.b16 %v1442
          %v3474 = vunpack.c.h.b16 %v1442
          %v3475 = vunpack.c.l.b16 %v1443
          %v3476 = vunpack.c.h.b16 %v1443
          %v3477 = vunpack.c.l.b16 %v1444
          %v3478 = vunpack.c.h.b16 %v1444
          %v3479 = vunpack.c.l.b16 %v1445
          %v3480 = vunpack.c.h.b16 %v1445
          %v3481 = vunpack.c.l.b16 %v1446
          %v3482 = vunpack.c.h.b16 %v1446
          %v3483 = vunpack.c.l.b16 %v1447
          %v3484 = vunpack.c.h.b16 %v1447
          %v3485 = vunpack.c.l.b16 %v1448
          %v3486 = vunpack.c.h.b16 %v1448
          %v3487 = vunpack.c.l.b16 %v1449
          %v3488 = vunpack.c.h.b16 %v1449
          %v3489 = vunpack.c.l.b16 %v1450
          %v3490 = vunpack.c.h.b16 %v1450
          %v3491 = vunpack.c.l.b16 %v1451
          %v3492 = vunpack.c.h.b16 %v1451
          %v3493 = vunpack.c.l.b16 %v1452
          %v3494 = vunpack.c.h.b16 %v1452
          %v3495 = vunpack.c.l.b16 %v1453
          %v3496 = vunpack.c.h.b16 %v1453
          %v3497 = vunpack.c.l.b16 %v1454
          %v3498 = vunpack.c.h.b16 %v1454
          %v3499 = vunpack.c.l.b16 %v1455
          %v3500 = vunpack.c.h.b16 %v1455
          %v3501 = vunpack.c.l.b16 %v1456
          %v3502 = vunpack.c.h.b16 %v1456
          %v3503 = vunpack.c.l.b16 %v1457
          %v3504 = vunpack.c.h.b16 %v1457
          %v3505 = vunpack.c.l.b16 %v1458
          %v3506 = vunpack.c.h.b16 %v1458
          %v3507 = vunpack.c.l.b16 %v1459
          %v3508 = vunpack.c.h.b16 %v1459
          %v3509 = vunpack.c.l.b16 %v1460
          %v3510 = vunpack.c.h.b16 %v1460
          %v3511 = vunpack.c.l.b16 %v1461
          %v3512 = vunpack.c.h.b16 %v1461
          %v3513 = vunpack.c.l.b16 %v1462
          %v3514 = vunpack.c.h.b16 %v1462
          %v3515 = vunpack.c.l.b16 %v1463
          %v3516 = vunpack.c.h.b16 %v1463
          %v3517 = vunpack.c.l.b16 %v1464
          %v3518 = vunpack.c.h.b16 %v1464
          %v3519 = vunpack.c.l.b16 %v1465
          %v3520 = vunpack.c.h.b16 %v1465
          %v3521 = vunpack.c.l.b16 %v1466
          %v3522 = vunpack.c.h.b16 %v1466
          %v3523 = vunpack.c.l.b16 %v1467
          %v3524 = vunpack.c.h.b16 %v1467
          %v3525 = vunpack.c.l.b16 %v1468
          %v3526 = vunpack.c.h.b16 %v1468
          %v3527 = vunpack.c.l.b16 %v1469
          %v3528 = vunpack.c.h.b16 %v1469
          %v3529 = vunpack.c.l.b16 %v1470
          %v3530 = vunpack.c.h.b16 %v1470
          %v3531 = vunpack.c.l.b16 %v1471
          %v3532 = vunpack.c.h.b16 %v1471
          %v3533 = vunpack.c.l.b16 %v1472
          %v3534 = vunpack.c.h.b16 %v1472
          %v3535 = vunpack.c.l.b16 %v1473
          %v3536 = vunpack.c.h.b16 %v1473
          %v3537 = vunpack.c.l.b16 %v1474
          %v3538 = vunpack.c.h.b16 %v1474
          %v3539 = vunpack.c.l.b16 %v1475
          %v3540 = vunpack.c.h.b16 %v1475
          %v3541 = vunpack.c.l.b16 %v1476
          %v3542 = vunpack.c.h.b16 %v1476
          %v3543 = vpack.c.b16 %v2265, %v2263
          %v3544 = vpack.c.b16 %v2266, %v2264
          %v3545 = vpack.c.b16 %v2269, %v2267
          %v3546 = vpack.c.b16 %v2270, %v2268
          %v3547 = vpack.c.b16 %v2273, %v2271
          %v3548 = vpack.c.b16 %v2274, %v2272
          %v3549 = vpack.c.b16 %v2277, %v2275
          %v3550 = vpack.c.b16 %v2278, %v2276
          %v3551 = vpack.c.b16 %v2281, %v2279
          %v3552 = vpack.c.b16 %v2282, %v2280
          %v3553 = vpack.c.b16 %v2285, %v2283
          %v3554 = vpack.c.b16 %v2286, %v2284
          %v3555 = vpack.c.b16 %v2289, %v2287
          %v3556 = vpack.c.b16 %v2290, %v2288
          %v3557 = vpack.c.b16 %v2293, %v2291
          %v3558 = vpack.c.b16 %v2294, %v2292
          %v3559 = vpack.c.b16 %v2297, %v2295
          %v3560 = vpack.c.b16 %v2298, %v2296
          %v3561 = vpack.c.b16 %v2301, %v2299
          %v3562 = vpack.c.b16 %v2302, %v2300
          %v3563 = vpack.c.b16 %v2305, %v2303
          %v3564 = vpack.c.b16 %v2306, %v2304
          %v3565 = vpack.c.b16 %v2309, %v2307
          %v3566 = vpack.c.b16 %v2310, %v2308
          %v3567 = vpack.c.b16 %v2313, %v2311
          %v3568 = vpack.c.b16 %v2314, %v2312
          %v3569 = vpack.c.b16 %v2317, %v2315
          %v3570 = vpack.c.b16 %v2318, %v2316
          %v3571 = vpack.c.b16 %v2321, %v2319
          %v3572 = vpack.c.b16 %v2322, %v2320
          %v3573 = vpack.c.b16 %v2325, %v2323
          %v3574 = vpack.c.b16 %v2326, %v2324
          %v3575 = vpack.c.b16 %v2329, %v2327
          %v3576 = vpack.c.b16 %v2330, %v2328
          %v3577 = vpack.c.b16 %v2333, %v2331
          %v3578 = vpack.c.b16 %v2334, %v2332
          %v3579 = vpack.c.b16 %v2337, %v2335
          %v3580 = vpack.c.b16 %v2338, %v2336
          %v3581 = vpack.c.b16 %v2341, %v2339
          %v3582 = vpack.c.b16 %v2342, %v2340
          %v3583 = vpack.c.b16 %v2345, %v2343
          %v3584 = vpack.c.b16 %v2346, %v2344
          %v3585 = vpack.c.b16 %v2349, %v2347
          %v3586 = vpack.c.b16 %v2350, %v2348
          %v3587 = vpack.c.b16 %v2353, %v2351
          %v3588 = vpack.c.b16 %v2354, %v2352
          %v3589 = vpack.c.b16 %v2357, %v2355
          %v3590 = vpack.c.b16 %v2358, %v2356
          %v3591 = vpack.c.b16 %v2361, %v2359
          %v3592 = vpack.c.b16 %v2362, %v2360
          %v3593 = vpack.c.b16 %v2365, %v2363
          %v3594 = vpack.c.b16 %v2366, %v2364
          %v3595 = vpack.c.b16 %v2369, %v2367
          %v3596 = vpack.c.b16 %v2370, %v2368
          %v3597 = vpack.c.b16 %v2373, %v2371
          %v3598 = vpack.c.b16 %v2374, %v2372
          %v3599 = vpack.c.b16 %v2377, %v2375
          %v3600 = vpack.c.b16 %v2378, %v2376
          %v3601 = vpack.c.b16 %v2381, %v2379
          %v3602 = vpack.c.b16 %v2382, %v2380
          %v3603 = vpack.c.b16 %v2385, %v2383
          %v3604 = vpack.c.b16 %v2386, %v2384
          %v3605 = vpack.c.b16 %v2389, %v2387
          %v3606 = vpack.c.b16 %v2390, %v2388
          %v3607 = vpack.c.b16 %v2393, %v2391
          %v3608 = vpack.c.b16 %v2394, %v2392
          %v3609 = vpack.c.b16 %v2397, %v2395
          %v3610 = vpack.c.b16 %v2398, %v2396
          %v3611 = vpack.c.b16 %v2401, %v2399
          %v3612 = vpack.c.b16 %v2402, %v2400
          %v3613 = vpack.c.b16 %v2405, %v2403
          %v3614 = vpack.c.b16 %v2406, %v2404
          %v3615 = vpack.c.b16 %v2409, %v2407
          %v3616 = vpack.c.b16 %v2410, %v2408
          %v3617 = vpack.c.b16 %v2413, %v2411
          %v3618 = vpack.c.b16 %v2414, %v2412
          %v3619 = vpack.c.b16 %v2417, %v2415
          %v3620 = vpack.c.b16 %v2418, %v2416
          %v3621 = vpack.c.b16 %v2421, %v2419
          %v3622 = vpack.c.b16 %v2422, %v2420
          %v3623 = vpack.c.b16 %v2425, %v2423
          %v3624 = vpack.c.b16 %v2426, %v2424
          %v3625 = vpack.c.b16 %v2429, %v2427
          %v3626 = vpack.c.b16 %v2430, %v2428
          %v3627 = vpack.c.b16 %v2433, %v2431
          %v3628 = vpack.c.b16 %v2434, %v2432
          %v3629 = vpack.c.b16 %v2437, %v2435
          %v3630 = vpack.c.b16 %v2438, %v2436
          %v3631 = vpack.c.b16 %v2441, %v2439
          %v3632 = vpack.c.b16 %v2442, %v2440
          %v3633 = vpack.c.b16 %v2445, %v2443
          %v3634 = vpack.c.b16 %v2446, %v2444
          %v3635 = vpack.c.b16 %v2449, %v2447
          %v3636 = vpack.c.b16 %v2450, %v2448
          %v3637 = vpack.c.b16 %v2453, %v2451
          %v3638 = vpack.c.b16 %v2454, %v2452
          %v3639 = vpack.c.b16 %v2457, %v2455
          %v3640 = vpack.c.b16 %v2458, %v2456
          %v3641 = vpack.c.b16 %v2461, %v2459
          %v3642 = vpack.c.b16 %v2462, %v2460
          %v3643 = vpack.c.b16 %v2465, %v2463
          %v3644 = vpack.c.b16 %v2466, %v2464
          %v3645 = vpack.c.b16 %v2469, %v2467
          %v3646 = vpack.c.b16 %v2470, %v2468
          %v3647 = vpack.c.b16 %v2473, %v2471
          %v3648 = vpack.c.b16 %v2474, %v2472
          %v3649 = vpack.c.b16 %v2477, %v2475
          %v3650 = vpack.c.b16 %v2478, %v2476
          %v3651 = vpack.c.b16 %v2481, %v2479
          %v3652 = vpack.c.b16 %v2482, %v2480
          %v3653 = vpack.c.b16 %v2485, %v2483
          %v3654 = vpack.c.b16 %v2486, %v2484
          %v3655 = vpack.c.b16 %v2489, %v2487
          %v3656 = vpack.c.b16 %v2490, %v2488
          %v3657 = vpack.c.b16 %v2493, %v2491
          %v3658 = vpack.c.b16 %v2494, %v2492
          %v3659 = vpack.c.b16 %v2497, %v2495
          %v3660 = vpack.c.b16 %v2498, %v2496
          %v3661 = vpack.c.b16 %v2501, %v2499
          %v3662 = vpack.c.b16 %v2502, %v2500
          %v3663 = vpack.c.b16 %v2505, %v2503
          %v3664 = vpack.c.b16 %v2506, %v2504
          %v3665 = vpack.c.b16 %v2509, %v2507
          %v3666 = vpack.c.b16 %v2510, %v2508
          %v3667 = vpack.c.b16 %v2513, %v2511
          %v3668 = vpack.c.b16 %v2514, %v2512
          %v3669 = vpack.c.b16 %v2517, %v2515
          %v3670 = vpack.c.b16 %v2518, %v2516
          %v3671 = vpack.c.b16 %v2521, %v2519
          %v3672 = vpack.c.b16 %v2522, %v2520
          %v3673 = vpack.c.b16 %v2525, %v2523
          %v3674 = vpack.c.b16 %v2526, %v2524
          %v3675 = vpack.c.b16 %v2529, %v2527
          %v3676 = vpack.c.b16 %v2530, %v2528
          %v3677 = vpack.c.b16 %v2533, %v2531
          %v3678 = vpack.c.b16 %v2534, %v2532
          %v3679 = vpack.c.b16 %v2537, %v2535
          %v3680 = vpack.c.b16 %v2538, %v2536
          %v3681 = vpack.c.b16 %v2541, %v2539
          %v3682 = vpack.c.b16 %v2542, %v2540
          %v3683 = vpack.c.b16 %v2545, %v2543
          %v3684 = vpack.c.b16 %v2546, %v2544
          %v3685 = vpack.c.b16 %v2549, %v2547
          %v3686 = vpack.c.b16 %v2550, %v2548
          %v3687 = vpack.c.b16 %v2553, %v2551
          %v3688 = vpack.c.b16 %v2554, %v2552
          %v3689 = vpack.c.b16 %v2557, %v2555
          %v3690 = vpack.c.b16 %v2558, %v2556
          %v3691 = vpack.c.b16 %v2561, %v2559
          %v3692 = vpack.c.b16 %v2562, %v2560
          %v3693 = vpack.c.b16 %v2565, %v2563
          %v3694 = vpack.c.b16 %v2566, %v2564
          %v3695 = vpack.c.b16 %v2569, %v2567
          %v3696 = vpack.c.b16 %v2570, %v2568
          %v3697 = vpack.c.b16 %v2573, %v2571
          %v3698 = vpack.c.b16 %v2574, %v2572
          %v3699 = vpack.c.b16 %v2577, %v2575
          %v3700 = vpack.c.b16 %v2578, %v2576
          %v3701 = vpack.c.b16 %v2581, %v2579
          %v3702 = vpack.c.b16 %v2582, %v2580
          %v3703 = vpack.c.b16 %v2585, %v2583
          %v3704 = vpack.c.b16 %v2586, %v2584
          %v3705 = vpack.c.b16 %v2589, %v2587
          %v3706 = vpack.c.b16 %v2590, %v2588
          %v3707 = vpack.c.b16 %v2593, %v2591
          %v3708 = vpack.c.b16 %v2594, %v2592
          %v3709 = vpack.c.b16 %v2597, %v2595
          %v3710 = vpack.c.b16 %v2598, %v2596
          %v3711 = vpack.c.b16 %v2601, %v2599
          %v3712 = vpack.c.b16 %v2602, %v2600
          %v3713 = vpack.c.b16 %v2605, %v2603
          %v3714 = vpack.c.b16 %v2606, %v2604
          %v3715 = vpack.c.b16 %v2609, %v2607
          %v3716 = vpack.c.b16 %v2610, %v2608
          %v3717 = vpack.c.b16 %v2613, %v2611
          %v3718 = vpack.c.b16 %v2614, %v2612
          %v3719 = vpack.c.b16 %v2617, %v2615
          %v3720 = vpack.c.b16 %v2618, %v2616
          %v3721 = vpack.c.b16 %v2621, %v2619
          %v3722 = vpack.c.b16 %v2622, %v2620
          %v3723 = vpack.c.b16 %v2625, %v2623
          %v3724 = vpack.c.b16 %v2626, %v2624
          %v3725 = vpack.c.b16 %v2629, %v2627
          %v3726 = vpack.c.b16 %v2630, %v2628
          %v3727 = vpack.c.b16 %v2633, %v2631
          %v3728 = vpack.c.b16 %v2634, %v2632
          %v3729 = vpack.c.b16 %v2637, %v2635
          %v3730 = vpack.c.b16 %v2638, %v2636
          %v3731 = vpack.c.b16 %v2641, %v2639
          %v3732 = vpack.c.b16 %v2642, %v2640
          %v3733 = vpack.c.b16 %v2645, %v2643
          %v3734 = vpack.c.b16 %v2646, %v2644
          %v3735 = vpack.c.b16 %v2649, %v2647
          %v3736 = vpack.c.b16 %v2650, %v2648
          %v3737 = vpack.c.b16 %v2653, %v2651
          %v3738 = vpack.c.b16 %v2654, %v2652
          %v3739 = vpack.c.b16 %v2657, %v2655
          %v3740 = vpack.c.b16 %v2658, %v2656
          %v3741 = vpack.c.b16 %v2661, %v2659
          %v3742 = vpack.c.b16 %v2662, %v2660
          %v3743 = vpack.c.b16 %v2665, %v2663
          %v3744 = vpack.c.b16 %v2666, %v2664
          %v3745 = vpack.c.b16 %v2669, %v2667
          %v3746 = vpack.c.b16 %v2670, %v2668
          %v3747 = vpack.c.b16 %v2673, %v2671
          %v3748 = vpack.c.b16 %v2674, %v2672
          %v3749 = vpack.c.b16 %v2677, %v2675
          %v3750 = vpack.c.b16 %v2678, %v2676
          %v3751 = vpack.c.b16 %v2681, %v2679
          %v3752 = vpack.c.b16 %v2682, %v2680
          %v3753 = vpack.c.b16 %v2685, %v2683
          %v3754 = vpack.c.b16 %v2686, %v2684
          %v3755 = vpack.c.b16 %v2689, %v2687
          %v3756 = vpack.c.b16 %v2690, %v2688
          %v3757 = vpack.c.b16 %v2693, %v2691
          %v3758 = vpack.c.b16 %v2694, %v2692
          %v3759 = vpack.c.b16 %v2697, %v2695
          %v3760 = vpack.c.b16 %v2698, %v2696
          %v3761 = vpack.c.b16 %v2701, %v2699
          %v3762 = vpack.c.b16 %v2702, %v2700
          %v3763 = vpack.c.b16 %v2705, %v2703
          %v3764 = vpack.c.b16 %v2706, %v2704
          %v3765 = vpack.c.b16 %v2709, %v2707
          %v3766 = vpack.c.b16 %v2710, %v2708
          %v3767 = vpack.c.b16 %v2713, %v2711
          %v3768 = vpack.c.b16 %v2714, %v2712
          %v3769 = vpack.c.b16 %v2717, %v2715
          %v3770 = vpack.c.b16 %v2718, %v2716
          %v3771 = vpack.c.b16 %v2721, %v2719
          %v3772 = vpack.c.b16 %v2722, %v2720
          %v3773 = vpack.c.b16 %v2725, %v2723
          %v3774 = vpack.c.b16 %v2726, %v2724
          %v3775 = vpack.c.b16 %v2729, %v2727
          %v3776 = vpack.c.b16 %v2730, %v2728
          %v3777 = vpack.c.b16 %v2733, %v2731
          %v3778 = vpack.c.b16 %v2734, %v2732
          %v3779 = vpack.c.b16 %v2737, %v2735
          %v3780 = vpack.c.b16 %v2738, %v2736
          %v3781 = vpack.c.b16 %v2741, %v2739
          %v3782 = vpack.c.b16 %v2742, %v2740
          %v3783 = vpack.c.b16 %v2745, %v2743
          %v3784 = vpack.c.b16 %v2746, %v2744
          %v3785 = vpack.c.b16 %v2749, %v2747
          %v3786 = vpack.c.b16 %v2750, %v2748
          %v3787 = vpack.c.b16 %v2753, %v2751
          %v3788 = vpack.c.b16 %v2754, %v2752
          %v3789 = vpack.c.b16 %v2757, %v2755
          %v3790 = vpack.c.b16 %v2758, %v2756
          %v3791 = vpack.c.b16 %v2761, %v2759
          %v3792 = vpack.c.b16 %v2762, %v2760
          %v3793 = vpack.c.b16 %v2765, %v2763
          %v3794 = vpack.c.b16 %v2766, %v2764
          %v3795 = vpack.c.b16 %v2769, %v2767
          %v3796 = vpack.c.b16 %v2770, %v2768
          %v3797 = vpack.c.b16 %v2773, %v2771
          %v3798 = vpack.c.b16 %v2774, %v2772
          %v3799 = vpack.c.b16 %v2777, %v2775
          %v3800 = vpack.c.b16 %v2778, %v2776
          %v3801 = vpack.c.b16 %v2781, %v2779
          %v3802 = vpack.c.b16 %v2782, %v2780
          %v3803 = vpack.c.b16 %v2785, %v2783
          %v3804 = vpack.c.b16 %v2786, %v2784
          %v3805 = vpack.c.b16 %v2789, %v2787
          %v3806 = vpack.c.b16 %v2790, %v2788
          %v3807 = vpack.c.b16 %v2793, %v2791
          %v3808 = vpack.c.b16 %v2794, %v2792
          %v3809 = vpack.c.b16 %v2797, %v2795
          %v3810 = vpack.c.b16 %v2798, %v2796
          %v3811 = vpack.c.b16 %v2801, %v2799
          %v3812 = vpack.c.b16 %v2802, %v2800
          %v3813 = vpack.c.b16 %v2805, %v2803
          %v3814 = vpack.c.b16 %v2806, %v2804
          %v3815 = vpack.c.b16 %v2809, %v2807
          %v3816 = vpack.c.b16 %v2810, %v2808
          %v3817 = vpack.c.b16 %v2813, %v2811
          %v3818 = vpack.c.b16 %v2814, %v2812
          %v3819 = vpack.c.b16 %v2817, %v2815
          %v3820 = vpack.c.b16 %v2818, %v2816
          %v3821 = vpack.c.b16 %v2821, %v2819
          %v3822 = vpack.c.b16 %v2822, %v2820
          %v3823 = vpack.c.b16 %v2825, %v2823
          %v3824 = vpack.c.b16 %v2826, %v2824
          %v3825 = vpack.c.b16 %v2829, %v2827
          %v3826 = vpack.c.b16 %v2830, %v2828
          %v3827 = vpack.c.b16 %v2833, %v2831
          %v3828 = vpack.c.b16 %v2834, %v2832
          %v3829 = vpack.c.b16 %v2837, %v2835
          %v3830 = vpack.c.b16 %v2838, %v2836
          %v3831 = vpack.c.b16 %v2841, %v2839
          %v3832 = vpack.c.b16 %v2842, %v2840
          %v3833 = vpack.c.b16 %v2845, %v2843
          %v3834 = vpack.c.b16 %v2846, %v2844
          %v3835 = vpack.c.b16 %v2849, %v2847
          %v3836 = vpack.c.b16 %v2850, %v2848
          %v3837 = vpack.c.b16 %v2853, %v2851
          %v3838 = vpack.c.b16 %v2854, %v2852
          %v3839 = vpack.c.b16 %v2857, %v2855
          %v3840 = vpack.c.b16 %v2858, %v2856
          %v3841 = vpack.c.b16 %v2861, %v2859
          %v3842 = vpack.c.b16 %v2862, %v2860
          %v3843 = vpack.c.b16 %v2865, %v2863
          %v3844 = vpack.c.b16 %v2866, %v2864
          %v3845 = vpack.c.b16 %v2869, %v2867
          %v3846 = vpack.c.b16 %v2870, %v2868
          %v3847 = vpack.c.b16 %v2873, %v2871
          %v3848 = vpack.c.b16 %v2874, %v2872
          %v3849 = vpack.c.b16 %v2877, %v2875
          %v3850 = vpack.c.b16 %v2878, %v2876
          %v3851 = vpack.c.b16 %v2881, %v2879
          %v3852 = vpack.c.b16 %v2882, %v2880
          %v3853 = vpack.c.b16 %v2885, %v2883
          %v3854 = vpack.c.b16 %v2886, %v2884
          %v3855 = vpack.c.b16 %v2889, %v2887
          %v3856 = vpack.c.b16 %v2890, %v2888
          %v3857 = vpack.c.b16 %v2893, %v2891
          %v3858 = vpack.c.b16 %v2894, %v2892
          %v3859 = vpack.c.b16 %v2897, %v2895
          %v3860 = vpack.c.b16 %v2898, %v2896
          %v3861 = vpack.c.b16 %v2901, %v2899
          %v3862 = vpack.c.b16 %v2902, %v2900
          %v3863 = vpack.c.b16 %v2905, %v2903
          %v3864 = vpack.c.b16 %v2906, %v2904
          %v3865 = vpack.c.b16 %v2909, %v2907
          %v3866 = vpack.c.b16 %v2910, %v2908
          %v3867 = vpack.c.b16 %v2913, %v2911
          %v3868 = vpack.c.b16 %v2914, %v2912
          %v3869 = vpack.c.b16 %v2917, %v2915
          %v3870 = vpack.c.b16 %v2918, %v2916
          %v3871 = vpack.c.b16 %v2921, %v2919
          %v3872 = vpack.c.b16 %v2922, %v2920
          %v3873 = vpack.c.b16 %v2925, %v2923
          %v3874 = vpack.c.b16 %v2926, %v2924
          %v3875 = vpack.c.b16 %v2929, %v2927
          %v3876 = vpack.c.b16 %v2930, %v2928
          %v3877 = vpack.c.b16 %v2933, %v2931
          %v3878 = vpack.c.b16 %v2934, %v2932
          %v3879 = vpack.c.b16 %v2937, %v2935
          %v3880 = vpack.c.b16 %v2938, %v2936
          %v3881 = vpack.c.b16 %v2941, %v2939
          %v3882 = vpack.c.b16 %v2942, %v2940
          %v3883 = vpack.c.b16 %v2945, %v2943
          %v3884 = vpack.c.b16 %v2946, %v2944
          %v3885 = vpack.c.b16 %v2949, %v2947
          %v3886 = vpack.c.b16 %v2950, %v2948
          %v3887 = vpack.c.b16 %v2953, %v2951
          %v3888 = vpack.c.b16 %v2954, %v2952
          %v3889 = vpack.c.b16 %v2957, %v2955
          %v3890 = vpack.c.b16 %v2958, %v2956
          %v3891 = vpack.c.b16 %v2961, %v2959
          %v3892 = vpack.c.b16 %v2962, %v2960
          %v3893 = vpack.c.b16 %v2965, %v2963
          %v3894 = vpack.c.b16 %v2966, %v2964
          %v3895 = vpack.c.b16 %v2969, %v2967
          %v3896 = vpack.c.b16 %v2970, %v2968
          %v3897 = vpack.c.b16 %v2973, %v2971
          %v3898 = vpack.c.b16 %v2974, %v2972
          %v3899 = vpack.c.b16 %v2977, %v2975
          %v3900 = vpack.c.b16 %v2978, %v2976
          %v3901 = vpack.c.b16 %v2981, %v2979
          %v3902 = vpack.c.b16 %v2982, %v2980
          %v3903 = vpack.c.b16 %v2985, %v2983
          %v3904 = vpack.c.b16 %v2986, %v2984
          %v3905 = vpack.c.b16 %v2989, %v2987
          %v3906 = vpack.c.b16 %v2990, %v2988
          %v3907 = vpack.c.b16 %v2993, %v2991
          %v3908 = vpack.c.b16 %v2994, %v2992
          %v3909 = vpack.c.b16 %v2997, %v2995
          %v3910 = vpack.c.b16 %v2998, %v2996
          %v3911 = vpack.c.b16 %v3001, %v2999
          %v3912 = vpack.c.b16 %v3002, %v3000
          %v3913 = vpack.c.b16 %v3005, %v3003
          %v3914 = vpack.c.b16 %v3006, %v3004
          %v3915 = vpack.c.b16 %v3009, %v3007
          %v3916 = vpack.c.b16 %v3010, %v3008
          %v3917 = vpack.c.b16 %v3013, %v3011
          %v3918 = vpack.c.b16 %v3014, %v3012
          %v3919 = vpack.c.b16 %v3017, %v3015
          %v3920 = vpack.c.b16 %v3018, %v3016
          %v3921 = vpack.c.b16 %v3021, %v3019
          %v3922 = vpack.c.b16 %v3022, %v3020
          %v3923 = vpack.c.b16 %v3025, %v3023
          %v3924 = vpack.c.b16 %v3026, %v3024
          %v3925 = vpack.c.b16 %v3029, %v3027
          %v3926 = vpack.c.b16 %v3030, %v3028
          %v3927 = vpack.c.b16 %v3033, %v3031
          %v3928 = vpack.c.b16 %v3034, %v3032
          %v3929 = vpack.c.b16 %v3037, %v3035
          %v3930 = vpack.c.b16 %v3038, %v3036
          %v3931 = vpack.c.b16 %v3041, %v3039
          %v3932 = vpack.c.b16 %v3042, %v3040
          %v3933 = vpack.c.b16 %v3045, %v3043
          %v3934 = vpack.c.b16 %v3046, %v3044
          %v3935 = vpack.c.b16 %v3049, %v3047
          %v3936 = vpack.c.b16 %v3050, %v3048
          %v3937 = vpack.c.b16 %v3053, %v3051
          %v3938 = vpack.c.b16 %v3054, %v3052
          %v3939 = vpack.c.b16 %v3057, %v3055
          %v3940 = vpack.c.b16 %v3058, %v3056
          %v3941 = vpack.c.b16 %v3061, %v3059
          %v3942 = vpack.c.b16 %v3062, %v3060
          %v3943 = vpack.c.b16 %v3065, %v3063
          %v3944 = vpack.c.b16 %v3066, %v3064
          %v3945 = vpack.c.b16 %v3069, %v3067
          %v3946 = vpack.c.b16 %v3070, %v3068
          %v3947 = vpack.c.b16 %v3073, %v3071
          %v3948 = vpack.c.b16 %v3074, %v3072
          %v3949 = vpack.c.b16 %v3077, %v3075
          %v3950 = vpack.c.b16 %v3078, %v3076
          %v3951 = vpack.c.b16 %v3081, %v3079
          %v3952 = vpack.c.b16 %v3082, %v3080
          %v3953 = vpack.c.b16 %v3085, %v3083
          %v3954 = vpack.c.b16 %v3086, %v3084
          %v3955 = vpack.c.b16 %v3089, %v3087
          %v3956 = vpack.c.b16 %v3090, %v3088
          %v3957 = vpack.c.b16 %v3093, %v3091
          %v3958 = vpack.c.b16 %v3094, %v3092
          %v3959 = vpack.c.b16 %v3097, %v3095
          %v3960 = vpack.c.b16 %v3098, %v3096
          %v3961 = vpack.c.b16 %v3101, %v3099
          %v3962 = vpack.c.b16 %v3102, %v3100
          %v3963 = vpack.c.b16 %v3105, %v3103
          %v3964 = vpack.c.b16 %v3106, %v3104
          %v3965 = vpack.c.b16 %v3109, %v3107
          %v3966 = vpack.c.b16 %v3110, %v3108
          %v3967 = vpack.c.b16 %v3113, %v3111
          %v3968 = vpack.c.b16 %v3114, %v3112
          %v3969 = vpack.c.b16 %v3117, %v3115
          %v3970 = vpack.c.b16 %v3118, %v3116
          %v3971 = vpack.c.b16 %v3121, %v3119
          %v3972 = vpack.c.b16 %v3122, %v3120
          %v3973 = vpack.c.b16 %v3125, %v3123
          %v3974 = vpack.c.b16 %v3126, %v3124
          %v3975 = vpack.c.b16 %v3129, %v3127
          %v3976 = vpack.c.b16 %v3130, %v3128
          %v3977 = vpack.c.b16 %v3133, %v3131
          %v3978 = vpack.c.b16 %v3134, %v3132
          %v3979 = vpack.c.b16 %v3137, %v3135
          %v3980 = vpack.c.b16 %v3138, %v3136
          %v3981 = vpack.c.b16 %v3141, %v3139
          %v3982 = vpack.c.b16 %v3142, %v3140
          %v3983 = vpack.c.b16 %v3145, %v3143
          %v3984 = vpack.c.b16 %v3146, %v3144
          %v3985 = vpack.c.b16 %v3149, %v3147
          %v3986 = vpack.c.b16 %v3150, %v3148
          %v3987 = vpack.c.b16 %v3153, %v3151
          %v3988 = vpack.c.b16 %v3154, %v3152
          %v3989 = vpack.c.b16 %v3157, %v3155
          %v3990 = vpack.c.b16 %v3158, %v3156
          %v3991 = vpack.c.b16 %v3161, %v3159
          %v3992 = vpack.c.b16 %v3162, %v3160
          %v3993 = vpack.c.b16 %v3165, %v3163
          %v3994 = vpack.c.b16 %v3166, %v3164
          %v3995 = vpack.c.b16 %v3169, %v3167
          %v3996 = vpack.c.b16 %v3170, %v3168
          %v3997 = vpack.c.b16 %v3173, %v3171
          %v3998 = vpack.c.b16 %v3174, %v3172
          %v3999 = vpack.c.b16 %v3177, %v3175
          %v4000 = vpack.c.b16 %v3178, %v3176
          %v4001 = vpack.c.b16 %v3181, %v3179
          %v4002 = vpack.c.b16 %v3182, %v3180
          %v4003 = vpack.c.b16 %v3185, %v3183
          %v4004 = vpack.c.b16 %v3186, %v3184
          %v4005 = vpack.c.b16 %v3189, %v3187
          %v4006 = vpack.c.b16 %v3190, %v3188
          %v4007 = vpack.c.b16 %v3193, %v3191
          %v4008 = vpack.c.b16 %v3194, %v3192
          %v4009 = vpack.c.b16 %v3197, %v3195
          %v4010 = vpack.c.b16 %v3198, %v3196
          %v4011 = vpack.c.b16 %v3201, %v3199
          %v4012 = vpack.c.b16 %v3202, %v3200
          %v4013 = vpack.c.b16 %v3205, %v3203
          %v4014 = vpack.c.b16 %v3206, %v3204
          %v4015 = vpack.c.b16 %v3209, %v3207
          %v4016 = vpack.c.b16 %v3210, %v3208
          %v4017 = vpack.c.b16 %v3213, %v3211
          %v4018 = vpack.c.b16 %v3214, %v3212
          %v4019 = vpack.c.b16 %v3217, %v3215
          %v4020 = vpack.c.b16 %v3218, %v3216
          %v4021 = vpack.c.b16 %v3221, %v3219
          %v4022 = vpack.c.b16 %v3222, %v3220
          %v4023 = vpack.c.b16 %v3225, %v3223
          %v4024 = vpack.c.b16 %v3226, %v3224
          %v4025 = vpack.c.b16 %v3229, %v3227
          %v4026 = vpack.c.b16 %v3230, %v3228
          %v4027 = vpack.c.b16 %v3233, %v3231
          %v4028 = vpack.c.b16 %v3234, %v3232
          %v4029 = vpack.c.b16 %v3237, %v3235
          %v4030 = vpack.c.b16 %v3238, %v3236
          %v4031 = vpack.c.b16 %v3241, %v3239
          %v4032 = vpack.c.b16 %v3242, %v3240
          %v4033 = vpack.c.b16 %v3245, %v3243
          %v4034 = vpack.c.b16 %v3246, %v3244
          %v4035 = vpack.c.b16 %v3249, %v3247
          %v4036 = vpack.c.b16 %v3250, %v3248
          %v4037 = vpack.c.b16 %v3253, %v3251
          %v4038 = vpack.c.b16 %v3254, %v3252
          %v4039 = vpack.c.b16 %v3257, %v3255
          %v4040 = vpack.c.b16 %v3258, %v3256
          %v4041 = vpack.c.b16 %v3261, %v3259
          %v4042 = vpack.c.b16 %v3262, %v3260
          %v4043 = vpack.c.b16 %v3265, %v3263
          %v4044 = vpack.c.b16 %v3266, %v3264
          %v4045 = vpack.c.b16 %v3269, %v3267
          %v4046 = vpack.c.b16 %v3270, %v3268
          %v4047 = vpack.c.b16 %v3273, %v3271
          %v4048 = vpack.c.b16 %v3274, %v3272
          %v4049 = vpack.c.b16 %v3277, %v3275
          %v4050 = vpack.c.b16 %v3278, %v3276
          %v4051 = vpack.c.b16 %v3281, %v3279
          %v4052 = vpack.c.b16 %v3282, %v3280
          %v4053 = vpack.c.b16 %v3285, %v3283
          %v4054 = vpack.c.b16 %v3286, %v3284
          %v4055 = vpack.c.b16 %v3289, %v3287
          %v4056 = vpack.c.b16 %v3290, %v3288
          %v4057 = vpack.c.b16 %v3293, %v3291
          %v4058 = vpack.c.b16 %v3294, %v3292
          %v4059 = vpack.c.b16 %v3297, %v3295
          %v4060 = vpack.c.b16 %v3298, %v3296
          %v4061 = vpack.c.b16 %v3301, %v3299
          %v4062 = vpack.c.b16 %v3302, %v3300
          %v4063 = vpack.c.b16 %v3305, %v3303
          %v4064 = vpack.c.b16 %v3306, %v3304
          %v4065 = vpack.c.b16 %v3309, %v3307
          %v4066 = vpack.c.b16 %v3310, %v3308
          %v4067 = vpack.c.b16 %v3313, %v3311
          %v4068 = vpack.c.b16 %v3314, %v3312
          %v4069 = vpack.c.b16 %v3317, %v3315
          %v4070 = vpack.c.b16 %v3318, %v3316
          %v4071 = vpack.c.b16 %v3321, %v3319
          %v4072 = vpack.c.b16 %v3322, %v3320
          %v4073 = vpack.c.b16 %v3325, %v3323
          %v4074 = vpack.c.b16 %v3326, %v3324
          %v4075 = vpack.c.b16 %v3329, %v3327
          %v4076 = vpack.c.b16 %v3330, %v3328
          %v4077 = vpack.c.b16 %v3333, %v3331
          %v4078 = vpack.c.b16 %v3334, %v3332
          %v4079 = vpack.c.b16 %v3337, %v3335
          %v4080 = vpack.c.b16 %v3338, %v3336
          %v4081 = vpack.c.b16 %v3341, %v3339
          %v4082 = vpack.c.b16 %v3342, %v3340
          %v4083 = vpack.c.b16 %v3345, %v3343
          %v4084 = vpack.c.b16 %v3346, %v3344
          %v4085 = vpack.c.b16 %v3349, %v3347
          %v4086 = vpack.c.b16 %v3350, %v3348
          %v4087 = vpack.c.b16 %v3353, %v3351
          %v4088 = vpack.c.b16 %v3354, %v3352
          %v4089 = vpack.c.b16 %v3357, %v3355
          %v4090 = vpack.c.b16 %v3358, %v3356
          %v4091 = vpack.c.b16 %v3361, %v3359
          %v4092 = vpack.c.b16 %v3362, %v3360
          %v4093 = vpack.c.b16 %v3365, %v3363
          %v4094 = vpack.c.b16 %v3366, %v3364
          %v4095 = vpack.c.b16 %v3369, %v3367
          %v4096 = vpack.c.b16 %v3370, %v3368
          %v4097 = vpack.c.b16 %v3373, %v3371
          %v4098 = vpack.c.b16 %v3374, %v3372
          %v4099 = vpack.c.b16 %v3377, %v3375
          %v4100 = vpack.c.b16 %v3378, %v3376
          %v4101 = vpack.c.b16 %v3381, %v3379
          %v4102 = vpack.c.b16 %v3382, %v3380
          %v4103 = vpack.c.b16 %v3385, %v3383
          %v4104 = vpack.c.b16 %v3386, %v3384
          %v4105 = vpack.c.b16 %v3389, %v3387
          %v4106 = vpack.c.b16 %v3390, %v3388
          %v4107 = vpack.c.b16 %v3393, %v3391
          %v4108 = vpack.c.b16 %v3394, %v3392
          %v4109 = vpack.c.b16 %v3397, %v3395
          %v4110 = vpack.c.b16 %v3398, %v3396
          %v4111 = vpack.c.b16 %v3401, %v3399
          %v4112 = vpack.c.b16 %v3402, %v3400
          %v4113 = vpack.c.b16 %v3405, %v3403
          %v4114 = vpack.c.b16 %v3406, %v3404
          %v4115 = vpack.c.b16 %v3409, %v3407
          %v4116 = vpack.c.b16 %v3410, %v3408
          %v4117 = vpack.c.b16 %v3413, %v3411
          %v4118 = vpack.c.b16 %v3414, %v3412
          %v4119 = vpack.c.b16 %v3417, %v3415
          %v4120 = vpack.c.b16 %v3418, %v3416
          %v4121 = vpack.c.b16 %v3421, %v3419
          %v4122 = vpack.c.b16 %v3422, %v3420
          %v4123 = vpack.c.b16 %v3425, %v3423
          %v4124 = vpack.c.b16 %v3426, %v3424
          %v4125 = vpack.c.b16 %v3429, %v3427
          %v4126 = vpack.c.b16 %v3430, %v3428
          %v4127 = vpack.c.b16 %v3433, %v3431
          %v4128 = vpack.c.b16 %v3434, %v3432
          %v4129 = vpack.c.b16 %v3437, %v3435
          %v4130 = vpack.c.b16 %v3438, %v3436
          %v4131 = vpack.c.b16 %v3441, %v3439
          %v4132 = vpack.c.b16 %v3442, %v3440
          %v4133 = vpack.c.b16 %v3445, %v3443
          %v4134 = vpack.c.b16 %v3446, %v3444
          %v4135 = vpack.c.b16 %v3449, %v3447
          %v4136 = vpack.c.b16 %v3450, %v3448
          %v4137 = vpack.c.b16 %v3453, %v3451
          %v4138 = vpack.c.b16 %v3454, %v3452
          %v4139 = vpack.c.b16 %v3457, %v3455
          %v4140 = vpack.c.b16 %v3458, %v3456
          %v4141 = vpack.c.b16 %v3461, %v3459
          %v4142 = vpack.c.b16 %v3462, %v3460
          %v4143 = vpack.c.b16 %v3465, %v3463
          %v4144 = vpack.c.b16 %v3466, %v3464
          %v4145 = vpack.c.b16 %v3469, %v3467
          %v4146 = vpack.c.b16 %v3470, %v3468
          %v4147 = vpack.c.b16 %v3473, %v3471
          %v4148 = vpack.c.b16 %v3474, %v3472
          %v4149 = vpack.c.b16 %v3477, %v3475
          %v4150 = vpack.c.b16 %v3478, %v3476
          %v4151 = vpack.c.b16 %v3481, %v3479
          %v4152 = vpack.c.b16 %v3482, %v3480
          %v4153 = vpack.c.b16 %v3485, %v3483
          %v4154 = vpack.c.b16 %v3486, %v3484
          %v4155 = vpack.c.b16 %v3489, %v3487
          %v4156 = vpack.c.b16 %v3490, %v3488
          %v4157 = vpack.c.b16 %v3493, %v3491
          %v4158 = vpack.c.b16 %v3494, %v3492
          %v4159 = vpack.c.b16 %v3497, %v3495
          %v4160 = vpack.c.b16 %v3498, %v3496
          %v4161 = vpack.c.b16 %v3501, %v3499
          %v4162 = vpack.c.b16 %v3502, %v3500
          %v4163 = vpack.c.b16 %v3505, %v3503
          %v4164 = vpack.c.b16 %v3506, %v3504
          %v4165 = vpack.c.b16 %v3509, %v3507
          %v4166 = vpack.c.b16 %v3510, %v3508
          %v4167 = vpack.c.b16 %v3513, %v3511
          %v4168 = vpack.c.b16 %v3514, %v3512
          %v4169 = vpack.c.b16 %v3517, %v3515
          %v4170 = vpack.c.b16 %v3518, %v3516
          %v4171 = vpack.c.b16 %v3521, %v3519
          %v4172 = vpack.c.b16 %v3522, %v3520
          %v4173 = vpack.c.b16 %v3525, %v3523
          %v4174 = vpack.c.b16 %v3526, %v3524
          %v4175 = vpack.c.b16 %v3529, %v3527
          %v4176 = vpack.c.b16 %v3530, %v3528
          %v4177 = vpack.c.b16 %v3533, %v3531
          %v4178 = vpack.c.b16 %v3534, %v3532
          %v4179 = vpack.c.b16 %v3537, %v3535
          %v4180 = vpack.c.b16 %v3538, %v3536
          %v4181 = vpack.c.b16 %v3541, %v3539
          %v4182 = vpack.c.b16 %v3542, %v3540
          %4823 = vmatpush.bf16.msra.mxu0 %v3557
          %4824 = vmatpush.bf16.msra.mxu0 %v3555
          %4825 = vmatpush.bf16.msra.mxu0 %v3553
          %4826 = vmatpush.bf16.msra.mxu0 %v3551
          %4827 = vmatpush.bf16.msra.mxu0 %v3549
          %4828 = vmatpush.bf16.msra.mxu0 %v3547
          %4829 = vmatpush.bf16.msra.mxu0 %v3545
          %4830 = vmatpush.bf16.msra.mxu0 %v3543
          %4831 = vmatmul.bf16.gmra.mxu0 %v1543
          %v4832 = vpop.f32.mrf.mxu0
          %v4833 = vadd.f32 %v1479, %v4832
          %v4834 = vpop.f32.mrf.mxu0
          %4835 = vdwg.mxu0
          %4836 = vmatpush.bf16.msra.mxu0 %v3573
          %4837 = vmatpush.bf16.msra.mxu0 %v3571
          %4838 = vmatpush.bf16.msra.mxu0 %v3569
          %4839 = vmatpush.bf16.msra.mxu0 %v3567
          %4840 = vmatpush.bf16.msra.mxu0 %v3565
          %4841 = vmatpush.bf16.msra.mxu0 %v3563
          %4842 = vmatpush.bf16.msra.mxu0 %v3561
          %4843 = vmatpush.bf16.msra.mxu0 %v3559
          %4844 = vmatmul.bf16.gmra.mxu0 %v1544
          %v4845 = vpop.f32.mrf.mxu0
          %v4846 = vadd.f32 %v4833, %v4845
          %v4847 = vpop.f32.mrf.mxu0
          %4848 = vdwg.mxu0
          %4849 = vmatpush.bf16.msra.mxu0 %v3589
          %4850 = vmatpush.bf16.msra.mxu0 %v3587
          %4851 = vmatpush.bf16.msra.mxu0 %v3585
          %4852 = vmatpush.bf16.msra.mxu0 %v3583
          %4853 = vmatpush.bf16.msra.mxu0 %v3581
          %4854 = vmatpush.bf16.msra.mxu0 %v3579
          %4855 = vmatpush.bf16.msra.mxu0 %v3577
          %4856 = vmatpush.bf16.msra.mxu0 %v3575
          %4857 = vmatmul.bf16.gmra.mxu0 %v1545
          %v4858 = vpop.f32.mrf.mxu0
          %v4859 = vadd.f32 %v4846, %v4858
          %v4860 = vpop.f32.mrf.mxu0
          %4861 = vdwg.mxu0
          %4862 = vmatpush.bf16.msra.mxu0 %v3605
          %4863 = vmatpush.bf16.msra.mxu0 %v3603
          %4864 = vmatpush.bf16.msra.mxu0 %v3601
          %4865 = vmatpush.bf16.msra.mxu0 %v3599
          %4866 = vmatpush.bf16.msra.mxu0 %v3597
          %4867 = vmatpush.bf16.msra.mxu0 %v3595
          %4868 = vmatpush.bf16.msra.mxu0 %v3593
          %4869 = vmatpush.bf16.msra.mxu0 %v3591
          %4870 = vmatmul.bf16.gmra.mxu0 %v1546
          %v4871 = vpop.f32.mrf.mxu0
          %v4872 = vadd.f32 %v4859, %v4871
          %v4873 = vpop.f32.mrf.mxu0
          %4874 = vdwg.mxu0
          %4875 = vmatpush.bf16.msra.mxu0 %v3621
          %4876 = vmatpush.bf16.msra.mxu0 %v3619
          %4877 = vmatpush.bf16.msra.mxu0 %v3617
          %4878 = vmatpush.bf16.msra.mxu0 %v3615
          %4879 = vmatpush.bf16.msra.mxu0 %v3613
          %4880 = vmatpush.bf16.msra.mxu0 %v3611
          %4881 = vmatpush.bf16.msra.mxu0 %v3609
          %4882 = vmatpush.bf16.msra.mxu0 %v3607
          %4883 = vmatmul.bf16.gmra.mxu0 %v1547
          %v4884 = vpop.f32.mrf.mxu0
          %v4885 = vadd.f32 %v4872, %v4884
          %v4886 = vpop.f32.mrf.mxu0
          %4887 = vdwg.mxu0
          %4888 = vmatpush.bf16.msra.mxu0 %v3637
          %4889 = vmatpush.bf16.msra.mxu0 %v3635
          %4890 = vmatpush.bf16.msra.mxu0 %v3633
          %4891 = vmatpush.bf16.msra.mxu0 %v3631
          %4892 = vmatpush.bf16.msra.mxu0 %v3629
          %4893 = vmatpush.bf16.msra.mxu0 %v3627
          %4894 = vmatpush.bf16.msra.mxu0 %v3625
          %4895 = vmatpush.bf16.msra.mxu0 %v3623
          %4896 = vmatmul.bf16.gmra.mxu0 %v1548
          %v4897 = vpop.f32.mrf.mxu0
          %v4898 = vadd.f32 %v4885, %v4897
          %v4899 = vpop.f32.mrf.mxu0
          %4900 = vdwg.mxu0
          %4901 = vmatpush.bf16.msra.mxu0 %v3653
          %4902 = vmatpush.bf16.msra.mxu0 %v3651
          %4903 = vmatpush.bf16.msra.mxu0 %v3649
          %4904 = vmatpush.bf16.msra.mxu0 %v3647
          %4905 = vmatpush.bf16.msra.mxu0 %v3645
          %4906 = vmatpush.bf16.msra.mxu0 %v3643
          %4907 = vmatpush.bf16.msra.mxu0 %v3641
          %4908 = vmatpush.bf16.msra.mxu0 %v3639
          %4909 = vmatmul.bf16.gmra.mxu0 %v1549
          %v4910 = vpop.f32.mrf.mxu0
          %v4911 = vadd.f32 %v4898, %v4910
          %v4912 = vpop.f32.mrf.mxu0
          %4913 = vdwg.mxu0
          %4914 = vmatpush.bf16.msra.mxu0 %v3669
          %4915 = vmatpush.bf16.msra.mxu0 %v3667
          %4916 = vmatpush.bf16.msra.mxu0 %v3665
          %4917 = vmatpush.bf16.msra.mxu0 %v3663
          %4918 = vmatpush.bf16.msra.mxu0 %v3661
          %4919 = vmatpush.bf16.msra.mxu0 %v3659
          %4920 = vmatpush.bf16.msra.mxu0 %v3657
          %4921 = vmatpush.bf16.msra.mxu0 %v3655
          %4922 = vmatmul.bf16.gmra.mxu0 %v1550
          %v4923 = vpop.f32.mrf.mxu0
          %v4924 = vadd.f32 %v4911, %v4923
          %v4925 = vpop.f32.mrf.mxu0
          %4926 = vdwg.mxu0
          %4927 = vmatpush.bf16.msra.mxu0 %v3685
          %4928 = vmatpush.bf16.msra.mxu0 %v3683
          %4929 = vmatpush.bf16.msra.mxu0 %v3681
          %4930 = vmatpush.bf16.msra.mxu0 %v3679
          %4931 = vmatpush.bf16.msra.mxu0 %v3677
          %4932 = vmatpush.bf16.msra.mxu0 %v3675
          %4933 = vmatpush.bf16.msra.mxu0 %v3673
          %4934 = vmatpush.bf16.msra.mxu0 %v3671
          %4935 = vmatmul.bf16.gmra.mxu0 %v1551
          %v4936 = vpop.f32.mrf.mxu0
          %v4937 = vadd.f32 %v4924, %v4936
          %v4938 = vpop.f32.mrf.mxu0
          %4939 = vdwg.mxu0
          %4940 = vmatpush.bf16.msra.mxu0 %v3701
          %4941 = vmatpush.bf16.msra.mxu0 %v3699
          %4942 = vmatpush.bf16.msra.mxu0 %v3697
          %4943 = vmatpush.bf16.msra.mxu0 %v3695
          %4944 = vmatpush.bf16.msra.mxu0 %v3693
          %4945 = vmatpush.bf16.msra.mxu0 %v3691
          %4946 = vmatpush.bf16.msra.mxu0 %v3689
          %4947 = vmatpush.bf16.msra.mxu0 %v3687
          %4948 = vmatmul.bf16.gmra.mxu0 %v1552
          %v4949 = vpop.f32.mrf.mxu0
          %v4950 = vadd.f32 %v4937, %v4949
          %v4951 = vpop.f32.mrf.mxu0
          %4952 = vdwg.mxu0
          %4953 = vmatpush.bf16.msra.mxu0 %v3717
          %4954 = vmatpush.bf16.msra.mxu0 %v3715
          %4955 = vmatpush.bf16.msra.mxu0 %v3713
          %4956 = vmatpush.bf16.msra.mxu0 %v3711
          %4957 = vmatpush.bf16.msra.mxu0 %v3709
          %4958 = vmatpush.bf16.msra.mxu0 %v3707
          %4959 = vmatpush.bf16.msra.mxu0 %v3705
          %4960 = vmatpush.bf16.msra.mxu0 %v3703
          %4961 = vmatmul.bf16.gmra.mxu0 %v1553
          %v4962 = vpop.f32.mrf.mxu0
          %v4963 = vadd.f32 %v4950, %v4962
          %v4964 = vpop.f32.mrf.mxu0
          %4965 = vdwg.mxu0
          %4966 = vmatpush.bf16.msra.mxu0 %v3733
          %4967 = vmatpush.bf16.msra.mxu0 %v3731
          %4968 = vmatpush.bf16.msra.mxu0 %v3729
          %4969 = vmatpush.bf16.msra.mxu0 %v3727
          %4970 = vmatpush.bf16.msra.mxu0 %v3725
          %4971 = vmatpush.bf16.msra.mxu0 %v3723
          %4972 = vmatpush.bf16.msra.mxu0 %v3721
          %4973 = vmatpush.bf16.msra.mxu0 %v3719
          %4974 = vmatmul.bf16.gmra.mxu0 %v1554
          %v4975 = vpop.f32.mrf.mxu0
          %v4976 = vadd.f32 %v4963, %v4975
          %v4977 = vpop.f32.mrf.mxu0
          %4978 = vdwg.mxu0
          %4979 = vmatpush.bf16.msra.mxu0 %v3749
          %4980 = vmatpush.bf16.msra.mxu0 %v3747
          %4981 = vmatpush.bf16.msra.mxu0 %v3745
          %4982 = vmatpush.bf16.msra.mxu0 %v3743
          %4983 = vmatpush.bf16.msra.mxu0 %v3741
          %4984 = vmatpush.bf16.msra.mxu0 %v3739
          %4985 = vmatpush.bf16.msra.mxu0 %v3737
          %4986 = vmatpush.bf16.msra.mxu0 %v3735
          %4987 = vmatmul.bf16.gmra.mxu0 %v1555
          %v4988 = vpop.f32.mrf.mxu0
          %v4989 = vadd.f32 %v4976, %v4988
          %v4990 = vpop.f32.mrf.mxu0
          %4991 = vdwg.mxu0
          %4992 = vmatpush.bf16.msra.mxu0 %v3765
          %4993 = vmatpush.bf16.msra.mxu0 %v3763
          %4994 = vmatpush.bf16.msra.mxu0 %v3761
          %4995 = vmatpush.bf16.msra.mxu0 %v3759
          %4996 = vmatpush.bf16.msra.mxu0 %v3757
          %4997 = vmatpush.bf16.msra.mxu0 %v3755
          %4998 = vmatpush.bf16.msra.mxu0 %v3753
          %4999 = vmatpush.bf16.msra.mxu0 %v3751
          %5000 = vmatmul.bf16.gmra.mxu0 %v1556
          %v5001 = vpop.f32.mrf.mxu0
          %v5002 = vadd.f32 %v4989, %v5001
          %v5003 = vpop.f32.mrf.mxu0
          %5004 = vdwg.mxu0
          %5005 = vmatpush.bf16.msra.mxu0 %v3781
          %5006 = vmatpush.bf16.msra.mxu0 %v3779
          %5007 = vmatpush.bf16.msra.mxu0 %v3777
          %5008 = vmatpush.bf16.msra.mxu0 %v3775
          %5009 = vmatpush.bf16.msra.mxu0 %v3773
          %5010 = vmatpush.bf16.msra.mxu0 %v3771
          %5011 = vmatpush.bf16.msra.mxu0 %v3769
          %5012 = vmatpush.bf16.msra.mxu0 %v3767
          %5013 = vmatmul.bf16.gmra.mxu0 %v1557
          %v5014 = vpop.f32.mrf.mxu0
          %v5015 = vadd.f32 %v5002, %v5014
          %v5016 = vpop.f32.mrf.mxu0
          %5017 = vdwg.mxu0
          %5018 = vmatpush.bf16.msra.mxu0 %v3797
          %5019 = vmatpush.bf16.msra.mxu0 %v3795
          %5020 = vmatpush.bf16.msra.mxu0 %v3793
          %5021 = vmatpush.bf16.msra.mxu0 %v3791
          %5022 = vmatpush.bf16.msra.mxu0 %v3789
          %5023 = vmatpush.bf16.msra.mxu0 %v3787
          %5024 = vmatpush.bf16.msra.mxu0 %v3785
          %5025 = vmatpush.bf16.msra.mxu0 %v3783
          %5026 = vmatmul.bf16.gmra.mxu0 %v1558
          %v5027 = vpop.f32.mrf.mxu0
          %v5028 = vadd.f32 %v5015, %v5027
          %v5029 = vpop.f32.mrf.mxu0
          %5030 = vdwg.mxu0
          %5031 = vmatpush.bf16.msra.mxu0 %v3813
          %5032 = vmatpush.bf16.msra.mxu0 %v3811
          %5033 = vmatpush.bf16.msra.mxu0 %v3809
          %5034 = vmatpush.bf16.msra.mxu0 %v3807
          %5035 = vmatpush.bf16.msra.mxu0 %v3805
          %5036 = vmatpush.bf16.msra.mxu0 %v3803
          %5037 = vmatpush.bf16.msra.mxu0 %v3801
          %5038 = vmatpush.bf16.msra.mxu0 %v3799
          %5039 = vmatmul.bf16.gmra.mxu0 %v1559
          %v5040 = vpop.f32.mrf.mxu0
          %v5041 = vadd.f32 %v5028, %v5040
          %v5042 = vpop.f32.mrf.mxu0
          %5043 = vdwg.mxu0
          %5044 = vmatpush.bf16.msra.mxu0 %v3829
          %5045 = vmatpush.bf16.msra.mxu0 %v3827
          %5046 = vmatpush.bf16.msra.mxu0 %v3825
          %5047 = vmatpush.bf16.msra.mxu0 %v3823
          %5048 = vmatpush.bf16.msra.mxu0 %v3821
          %5049 = vmatpush.bf16.msra.mxu0 %v3819
          %5050 = vmatpush.bf16.msra.mxu0 %v3817
          %5051 = vmatpush.bf16.msra.mxu0 %v3815
          %5052 = vmatmul.bf16.gmra.mxu0 %v1560
          %v5053 = vpop.f32.mrf.mxu0
          %v5054 = vadd.f32 %v5041, %v5053
          %v5055 = vpop.f32.mrf.mxu0
          %5056 = vdwg.mxu0
          %5057 = vmatpush.bf16.msra.mxu0 %v3845
          %5058 = vmatpush.bf16.msra.mxu0 %v3843
          %5059 = vmatpush.bf16.msra.mxu0 %v3841
          %5060 = vmatpush.bf16.msra.mxu0 %v3839
          %5061 = vmatpush.bf16.msra.mxu0 %v3837
          %5062 = vmatpush.bf16.msra.mxu0 %v3835
          %5063 = vmatpush.bf16.msra.mxu0 %v3833
          %5064 = vmatpush.bf16.msra.mxu0 %v3831
          %5065 = vmatmul.bf16.gmra.mxu0 %v1561
          %v5066 = vpop.f32.mrf.mxu0
          %v5067 = vadd.f32 %v5054, %v5066
          %v5068 = vpop.f32.mrf.mxu0
          %5069 = vdwg.mxu0
          %5070 = vmatpush.bf16.msra.mxu0 %v3861
          %5071 = vmatpush.bf16.msra.mxu0 %v3859
          %5072 = vmatpush.bf16.msra.mxu0 %v3857
          %5073 = vmatpush.bf16.msra.mxu0 %v3855
          %5074 = vmatpush.bf16.msra.mxu0 %v3853
          %5075 = vmatpush.bf16.msra.mxu0 %v3851
          %5076 = vmatpush.bf16.msra.mxu0 %v3849
          %5077 = vmatpush.bf16.msra.mxu0 %v3847
          %5078 = vmatmul.bf16.gmra.mxu0 %v1562
          %v5079 = vpop.f32.mrf.mxu0
          %v5080 = vadd.f32 %v5067, %v5079
          %v5081 = vpop.f32.mrf.mxu0
          %5082 = vdwg.mxu0
          %5083 = vmatpush.bf16.msra.mxu0 %v3877
          %5084 = vmatpush.bf16.msra.mxu0 %v3875
          %5085 = vmatpush.bf16.msra.mxu0 %v3873
          %5086 = vmatpush.bf16.msra.mxu0 %v3871
          %5087 = vmatpush.bf16.msra.mxu0 %v3869
          %5088 = vmatpush.bf16.msra.mxu0 %v3867
          %5089 = vmatpush.bf16.msra.mxu0 %v3865
          %5090 = vmatpush.bf16.msra.mxu0 %v3863
          %5091 = vmatmul.bf16.gmra.mxu0 %v1563
          %v5092 = vpop.f32.mrf.mxu0
          %v5093 = vadd.f32 %v5080, %v5092
          %v5094 = vpop.f32.mrf.mxu0
          %5095 = vdwg.mxu0
          %5096 = vmatpush.bf16.msra.mxu0 %v3893
          %5097 = vmatpush.bf16.msra.mxu0 %v3891
          %5098 = vmatpush.bf16.msra.mxu0 %v3889
          %5099 = vmatpush.bf16.msra.mxu0 %v3887
          %5100 = vmatpush.bf16.msra.mxu0 %v3885
          %5101 = vmatpush.bf16.msra.mxu0 %v3883
          %5102 = vmatpush.bf16.msra.mxu0 %v3881
          %5103 = vmatpush.bf16.msra.mxu0 %v3879
          %5104 = vmatmul.bf16.gmra.mxu0 %v1564
          %v5105 = vpop.f32.mrf.mxu0
          %v5106 = vadd.f32 %v5093, %v5105
          %v5107 = vpop.f32.mrf.mxu0
          %5108 = vdwg.mxu0
          %5109 = vmatpush.bf16.msra.mxu0 %v3909
          %5110 = vmatpush.bf16.msra.mxu0 %v3907
          %5111 = vmatpush.bf16.msra.mxu0 %v3905
          %5112 = vmatpush.bf16.msra.mxu0 %v3903
          %5113 = vmatpush.bf16.msra.mxu0 %v3901
          %5114 = vmatpush.bf16.msra.mxu0 %v3899
          %5115 = vmatpush.bf16.msra.mxu0 %v3897
          %5116 = vmatpush.bf16.msra.mxu0 %v3895
          %5117 = vmatmul.bf16.gmra.mxu0 %v1565
          %v5118 = vpop.f32.mrf.mxu0
          %v5119 = vadd.f32 %v5106, %v5118
          %v5120 = vpop.f32.mrf.mxu0
          %5121 = vdwg.mxu0
          %5122 = vmatpush.bf16.msra.mxu0 %v3925
          %5123 = vmatpush.bf16.msra.mxu0 %v3923
          %5124 = vmatpush.bf16.msra.mxu0 %v3921
          %5125 = vmatpush.bf16.msra.mxu0 %v3919
          %5126 = vmatpush.bf16.msra.mxu0 %v3917
          %5127 = vmatpush.bf16.msra.mxu0 %v3915
          %5128 = vmatpush.bf16.msra.mxu0 %v3913
          %5129 = vmatpush.bf16.msra.mxu0 %v3911
          %5130 = vmatmul.bf16.gmra.mxu0 %v1566
          %v5131 = vpop.f32.mrf.mxu0
          %v5132 = vadd.f32 %v5119, %v5131
          %v5133 = vpop.f32.mrf.mxu0
          %5134 = vdwg.mxu0
          %5135 = vmatpush.bf16.msra.mxu0 %v3941
          %5136 = vmatpush.bf16.msra.mxu0 %v3939
          %5137 = vmatpush.bf16.msra.mxu0 %v3937
          %5138 = vmatpush.bf16.msra.mxu0 %v3935
          %5139 = vmatpush.bf16.msra.mxu0 %v3933
          %5140 = vmatpush.bf16.msra.mxu0 %v3931
          %5141 = vmatpush.bf16.msra.mxu0 %v3929
          %5142 = vmatpush.bf16.msra.mxu0 %v3927
          %5143 = vmatmul.bf16.gmra.mxu0 %v1567
          %v5144 = vpop.f32.mrf.mxu0
          %v5145 = vadd.f32 %v5132, %v5144
          %v5146 = vpop.f32.mrf.mxu0
          %5147 = vdwg.mxu0
          %5148 = vmatpush.bf16.msra.mxu0 %v3957
          %5149 = vmatpush.bf16.msra.mxu0 %v3955
          %5150 = vmatpush.bf16.msra.mxu0 %v3953
          %5151 = vmatpush.bf16.msra.mxu0 %v3951
          %5152 = vmatpush.bf16.msra.mxu0 %v3949
          %5153 = vmatpush.bf16.msra.mxu0 %v3947
          %5154 = vmatpush.bf16.msra.mxu0 %v3945
          %5155 = vmatpush.bf16.msra.mxu0 %v3943
          %5156 = vmatmul.bf16.gmra.mxu0 %v1568
          %v5157 = vpop.f32.mrf.mxu0
          %v5158 = vadd.f32 %v5145, %v5157
          %v5159 = vpop.f32.mrf.mxu0
          %5160 = vdwg.mxu0
          %5161 = vmatpush.bf16.msra.mxu0 %v3973
          %5162 = vmatpush.bf16.msra.mxu0 %v3971
          %5163 = vmatpush.bf16.msra.mxu0 %v3969
          %5164 = vmatpush.bf16.msra.mxu0 %v3967
          %5165 = vmatpush.bf16.msra.mxu0 %v3965
          %5166 = vmatpush.bf16.msra.mxu0 %v3963
          %5167 = vmatpush.bf16.msra.mxu0 %v3961
          %5168 = vmatpush.bf16.msra.mxu0 %v3959
          %5169 = vmatmul.bf16.gmra.mxu0 %v1569
          %v5170 = vpop.f32.mrf.mxu0
          %v5171 = vadd.f32 %v5158, %v5170
          %v5172 = vpop.f32.mrf.mxu0
          %5173 = vdwg.mxu0
          %5174 = vmatpush.bf16.msra.mxu0 %v3989
          %5175 = vmatpush.bf16.msra.mxu0 %v3987
          %5176 = vmatpush.bf16.msra.mxu0 %v3985
          %5177 = vmatpush.bf16.msra.mxu0 %v3983
          %5178 = vmatpush.bf16.msra.mxu0 %v3981
          %5179 = vmatpush.bf16.msra.mxu0 %v3979
          %5180 = vmatpush.bf16.msra.mxu0 %v3977
          %5181 = vmatpush.bf16.msra.mxu0 %v3975
          %5182 = vmatmul.bf16.gmra.mxu0 %v1570
          %v5183 = vpop.f32.mrf.mxu0
          %v5184 = vadd.f32 %v5171, %v5183
          %v5185 = vpop.f32.mrf.mxu0
          %5186 = vdwg.mxu0
          %5187 = vmatpush.bf16.msra.mxu0 %v4005
          %5188 = vmatpush.bf16.msra.mxu0 %v4003
          %5189 = vmatpush.bf16.msra.mxu0 %v4001
          %5190 = vmatpush.bf16.msra.mxu0 %v3999
          %5191 = vmatpush.bf16.msra.mxu0 %v3997
          %5192 = vmatpush.bf16.msra.mxu0 %v3995
          %5193 = vmatpush.bf16.msra.mxu0 %v3993
          %5194 = vmatpush.bf16.msra.mxu0 %v3991
          %5195 = vmatmul.bf16.gmra.mxu0 %v1571
          %v5196 = vpop.f32.mrf.mxu0
          %v5197 = vadd.f32 %v5184, %v5196
          %v5198 = vpop.f32.mrf.mxu0
          %5199 = vdwg.mxu0
          %5200 = vmatpush.bf16.msra.mxu0 %v4021
          %5201 = vmatpush.bf16.msra.mxu0 %v4019
          %5202 = vmatpush.bf16.msra.mxu0 %v4017
          %5203 = vmatpush.bf16.msra.mxu0 %v4015
          %5204 = vmatpush.bf16.msra.mxu0 %v4013
          %5205 = vmatpush.bf16.msra.mxu0 %v4011
          %5206 = vmatpush.bf16.msra.mxu0 %v4009
          %5207 = vmatpush.bf16.msra.mxu0 %v4007
          %5208 = vmatmul.bf16.gmra.mxu0 %v1572
          %v5209 = vpop.f32.mrf.mxu0
          %v5210 = vadd.f32 %v5197, %v5209
          %v5211 = vpop.f32.mrf.mxu0
          %5212 = vdwg.mxu0
          %5213 = vmatpush.bf16.msra.mxu0 %v4037
          %5214 = vmatpush.bf16.msra.mxu0 %v4035
          %5215 = vmatpush.bf16.msra.mxu0 %v4033
          %5216 = vmatpush.bf16.msra.mxu0 %v4031
          %5217 = vmatpush.bf16.msra.mxu0 %v4029
          %5218 = vmatpush.bf16.msra.mxu0 %v4027
          %5219 = vmatpush.bf16.msra.mxu0 %v4025
          %5220 = vmatpush.bf16.msra.mxu0 %v4023
          %5221 = vmatmul.bf16.gmra.mxu0 %v1573
          %v5222 = vpop.f32.mrf.mxu0
          %v5223 = vadd.f32 %v5210, %v5222
          %v5224 = vpop.f32.mrf.mxu0
          %5225 = vdwg.mxu0
          %5226 = vmatpush.bf16.msra.mxu0 %v4053
          %5227 = vmatpush.bf16.msra.mxu0 %v4051
          %5228 = vmatpush.bf16.msra.mxu0 %v4049
          %5229 = vmatpush.bf16.msra.mxu0 %v4047
          %5230 = vmatpush.bf16.msra.mxu0 %v4045
          %5231 = vmatpush.bf16.msra.mxu0 %v4043
          %5232 = vmatpush.bf16.msra.mxu0 %v4041
          %5233 = vmatpush.bf16.msra.mxu0 %v4039
          %5234 = vmatmul.bf16.gmra.mxu0 %v1574
          %v5235 = vpop.f32.mrf.mxu0
          %v5236 = vadd.f32 %v5223, %v5235
          %v5237 = vpop.f32.mrf.mxu0
          %5238 = vdwg.mxu0
          %5239 = vmatpush.bf16.msra.mxu0 %v4069
          %5240 = vmatpush.bf16.msra.mxu0 %v4067
          %5241 = vmatpush.bf16.msra.mxu0 %v4065
          %5242 = vmatpush.bf16.msra.mxu0 %v4063
          %5243 = vmatpush.bf16.msra.mxu0 %v4061
          %5244 = vmatpush.bf16.msra.mxu0 %v4059
          %5245 = vmatpush.bf16.msra.mxu0 %v4057
          %5246 = vmatpush.bf16.msra.mxu0 %v4055
          %5247 = vmatmul.bf16.gmra.mxu0 %v1575
          %v5248 = vpop.f32.mrf.mxu0
          %v5249 = vadd.f32 %v5236, %v5248
          %v5250 = vpop.f32.mrf.mxu0
          %5251 = vdwg.mxu0
          %5252 = vmatpush.bf16.msra.mxu0 %v4085
          %5253 = vmatpush.bf16.msra.mxu0 %v4083
          %5254 = vmatpush.bf16.msra.mxu0 %v4081
          %5255 = vmatpush.bf16.msra.mxu0 %v4079
          %5256 = vmatpush.bf16.msra.mxu0 %v4077
          %5257 = vmatpush.bf16.msra.mxu0 %v4075
          %5258 = vmatpush.bf16.msra.mxu0 %v4073
          %5259 = vmatpush.bf16.msra.mxu0 %v4071
          %5260 = vmatmul.bf16.gmra.mxu0 %v1576
          %v5261 = vpop.f32.mrf.mxu0
          %v5262 = vadd.f32 %v5249, %v5261
          %v5263 = vpop.f32.mrf.mxu0
          %5264 = vdwg.mxu0
          %5265 = vmatpush.bf16.msra.mxu0 %v4101
          %5266 = vmatpush.bf16.msra.mxu0 %v4099
          %5267 = vmatpush.bf16.msra.mxu0 %v4097
          %5268 = vmatpush.bf16.msra.mxu0 %v4095
          %5269 = vmatpush.bf16.msra.mxu0 %v4093
          %5270 = vmatpush.bf16.msra.mxu0 %v4091
          %5271 = vmatpush.bf16.msra.mxu0 %v4089
          %5272 = vmatpush.bf16.msra.mxu0 %v4087
          %5273 = vmatmul.bf16.gmra.mxu0 %v1577
          %v5274 = vpop.f32.mrf.mxu0
          %v5275 = vadd.f32 %v5262, %v5274
          %v5276 = vpop.f32.mrf.mxu0
          %5277 = vdwg.mxu0
          %5278 = vmatpush.bf16.msra.mxu0 %v4117
          %5279 = vmatpush.bf16.msra.mxu0 %v4115
          %5280 = vmatpush.bf16.msra.mxu0 %v4113
          %5281 = vmatpush.bf16.msra.mxu0 %v4111
          %5282 = vmatpush.bf16.msra.mxu0 %v4109
          %5283 = vmatpush.bf16.msra.mxu0 %v4107
          %5284 = vmatpush.bf16.msra.mxu0 %v4105
          %5285 = vmatpush.bf16.msra.mxu0 %v4103
          %5286 = vmatmul.bf16.gmra.mxu0 %v1578
          %v5287 = vpop.f32.mrf.mxu0
          %v5288 = vadd.f32 %v5275, %v5287
          %v5289 = vpop.f32.mrf.mxu0
          %5290 = vdwg.mxu0
          %5291 = vmatpush.bf16.msra.mxu0 %v4133
          %5292 = vmatpush.bf16.msra.mxu0 %v4131
          %5293 = vmatpush.bf16.msra.mxu0 %v4129
          %5294 = vmatpush.bf16.msra.mxu0 %v4127
          %5295 = vmatpush.bf16.msra.mxu0 %v4125
          %5296 = vmatpush.bf16.msra.mxu0 %v4123
          %5297 = vmatpush.bf16.msra.mxu0 %v4121
          %5298 = vmatpush.bf16.msra.mxu0 %v4119
          %5299 = vmatmul.bf16.gmra.mxu0 %v1579
          %v5300 = vpop.f32.mrf.mxu0
          %v5301 = vadd.f32 %v5288, %v5300
          %v5302 = vpop.f32.mrf.mxu0
          %5303 = vdwg.mxu0
          %5304 = vmatpush.bf16.msra.mxu0 %v4149
          %5305 = vmatpush.bf16.msra.mxu0 %v4147
          %5306 = vmatpush.bf16.msra.mxu0 %v4145
          %5307 = vmatpush.bf16.msra.mxu0 %v4143
          %5308 = vmatpush.bf16.msra.mxu0 %v4141
          %5309 = vmatpush.bf16.msra.mxu0 %v4139
          %5310 = vmatpush.bf16.msra.mxu0 %v4137
          %5311 = vmatpush.bf16.msra.mxu0 %v4135
          %5312 = vmatmul.bf16.gmra.mxu0 %v1580
          %v5313 = vpop.f32.mrf.mxu0
          %v5314 = vadd.f32 %v5301, %v5313
          %v5315 = vpop.f32.mrf.mxu0
          %5316 = vdwg.mxu0
          %5317 = vmatpush.bf16.msra.mxu0 %v4165
          %5318 = vmatpush.bf16.msra.mxu0 %v4163
          %5319 = vmatpush.bf16.msra.mxu0 %v4161
          %5320 = vmatpush.bf16.msra.mxu0 %v4159
          %5321 = vmatpush.bf16.msra.mxu0 %v4157
          %5322 = vmatpush.bf16.msra.mxu0 %v4155
          %5323 = vmatpush.bf16.msra.mxu0 %v4153
          %5324 = vmatpush.bf16.msra.mxu0 %v4151
          %5325 = vmatmul.bf16.gmra.mxu0 %v1581
          %v5326 = vpop.f32.mrf.mxu0
          %v5327 = vadd.f32 %v5314, %v5326
          %v5328 = vpop.f32.mrf.mxu0
          %5329 = vdwg.mxu0
          %5330 = vmatpush.bf16.msra.mxu0 %v4181
          %5331 = vmatpush.bf16.msra.mxu0 %v4179
          %5332 = vmatpush.bf16.msra.mxu0 %v4177
          %5333 = vmatpush.bf16.msra.mxu0 %v4175
          %5334 = vmatpush.bf16.msra.mxu0 %v4173
          %5335 = vmatpush.bf16.msra.mxu0 %v4171
          %5336 = vmatpush.bf16.msra.mxu0 %v4169
          %5337 = vmatpush.bf16.msra.mxu0 %v4167
          %5338 = vmatmul.bf16.gmra.mxu0 %v1582
          %v5339 = vpop.f32.mrf.mxu0
          %v5340 = vadd.f32 %v5327, %v5339
          %v5341 = vpop.f32.mrf.mxu0
          %5342 = vdwg.mxu0
          %5343 = vmatpush.bf16.msra.mxu0 %v3558
          %5344 = vmatpush.bf16.msra.mxu0 %v3556
          %5345 = vmatpush.bf16.msra.mxu0 %v3554
          %5346 = vmatpush.bf16.msra.mxu0 %v3552
          %5347 = vmatpush.bf16.msra.mxu0 %v3550
          %5348 = vmatpush.bf16.msra.mxu0 %v3548
          %5349 = vmatpush.bf16.msra.mxu0 %v3546
          %5350 = vmatpush.bf16.msra.mxu0 %v3544
          %5351 = vmatmul.bf16.gmra.mxu0 %v1543
          %v5352 = vpop.f32.mrf.mxu0
          %v5353 = vadd.f32 %v1480, %v5352
          %v5354 = vpop.f32.mrf.mxu0
          %5355 = vdwg.mxu0
          %5356 = vmatpush.bf16.msra.mxu0 %v3574
          %5357 = vmatpush.bf16.msra.mxu0 %v3572
          %5358 = vmatpush.bf16.msra.mxu0 %v3570
          %5359 = vmatpush.bf16.msra.mxu0 %v3568
          %5360 = vmatpush.bf16.msra.mxu0 %v3566
          %5361 = vmatpush.bf16.msra.mxu0 %v3564
          %5362 = vmatpush.bf16.msra.mxu0 %v3562
          %5363 = vmatpush.bf16.msra.mxu0 %v3560
          %5364 = vmatmul.bf16.gmra.mxu0 %v1544
          %v5365 = vpop.f32.mrf.mxu0
          %v5366 = vadd.f32 %v5353, %v5365
          %v5367 = vpop.f32.mrf.mxu0
          %5368 = vdwg.mxu0
          %5369 = vmatpush.bf16.msra.mxu0 %v3590
          %5370 = vmatpush.bf16.msra.mxu0 %v3588
          %5371 = vmatpush.bf16.msra.mxu0 %v3586
          %5372 = vmatpush.bf16.msra.mxu0 %v3584
          %5373 = vmatpush.bf16.msra.mxu0 %v3582
          %5374 = vmatpush.bf16.msra.mxu0 %v3580
          %5375 = vmatpush.bf16.msra.mxu0 %v3578
          %5376 = vmatpush.bf16.msra.mxu0 %v3576
          %5377 = vmatmul.bf16.gmra.mxu0 %v1545
          %v5378 = vpop.f32.mrf.mxu0
          %v5379 = vadd.f32 %v5366, %v5378
          %v5380 = vpop.f32.mrf.mxu0
          %5381 = vdwg.mxu0
          %5382 = vmatpush.bf16.msra.mxu0 %v3606
          %5383 = vmatpush.bf16.msra.mxu0 %v3604
          %5384 = vmatpush.bf16.msra.mxu0 %v3602
          %5385 = vmatpush.bf16.msra.mxu0 %v3600
          %5386 = vmatpush.bf16.msra.mxu0 %v3598
          %5387 = vmatpush.bf16.msra.mxu0 %v3596
          %5388 = vmatpush.bf16.msra.mxu0 %v3594
          %5389 = vmatpush.bf16.msra.mxu0 %v3592
          %5390 = vmatmul.bf16.gmra.mxu0 %v1546
          %v5391 = vpop.f32.mrf.mxu0
          %v5392 = vadd.f32 %v5379, %v5391
          %v5393 = vpop.f32.mrf.mxu0
          %5394 = vdwg.mxu0
          %5395 = vmatpush.bf16.msra.mxu0 %v3622
          %5396 = vmatpush.bf16.msra.mxu0 %v3620
          %5397 = vmatpush.bf16.msra.mxu0 %v3618
          %5398 = vmatpush.bf16.msra.mxu0 %v3616
          %5399 = vmatpush.bf16.msra.mxu0 %v3614
          %5400 = vmatpush.bf16.msra.mxu0 %v3612
          %5401 = vmatpush.bf16.msra.mxu0 %v3610
          %5402 = vmatpush.bf16.msra.mxu0 %v3608
          %5403 = vmatmul.bf16.gmra.mxu0 %v1547
          %v5404 = vpop.f32.mrf.mxu0
          %v5405 = vadd.f32 %v5392, %v5404
          %v5406 = vpop.f32.mrf.mxu0
          %5407 = vdwg.mxu0
          %5408 = vmatpush.bf16.msra.mxu0 %v3638
          %5409 = vmatpush.bf16.msra.mxu0 %v3636
          %5410 = vmatpush.bf16.msra.mxu0 %v3634
          %5411 = vmatpush.bf16.msra.mxu0 %v3632
          %5412 = vmatpush.bf16.msra.mxu0 %v3630
          %5413 = vmatpush.bf16.msra.mxu0 %v3628
          %5414 = vmatpush.bf16.msra.mxu0 %v3626
          %5415 = vmatpush.bf16.msra.mxu0 %v3624
          %5416 = vmatmul.bf16.gmra.mxu0 %v1548
          %v5417 = vpop.f32.mrf.mxu0
          %v5418 = vadd.f32 %v5405, %v5417
          %v5419 = vpop.f32.mrf.mxu0
          %5420 = vdwg.mxu0
          %5421 = vmatpush.bf16.msra.mxu0 %v3654
          %5422 = vmatpush.bf16.msra.mxu0 %v3652
          %5423 = vmatpush.bf16.msra.mxu0 %v3650
          %5424 = vmatpush.bf16.msra.mxu0 %v3648
          %5425 = vmatpush.bf16.msra.mxu0 %v3646
          %5426 = vmatpush.bf16.msra.mxu0 %v3644
          %5427 = vmatpush.bf16.msra.mxu0 %v3642
          %5428 = vmatpush.bf16.msra.mxu0 %v3640
          %5429 = vmatmul.bf16.gmra.mxu0 %v1549
          %v5430 = vpop.f32.mrf.mxu0
          %v5431 = vadd.f32 %v5418, %v5430
          %v5432 = vpop.f32.mrf.mxu0
          %5433 = vdwg.mxu0
          %5434 = vmatpush.bf16.msra.mxu0 %v3670
          %5435 = vmatpush.bf16.msra.mxu0 %v3668
          %5436 = vmatpush.bf16.msra.mxu0 %v3666
          %5437 = vmatpush.bf16.msra.mxu0 %v3664
          %5438 = vmatpush.bf16.msra.mxu0 %v3662
          %5439 = vmatpush.bf16.msra.mxu0 %v3660
          %5440 = vmatpush.bf16.msra.mxu0 %v3658
          %5441 = vmatpush.bf16.msra.mxu0 %v3656
          %5442 = vmatmul.bf16.gmra.mxu0 %v1550
          %v5443 = vpop.f32.mrf.mxu0
          %v5444 = vadd.f32 %v5431, %v5443
          %v5445 = vpop.f32.mrf.mxu0
          %5446 = vdwg.mxu0
          %5447 = vmatpush.bf16.msra.mxu0 %v3686
          %5448 = vmatpush.bf16.msra.mxu0 %v3684
          %5449 = vmatpush.bf16.msra.mxu0 %v3682
          %5450 = vmatpush.bf16.msra.mxu0 %v3680
          %5451 = vmatpush.bf16.msra.mxu0 %v3678
          %5452 = vmatpush.bf16.msra.mxu0 %v3676
          %5453 = vmatpush.bf16.msra.mxu0 %v3674
          %5454 = vmatpush.bf16.msra.mxu0 %v3672
          %5455 = vmatmul.bf16.gmra.mxu0 %v1551
          %v5456 = vpop.f32.mrf.mxu0
          %v5457 = vadd.f32 %v5444, %v5456
          %v5458 = vpop.f32.mrf.mxu0
          %5459 = vdwg.mxu0
          %5460 = vmatpush.bf16.msra.mxu0 %v3702
          %5461 = vmatpush.bf16.msra.mxu0 %v3700
          %5462 = vmatpush.bf16.msra.mxu0 %v3698
          %5463 = vmatpush.bf16.msra.mxu0 %v3696
          %5464 = vmatpush.bf16.msra.mxu0 %v3694
          %5465 = vmatpush.bf16.msra.mxu0 %v3692
          %5466 = vmatpush.bf16.msra.mxu0 %v3690
          %5467 = vmatpush.bf16.msra.mxu0 %v3688
          %5468 = vmatmul.bf16.gmra.mxu0 %v1552
          %v5469 = vpop.f32.mrf.mxu0
          %v5470 = vadd.f32 %v5457, %v5469
          %v5471 = vpop.f32.mrf.mxu0
          %5472 = vdwg.mxu0
          %5473 = vmatpush.bf16.msra.mxu0 %v3718
          %5474 = vmatpush.bf16.msra.mxu0 %v3716
          %5475 = vmatpush.bf16.msra.mxu0 %v3714
          %5476 = vmatpush.bf16.msra.mxu0 %v3712
          %5477 = vmatpush.bf16.msra.mxu0 %v3710
          %5478 = vmatpush.bf16.msra.mxu0 %v3708
          %5479 = vmatpush.bf16.msra.mxu0 %v3706
          %5480 = vmatpush.bf16.msra.mxu0 %v3704
          %5481 = vmatmul.bf16.gmra.mxu0 %v1553
          %v5482 = vpop.f32.mrf.mxu0
          %v5483 = vadd.f32 %v5470, %v5482
          %v5484 = vpop.f32.mrf.mxu0
          %5485 = vdwg.mxu0
          %5486 = vmatpush.bf16.msra.mxu0 %v3734
          %5487 = vmatpush.bf16.msra.mxu0 %v3732
          %5488 = vmatpush.bf16.msra.mxu0 %v3730
          %5489 = vmatpush.bf16.msra.mxu0 %v3728
          %5490 = vmatpush.bf16.msra.mxu0 %v3726
          %5491 = vmatpush.bf16.msra.mxu0 %v3724
          %5492 = vmatpush.bf16.msra.mxu0 %v3722
          %5493 = vmatpush.bf16.msra.mxu0 %v3720
          %5494 = vmatmul.bf16.gmra.mxu0 %v1554
          %v5495 = vpop.f32.mrf.mxu0
          %v5496 = vadd.f32 %v5483, %v5495
          %v5497 = vpop.f32.mrf.mxu0
          %5498 = vdwg.mxu0
          %5499 = vmatpush.bf16.msra.mxu0 %v3750
          %5500 = vmatpush.bf16.msra.mxu0 %v3748
          %5501 = vmatpush.bf16.msra.mxu0 %v3746
          %5502 = vmatpush.bf16.msra.mxu0 %v3744
          %5503 = vmatpush.bf16.msra.mxu0 %v3742
          %5504 = vmatpush.bf16.msra.mxu0 %v3740
          %5505 = vmatpush.bf16.msra.mxu0 %v3738
          %5506 = vmatpush.bf16.msra.mxu0 %v3736
          %5507 = vmatmul.bf16.gmra.mxu0 %v1555
          %v5508 = vpop.f32.mrf.mxu0
          %v5509 = vadd.f32 %v5496, %v5508
          %v5510 = vpop.f32.mrf.mxu0
          %5511 = vdwg.mxu0
          %5512 = vmatpush.bf16.msra.mxu0 %v3766
          %5513 = vmatpush.bf16.msra.mxu0 %v3764
          %5514 = vmatpush.bf16.msra.mxu0 %v3762
          %5515 = vmatpush.bf16.msra.mxu0 %v3760
          %5516 = vmatpush.bf16.msra.mxu0 %v3758
          %5517 = vmatpush.bf16.msra.mxu0 %v3756
          %5518 = vmatpush.bf16.msra.mxu0 %v3754
          %5519 = vmatpush.bf16.msra.mxu0 %v3752
          %5520 = vmatmul.bf16.gmra.mxu0 %v1556
          %v5521 = vpop.f32.mrf.mxu0
          %v5522 = vadd.f32 %v5509, %v5521
          %v5523 = vpop.f32.mrf.mxu0
          %5524 = vdwg.mxu0
          %5525 = vmatpush.bf16.msra.mxu0 %v3782
          %5526 = vmatpush.bf16.msra.mxu0 %v3780
          %5527 = vmatpush.bf16.msra.mxu0 %v3778
          %5528 = vmatpush.bf16.msra.mxu0 %v3776
          %5529 = vmatpush.bf16.msra.mxu0 %v3774
          %5530 = vmatpush.bf16.msra.mxu0 %v3772
          %5531 = vmatpush.bf16.msra.mxu0 %v3770
          %5532 = vmatpush.bf16.msra.mxu0 %v3768
          %5533 = vmatmul.bf16.gmra.mxu0 %v1557
          %v5534 = vpop.f32.mrf.mxu0
          %v5535 = vadd.f32 %v5522, %v5534
          %v5536 = vpop.f32.mrf.mxu0
          %5537 = vdwg.mxu0
          %5538 = vmatpush.bf16.msra.mxu0 %v3798
          %5539 = vmatpush.bf16.msra.mxu0 %v3796
          %5540 = vmatpush.bf16.msra.mxu0 %v3794
          %5541 = vmatpush.bf16.msra.mxu0 %v3792
          %5542 = vmatpush.bf16.msra.mxu0 %v3790
          %5543 = vmatpush.bf16.msra.mxu0 %v3788
          %5544 = vmatpush.bf16.msra.mxu0 %v3786
          %5545 = vmatpush.bf16.msra.mxu0 %v3784
          %5546 = vmatmul.bf16.gmra.mxu0 %v1558
          %v5547 = vpop.f32.mrf.mxu0
          %v5548 = vadd.f32 %v5535, %v5547
          %v5549 = vpop.f32.mrf.mxu0
          %5550 = vdwg.mxu0
          %5551 = vmatpush.bf16.msra.mxu0 %v3814
          %5552 = vmatpush.bf16.msra.mxu0 %v3812
          %5553 = vmatpush.bf16.msra.mxu0 %v3810
          %5554 = vmatpush.bf16.msra.mxu0 %v3808
          %5555 = vmatpush.bf16.msra.mxu0 %v3806
          %5556 = vmatpush.bf16.msra.mxu0 %v3804
          %5557 = vmatpush.bf16.msra.mxu0 %v3802
          %5558 = vmatpush.bf16.msra.mxu0 %v3800
          %5559 = vmatmul.bf16.gmra.mxu0 %v1559
          %v5560 = vpop.f32.mrf.mxu0
          %v5561 = vadd.f32 %v5548, %v5560
          %v5562 = vpop.f32.mrf.mxu0
          %5563 = vdwg.mxu0
          %5564 = vmatpush.bf16.msra.mxu0 %v3830
          %5565 = vmatpush.bf16.msra.mxu0 %v3828
          %5566 = vmatpush.bf16.msra.mxu0 %v3826
          %5567 = vmatpush.bf16.msra.mxu0 %v3824
          %5568 = vmatpush.bf16.msra.mxu0 %v3822
          %5569 = vmatpush.bf16.msra.mxu0 %v3820
          %5570 = vmatpush.bf16.msra.mxu0 %v3818
          %5571 = vmatpush.bf16.msra.mxu0 %v3816
          %5572 = vmatmul.bf16.gmra.mxu0 %v1560
          %v5573 = vpop.f32.mrf.mxu0
          %v5574 = vadd.f32 %v5561, %v5573
          %v5575 = vpop.f32.mrf.mxu0
          %5576 = vdwg.mxu0
          %5577 = vmatpush.bf16.msra.mxu0 %v3846
          %5578 = vmatpush.bf16.msra.mxu0 %v3844
          %5579 = vmatpush.bf16.msra.mxu0 %v3842
          %5580 = vmatpush.bf16.msra.mxu0 %v3840
          %5581 = vmatpush.bf16.msra.mxu0 %v3838
          %5582 = vmatpush.bf16.msra.mxu0 %v3836
          %5583 = vmatpush.bf16.msra.mxu0 %v3834
          %5584 = vmatpush.bf16.msra.mxu0 %v3832
          %5585 = vmatmul.bf16.gmra.mxu0 %v1561
          %v5586 = vpop.f32.mrf.mxu0
          %v5587 = vadd.f32 %v5574, %v5586
          %v5588 = vpop.f32.mrf.mxu0
          %5589 = vdwg.mxu0
          %5590 = vmatpush.bf16.msra.mxu0 %v3862
          %5591 = vmatpush.bf16.msra.mxu0 %v3860
          %5592 = vmatpush.bf16.msra.mxu0 %v3858
          %5593 = vmatpush.bf16.msra.mxu0 %v3856
          %5594 = vmatpush.bf16.msra.mxu0 %v3854
          %5595 = vmatpush.bf16.msra.mxu0 %v3852
          %5596 = vmatpush.bf16.msra.mxu0 %v3850
          %5597 = vmatpush.bf16.msra.mxu0 %v3848
          %5598 = vmatmul.bf16.gmra.mxu0 %v1562
          %v5599 = vpop.f32.mrf.mxu0
          %v5600 = vadd.f32 %v5587, %v5599
          %v5601 = vpop.f32.mrf.mxu0
          %5602 = vdwg.mxu0
          %5603 = vmatpush.bf16.msra.mxu0 %v3878
          %5604 = vmatpush.bf16.msra.mxu0 %v3876
          %5605 = vmatpush.bf16.msra.mxu0 %v3874
          %5606 = vmatpush.bf16.msra.mxu0 %v3872
          %5607 = vmatpush.bf16.msra.mxu0 %v3870
          %5608 = vmatpush.bf16.msra.mxu0 %v3868
          %5609 = vmatpush.bf16.msra.mxu0 %v3866
          %5610 = vmatpush.bf16.msra.mxu0 %v3864
          %5611 = vmatmul.bf16.gmra.mxu0 %v1563
          %v5612 = vpop.f32.mrf.mxu0
          %v5613 = vadd.f32 %v5600, %v5612
          %v5614 = vpop.f32.mrf.mxu0
          %5615 = vdwg.mxu0
          %5616 = vmatpush.bf16.msra.mxu0 %v3894
          %5617 = vmatpush.bf16.msra.mxu0 %v3892
          %5618 = vmatpush.bf16.msra.mxu0 %v3890
          %5619 = vmatpush.bf16.msra.mxu0 %v3888
          %5620 = vmatpush.bf16.msra.mxu0 %v3886
          %5621 = vmatpush.bf16.msra.mxu0 %v3884
          %5622 = vmatpush.bf16.msra.mxu0 %v3882
          %5623 = vmatpush.bf16.msra.mxu0 %v3880
          %5624 = vmatmul.bf16.gmra.mxu0 %v1564
          %v5625 = vpop.f32.mrf.mxu0
          %v5626 = vadd.f32 %v5613, %v5625
          %v5627 = vpop.f32.mrf.mxu0
          %5628 = vdwg.mxu0
          %5629 = vmatpush.bf16.msra.mxu0 %v3910
          %5630 = vmatpush.bf16.msra.mxu0 %v3908
          %5631 = vmatpush.bf16.msra.mxu0 %v3906
          %5632 = vmatpush.bf16.msra.mxu0 %v3904
          %5633 = vmatpush.bf16.msra.mxu0 %v3902
          %5634 = vmatpush.bf16.msra.mxu0 %v3900
          %5635 = vmatpush.bf16.msra.mxu0 %v3898
          %5636 = vmatpush.bf16.msra.mxu0 %v3896
          %5637 = vmatmul.bf16.gmra.mxu0 %v1565
          %v5638 = vpop.f32.mrf.mxu0
          %v5639 = vadd.f32 %v5626, %v5638
          %v5640 = vpop.f32.mrf.mxu0
          %5641 = vdwg.mxu0
          %5642 = vmatpush.bf16.msra.mxu0 %v3926
          %5643 = vmatpush.bf16.msra.mxu0 %v3924
          %5644 = vmatpush.bf16.msra.mxu0 %v3922
          %5645 = vmatpush.bf16.msra.mxu0 %v3920
          %5646 = vmatpush.bf16.msra.mxu0 %v3918
          %5647 = vmatpush.bf16.msra.mxu0 %v3916
          %5648 = vmatpush.bf16.msra.mxu0 %v3914
          %5649 = vmatpush.bf16.msra.mxu0 %v3912
          %5650 = vmatmul.bf16.gmra.mxu0 %v1566
          %v5651 = vpop.f32.mrf.mxu0
          %v5652 = vadd.f32 %v5639, %v5651
          %v5653 = vpop.f32.mrf.mxu0
          %5654 = vdwg.mxu0
          %5655 = vmatpush.bf16.msra.mxu0 %v3942
          %5656 = vmatpush.bf16.msra.mxu0 %v3940
          %5657 = vmatpush.bf16.msra.mxu0 %v3938
          %5658 = vmatpush.bf16.msra.mxu0 %v3936
          %5659 = vmatpush.bf16.msra.mxu0 %v3934
          %5660 = vmatpush.bf16.msra.mxu0 %v3932
          %5661 = vmatpush.bf16.msra.mxu0 %v3930
          %5662 = vmatpush.bf16.msra.mxu0 %v3928
          %5663 = vmatmul.bf16.gmra.mxu0 %v1567
          %v5664 = vpop.f32.mrf.mxu0
          %v5665 = vadd.f32 %v5652, %v5664
          %v5666 = vpop.f32.mrf.mxu0
          %5667 = vdwg.mxu0
          %5668 = vmatpush.bf16.msra.mxu0 %v3958
          %5669 = vmatpush.bf16.msra.mxu0 %v3956
          %5670 = vmatpush.bf16.msra.mxu0 %v3954
          %5671 = vmatpush.bf16.msra.mxu0 %v3952
          %5672 = vmatpush.bf16.msra.mxu0 %v3950
          %5673 = vmatpush.bf16.msra.mxu0 %v3948
          %5674 = vmatpush.bf16.msra.mxu0 %v3946
          %5675 = vmatpush.bf16.msra.mxu0 %v3944
          %5676 = vmatmul.bf16.gmra.mxu0 %v1568
          %v5677 = vpop.f32.mrf.mxu0
          %v5678 = vadd.f32 %v5665, %v5677
          %v5679 = vpop.f32.mrf.mxu0
          %5680 = vdwg.mxu0
          %5681 = vmatpush.bf16.msra.mxu0 %v3974
          %5682 = vmatpush.bf16.msra.mxu0 %v3972
          %5683 = vmatpush.bf16.msra.mxu0 %v3970
          %5684 = vmatpush.bf16.msra.mxu0 %v3968
          %5685 = vmatpush.bf16.msra.mxu0 %v3966
          %5686 = vmatpush.bf16.msra.mxu0 %v3964
          %5687 = vmatpush.bf16.msra.mxu0 %v3962
          %5688 = vmatpush.bf16.msra.mxu0 %v3960
          %5689 = vmatmul.bf16.gmra.mxu0 %v1569
          %v5690 = vpop.f32.mrf.mxu0
          %v5691 = vadd.f32 %v5678, %v5690
          %v5692 = vpop.f32.mrf.mxu0
          %5693 = vdwg.mxu0
          %5694 = vmatpush.bf16.msra.mxu0 %v3990
          %5695 = vmatpush.bf16.msra.mxu0 %v3988
          %5696 = vmatpush.bf16.msra.mxu0 %v3986
          %5697 = vmatpush.bf16.msra.mxu0 %v3984
          %5698 = vmatpush.bf16.msra.mxu0 %v3982
          %5699 = vmatpush.bf16.msra.mxu0 %v3980
          %5700 = vmatpush.bf16.msra.mxu0 %v3978
          %5701 = vmatpush.bf16.msra.mxu0 %v3976
          %5702 = vmatmul.bf16.gmra.mxu0 %v1570
          %v5703 = vpop.f32.mrf.mxu0
          %v5704 = vadd.f32 %v5691, %v5703
          %v5705 = vpop.f32.mrf.mxu0
          %5706 = vdwg.mxu0
          %5707 = vmatpush.bf16.msra.mxu0 %v4006
          %5708 = vmatpush.bf16.msra.mxu0 %v4004
          %5709 = vmatpush.bf16.msra.mxu0 %v4002
          %5710 = vmatpush.bf16.msra.mxu0 %v4000
          %5711 = vmatpush.bf16.msra.mxu0 %v3998
          %5712 = vmatpush.bf16.msra.mxu0 %v3996
          %5713 = vmatpush.bf16.msra.mxu0 %v3994
          %5714 = vmatpush.bf16.msra.mxu0 %v3992
          %5715 = vmatmul.bf16.gmra.mxu0 %v1571
          %v5716 = vpop.f32.mrf.mxu0
          %v5717 = vadd.f32 %v5704, %v5716
          %v5718 = vpop.f32.mrf.mxu0
          %5719 = vdwg.mxu0
          %5720 = vmatpush.bf16.msra.mxu0 %v4022
          %5721 = vmatpush.bf16.msra.mxu0 %v4020
          %5722 = vmatpush.bf16.msra.mxu0 %v4018
          %5723 = vmatpush.bf16.msra.mxu0 %v4016
          %5724 = vmatpush.bf16.msra.mxu0 %v4014
          %5725 = vmatpush.bf16.msra.mxu0 %v4012
          %5726 = vmatpush.bf16.msra.mxu0 %v4010
          %5727 = vmatpush.bf16.msra.mxu0 %v4008
          %5728 = vmatmul.bf16.gmra.mxu0 %v1572
          %v5729 = vpop.f32.mrf.mxu0
          %v5730 = vadd.f32 %v5717, %v5729
          %v5731 = vpop.f32.mrf.mxu0
          %5732 = vdwg.mxu0
          %5733 = vmatpush.bf16.msra.mxu0 %v4038
          %5734 = vmatpush.bf16.msra.mxu0 %v4036
          %5735 = vmatpush.bf16.msra.mxu0 %v4034
          %5736 = vmatpush.bf16.msra.mxu0 %v4032
          %5737 = vmatpush.bf16.msra.mxu0 %v4030
          %5738 = vmatpush.bf16.msra.mxu0 %v4028
          %5739 = vmatpush.bf16.msra.mxu0 %v4026
          %5740 = vmatpush.bf16.msra.mxu0 %v4024
          %5741 = vmatmul.bf16.gmra.mxu0 %v1573
          %v5742 = vpop.f32.mrf.mxu0
          %v5743 = vadd.f32 %v5730, %v5742
          %v5744 = vpop.f32.mrf.mxu0
          %5745 = vdwg.mxu0
          %5746 = vmatpush.bf16.msra.mxu0 %v4054
          %5747 = vmatpush.bf16.msra.mxu0 %v4052
          %5748 = vmatpush.bf16.msra.mxu0 %v4050
          %5749 = vmatpush.bf16.msra.mxu0 %v4048
          %5750 = vmatpush.bf16.msra.mxu0 %v4046
          %5751 = vmatpush.bf16.msra.mxu0 %v4044
          %5752 = vmatpush.bf16.msra.mxu0 %v4042
          %5753 = vmatpush.bf16.msra.mxu0 %v4040
          %5754 = vmatmul.bf16.gmra.mxu0 %v1574
          %v5755 = vpop.f32.mrf.mxu0
          %v5756 = vadd.f32 %v5743, %v5755
          %v5757 = vpop.f32.mrf.mxu0
          %5758 = vdwg.mxu0
          %5759 = vmatpush.bf16.msra.mxu0 %v4070
          %5760 = vmatpush.bf16.msra.mxu0 %v4068
          %5761 = vmatpush.bf16.msra.mxu0 %v4066
          %5762 = vmatpush.bf16.msra.mxu0 %v4064
          %5763 = vmatpush.bf16.msra.mxu0 %v4062
          %5764 = vmatpush.bf16.msra.mxu0 %v4060
          %5765 = vmatpush.bf16.msra.mxu0 %v4058
          %5766 = vmatpush.bf16.msra.mxu0 %v4056
          %5767 = vmatmul.bf16.gmra.mxu0 %v1575
          %v5768 = vpop.f32.mrf.mxu0
          %v5769 = vadd.f32 %v5756, %v5768
          %v5770 = vpop.f32.mrf.mxu0
          %5771 = vdwg.mxu0
          %5772 = vmatpush.bf16.msra.mxu0 %v4086
          %5773 = vmatpush.bf16.msra.mxu0 %v4084
          %5774 = vmatpush.bf16.msra.mxu0 %v4082
          %5775 = vmatpush.bf16.msra.mxu0 %v4080
          %5776 = vmatpush.bf16.msra.mxu0 %v4078
          %5777 = vmatpush.bf16.msra.mxu0 %v4076
          %5778 = vmatpush.bf16.msra.mxu0 %v4074
          %5779 = vmatpush.bf16.msra.mxu0 %v4072
          %5780 = vmatmul.bf16.gmra.mxu0 %v1576
          %v5781 = vpop.f32.mrf.mxu0
          %v5782 = vadd.f32 %v5769, %v5781
          %v5783 = vpop.f32.mrf.mxu0
          %5784 = vdwg.mxu0
          %5785 = vmatpush.bf16.msra.mxu0 %v4102
          %5786 = vmatpush.bf16.msra.mxu0 %v4100
          %5787 = vmatpush.bf16.msra.mxu0 %v4098
          %5788 = vmatpush.bf16.msra.mxu0 %v4096
          %5789 = vmatpush.bf16.msra.mxu0 %v4094
          %5790 = vmatpush.bf16.msra.mxu0 %v4092
          %5791 = vmatpush.bf16.msra.mxu0 %v4090
          %5792 = vmatpush.bf16.msra.mxu0 %v4088
          %5793 = vmatmul.bf16.gmra.mxu0 %v1577
          %v5794 = vpop.f32.mrf.mxu0
          %v5795 = vadd.f32 %v5782, %v5794
          %v5796 = vpop.f32.mrf.mxu0
          %5797 = vdwg.mxu0
          %5798 = vmatpush.bf16.msra.mxu0 %v4118
          %5799 = vmatpush.bf16.msra.mxu0 %v4116
          %5800 = vmatpush.bf16.msra.mxu0 %v4114
          %5801 = vmatpush.bf16.msra.mxu0 %v4112
          %5802 = vmatpush.bf16.msra.mxu0 %v4110
          %5803 = vmatpush.bf16.msra.mxu0 %v4108
          %5804 = vmatpush.bf16.msra.mxu0 %v4106
          %5805 = vmatpush.bf16.msra.mxu0 %v4104
          %5806 = vmatmul.bf16.gmra.mxu0 %v1578
          %v5807 = vpop.f32.mrf.mxu0
          %v5808 = vadd.f32 %v5795, %v5807
          %v5809 = vpop.f32.mrf.mxu0
          %5810 = vdwg.mxu0
          %5811 = vmatpush.bf16.msra.mxu0 %v4134
          %5812 = vmatpush.bf16.msra.mxu0 %v4132
          %5813 = vmatpush.bf16.msra.mxu0 %v4130
          %5814 = vmatpush.bf16.msra.mxu0 %v4128
          %5815 = vmatpush.bf16.msra.mxu0 %v4126
          %5816 = vmatpush.bf16.msra.mxu0 %v4124
          %5817 = vmatpush.bf16.msra.mxu0 %v4122
          %5818 = vmatpush.bf16.msra.mxu0 %v4120
          %5819 = vmatmul.bf16.gmra.mxu0 %v1579
          %v5820 = vpop.f32.mrf.mxu0
          %v5821 = vadd.f32 %v5808, %v5820
          %v5822 = vpop.f32.mrf.mxu0
          %5823 = vdwg.mxu0
          %5824 = vmatpush.bf16.msra.mxu0 %v4150
          %5825 = vmatpush.bf16.msra.mxu0 %v4148
          %5826 = vmatpush.bf16.msra.mxu0 %v4146
          %5827 = vmatpush.bf16.msra.mxu0 %v4144
          %5828 = vmatpush.bf16.msra.mxu0 %v4142
          %5829 = vmatpush.bf16.msra.mxu0 %v4140
          %5830 = vmatpush.bf16.msra.mxu0 %v4138
          %5831 = vmatpush.bf16.msra.mxu0 %v4136
          %5832 = vmatmul.bf16.gmra.mxu0 %v1580
          %v5833 = vpop.f32.mrf.mxu0
          %v5834 = vadd.f32 %v5821, %v5833
          %v5835 = vpop.f32.mrf.mxu0
          %5836 = vdwg.mxu0
          %5837 = vmatpush.bf16.msra.mxu0 %v4166
          %5838 = vmatpush.bf16.msra.mxu0 %v4164
          %5839 = vmatpush.bf16.msra.mxu0 %v4162
          %5840 = vmatpush.bf16.msra.mxu0 %v4160
          %5841 = vmatpush.bf16.msra.mxu0 %v4158
          %5842 = vmatpush.bf16.msra.mxu0 %v4156
          %5843 = vmatpush.bf16.msra.mxu0 %v4154
          %5844 = vmatpush.bf16.msra.mxu0 %v4152
          %5845 = vmatmul.bf16.gmra.mxu0 %v1581
          %v5846 = vpop.f32.mrf.mxu0
          %v5847 = vadd.f32 %v5834, %v5846
          %v5848 = vpop.f32.mrf.mxu0
          %5849 = vdwg.mxu0
          %5850 = vmatpush.bf16.msra.mxu0 %v4182
          %5851 = vmatpush.bf16.msra.mxu0 %v4180
          %5852 = vmatpush.bf16.msra.mxu0 %v4178
          %5853 = vmatpush.bf16.msra.mxu0 %v4176
          %5854 = vmatpush.bf16.msra.mxu0 %v4174
          %5855 = vmatpush.bf16.msra.mxu0 %v4172
          %5856 = vmatpush.bf16.msra.mxu0 %v4170
          %5857 = vmatpush.bf16.msra.mxu0 %v4168
          %5858 = vmatmul.bf16.gmra.mxu0 %v1582
          %v5859 = vpop.f32.mrf.mxu0
          %v5860 = vadd.f32 %v5847, %v5859
          %v5861 = vpop.f32.mrf.mxu0
          %5862 = vdwg.mxu0
          %v5863 = vmax.f32 %v5340, 0.0
          %v5864 = vmax.f32 %v5860, 0.0
          %v5865 = vld [vmem:[#allocation9] sm:$0xff]
          %v5866 = vld [vmem:[#allocation9 + $0x8] sm:$0xff]
          %v5867 = vld [vmem:[#allocation9 + $0x10] sm:$0xff]
          %v5868 = vld [vmem:[#allocation9 + $0x18] sm:$0xff]
          %v5869 = vld [vmem:[#allocation9 + $0x20] sm:$0xff]
          %v5870 = vld [vmem:[#allocation9 + $0x28] sm:$0xff]
          %v5871 = vld [vmem:[#allocation9 + $0x30] sm:$0xff]
          %v5872 = vld [vmem:[#allocation9 + $0x38] sm:$0xff]
          %v5873 = vld [vmem:[#allocation9 + $0x40] sm:$0xff]
          %v5874 = vld [vmem:[#allocation9 + $0x48] sm:$0xff]
          %v5875 = vld [vmem:[#allocation9 + $0x50] sm:$0xff]
          %v5876 = vld [vmem:[#allocation9 + $0x58] sm:$0xff]
          %v5877 = vld [vmem:[#allocation9 + $0x60] sm:$0xff]
          %v5878 = vld [vmem:[#allocation9 + $0x68] sm:$0xff]
          %v5879 = vld [vmem:[#allocation9 + $0x70] sm:$0xff]
          %v5880 = vld [vmem:[#allocation9 + $0x78] sm:$0xff]
          %v5881 = vld [vmem:[#allocation9 + $0x80] sm:$0xff]
          %v5882 = vld [vmem:[#allocation9 + $0x88] sm:$0xff]
          %v5883 = vld [vmem:[#allocation9 + $0x90] sm:$0xff]
          %v5884 = vld [vmem:[#allocation9 + $0x98] sm:$0xff]
          %v5885 = vld [vmem:[#allocation9 + $0xa0] sm:$0xff]
          %v5886 = vld [vmem:[#allocation9 + $0xa8] sm:$0xff]
          %v5887 = vld [vmem:[#allocation9 + $0xb0] sm:$0xff]
          %v5888 = vld [vmem:[#allocation9 + $0xb8] sm:$0xff]
          %v5889 = vld [vmem:[#allocation9 + $0xc0] sm:$0xff]
          %v5890 = vld [vmem:[#allocation9 + $0xc8] sm:$0xff]
          %v5891 = vld [vmem:[#allocation9 + $0xd0] sm:$0xff]
          %v5892 = vld [vmem:[#allocation9 + $0xd8] sm:$0xff]
          %v5893 = vld [vmem:[#allocation9 + $0xe0] sm:$0xff]
          %v5894 = vld [vmem:[#allocation9 + $0xe8] sm:$0xff]
          %v5895 = vld [vmem:[#allocation9 + $0xf0] sm:$0xff]
          %v5896 = vld [vmem:[#allocation9 + $0xf8] sm:$0xff]
          %v5897 = vld [vmem:[#allocation11] sm:$0x1]
          %v5899 = vperm.slane %v5897, 0
          %5901 = vmatpush.msra.mxu0 %v5880
          %5902 = vmatpush.msra.mxu0 %v5879
          %5903 = vmatpush.msra.mxu0 %v5878
          %5904 = vmatpush.msra.mxu0 %v5877
          %5905 = vmatpush.msra.mxu0 %v5876
          %5906 = vmatpush.msra.mxu0 %v5875
          %5907 = vmatpush.msra.mxu0 %v5874
          %5908 = vmatpush.msra.mxu0 %v5873
          %5909 = vmatpush.msra.mxu0 %v5872
          %5910 = vmatpush.msra.mxu0 %v5871
          %5911 = vmatpush.msra.mxu0 %v5870
          %5912 = vmatpush.msra.mxu0 %v5869
          %5913 = vmatpush.msra.mxu0 %v5868
          %5914 = vmatpush.msra.mxu0 %v5867
          %5915 = vmatpush.msra.mxu0 %v5866
          %5916 = vmatpush.msra.mxu0 %v5865
          %5917 = vmatmul.f32.gmra.mxu0 %v5863
          %v5918 = vpop.f32.mrf.mxu0
          %v5919 = vadd.f32 %v5899, %v5918
          %5920 = vdwg.mxu0
          %5921 = vmatpush.msra.mxu0 %v5896
          %5922 = vmatpush.msra.mxu0 %v5895
          %5923 = vmatpush.msra.mxu0 %v5894
          %5924 = vmatpush.msra.mxu0 %v5893
          %5925 = vmatpush.msra.mxu0 %v5892
          %5926 = vmatpush.msra.mxu0 %v5891
          %5927 = vmatpush.msra.mxu0 %v5890
          %5928 = vmatpush.msra.mxu0 %v5889
          %5929 = vmatpush.msra.mxu0 %v5888
          %5930 = vmatpush.msra.mxu0 %v5887
          %5931 = vmatpush.msra.mxu0 %v5886
          %5932 = vmatpush.msra.mxu0 %v5885
          %5933 = vmatpush.msra.mxu0 %v5884
          %5934 = vmatpush.msra.mxu0 %v5883
          %5935 = vmatpush.msra.mxu0 %v5882
          %5936 = vmatpush.msra.mxu0 %v5881
          %5937 = vmatmul.f32.gmra.mxu0 %v5864
          %v5938 = vpop.f32.mrf.mxu0
          %v5939 = vadd.f32 %v5919, %v5938
          %5940 = vdwg.mxu0
          %v5941 = vmax.f32 %v5939, 0.0
          %v5942 = vld [vmem:[#allocation12] sm:$0xff]
          %v5943 = vld [vmem:[#allocation12 + $0x8] sm:$0xff]
          %v5944 = vld [vmem:[#allocation12 + $0x10] sm:$0xff]
          %v5945 = vld [vmem:[#allocation12 + $0x18] sm:$0xff]
          %v5946 = vld [vmem:[#allocation12 + $0x20] sm:$0xff]
          %v5947 = vld [vmem:[#allocation12 + $0x28] sm:$0xff]
          %v5948 = vld [vmem:[#allocation12 + $0x30] sm:$0xff]
          %v5949 = vld [vmem:[#allocation12 + $0x38] sm:$0xff]
          %v5950 = vld [vmem:[#allocation12 + $0x40] sm:$0xff]
          %v5951 = vld [vmem:[#allocation12 + $0x48] sm:$0xff]
          %v5952 = vld [vmem:[#allocation12 + $0x50] sm:$0xff]
          %v5953 = vld [vmem:[#allocation12 + $0x58] sm:$0xff]
          %v5954 = vld [vmem:[#allocation12 + $0x60] sm:$0xff]
          %v5955 = vld [vmem:[#allocation12 + $0x68] sm:$0xff]
          %v5956 = vld [vmem:[#allocation12 + $0x70] sm:$0xff]
          %v5957 = vld [vmem:[#allocation12 + $0x78] sm:$0xff]
          %v5958 = vld [vmem:[#allocation14] sm:$0x1]
          %v5960 = vperm.slane %v5958, 0
          %5962 = vmatpush.msra.mxu0 %v5957
          %5963 = vmatpush.msra.mxu0 %v5956
          %5964 = vmatpush.msra.mxu0 %v5955
          %5965 = vmatpush.msra.mxu0 %v5954
          %5966 = vmatpush.msra.mxu0 %v5953
          %5967 = vmatpush.msra.mxu0 %v5952
          %5968 = vmatpush.msra.mxu0 %v5951
          %5969 = vmatpush.msra.mxu0 %v5950
          %5970 = vmatpush.msra.mxu0 %v5949
          %5971 = vmatpush.msra.mxu0 %v5948
          %5972 = vmatpush.msra.mxu0 %v5947
          %5973 = vmatpush.msra.mxu0 %v5946
          %5974 = vmatpush.msra.mxu0 %v5945
          %5975 = vmatpush.msra.mxu0 %v5944
          %5976 = vmatpush.msra.mxu0 %v5943
          %5977 = vmatpush.msra.mxu0 %v5942
          %5978 = vmatmul.f32.gmra.mxu0 %v5941
          %v5979 = vpop.f32.mrf.mxu0
          %v5980 = vadd.f32 %v5960, %v5979
          %5981 = vdwg.mxu0
          %vm5982 = vcmask 523264
          %5983 = vst.msk [vmem:[#allocation26] sm:$0xff] %vm5982, %v5980
          %5985 = vrot.lane.b32.xlu0 %v5980, 64
          %v5986 = vpop.permute.xlu0 %5985
          %5988 = vst.msk [vmem:[#allocation28] sm:$0xff] %vm5982, %v5986
          %v5989 = vld [vmem:[#allocation3] sm:$0xff]
          %v5990 = vmul.f32 %v5980, 0.5
          %v5991 = vmul.f32 %v5990, 1.442695
          %v5992 = vpow.pop %v5991
          %5994 = vrot.lane.b32.xlu0 %v5992, 64
          %v5995 = vpop.permute.xlu0 %5994
          %v5997 = vmul.f32 %v5989, %v5995
          %v5998 = vadd.f32 %v5997, %v5980
          %v5999 = vld [vmem:[#allocation15] sm:$0xff]
          %v6000 = vld [vmem:[#allocation15 + $0x8] sm:$0xff]
          %v6001 = vld [vmem:[#allocation15 + $0x10] sm:$0xff]
          %v6002 = vld [vmem:[#allocation15 + $0x18] sm:$0xff]
          %v6003 = vld [vmem:[#allocation15 + $0x20] sm:$0xff]
          %v6004 = vld [vmem:[#allocation15 + $0x28] sm:$0xff]
          %v6005 = vld [vmem:[#allocation15 + $0x30] sm:$0xff]
          %v6006 = vld [vmem:[#allocation15 + $0x38] sm:$0xff]
          %v6007 = vld [vmem:[#allocation17] sm:$0x1]
          %v6009 = vperm.slane %v6007, 0
          %v6012 = vsel %vm5982, %v5998, 0
          %6014 = vmatpush.msra.mxu0 0.0
          %6015 = vmatpush.msra.mxu0 0.0
          %6016 = vmatpush.msra.mxu0 0.0
          %6017 = vmatpush.msra.mxu0 0.0
          %6018 = vmatpush.msra.mxu0 0.0
          %6019 = vmatpush.msra.mxu0 0.0
          %6020 = vmatpush.msra.mxu0 0.0
          %6021 = vmatpush.msra.mxu0 0.0
          %6022 = vmatpush.msra.mxu0 %v6006
          %6023 = vmatpush.msra.mxu0 %v6005
          %6024 = vmatpush.msra.mxu0 %v6004
          %6025 = vmatpush.msra.mxu0 %v6003
          %6026 = vmatpush.msra.mxu0 %v6002
          %6027 = vmatpush.msra.mxu0 %v6001
          %6028 = vmatpush.msra.mxu0 %v6000
          %6029 = vmatpush.msra.mxu0 %v5999
          %6030 = vmatmul.f32.gmra.mxu0 %v6012
          %v6031 = vpop.f32.mrf.mxu0
          %v6032 = vadd.f32 %v6009, %v6031
          %6033 = vdwg.mxu0
          %v6034 = vld [vmem:[%s1] sm:$0xff]
          %v6035 = vld [vmem:[#allocation18] sm:$0x1]
          %6037 = vset.pattern.permute.xlu0 0
          %6038 = vperm.xlu0 %6037, %v6034
          %v6039 = vpop.permute.xlu0 %6038
          %v6042 = vperm.slane %v6035, 0
          %v6044 = vmul.f32 %v6039, %v6042
          %v6045 = vadd.f32 %v6032, %v6044
          %v6046 = vmax.f32 %v6045, 0.0
          %v6047 = vld [vmem:[#allocation20] sm:$0xff]
          %v6048 = vld [vmem:[#allocation20 + $0x8] sm:$0xff]
          %v6049 = vld [vmem:[#allocation20 + $0x10] sm:$0xff]
          %v6050 = vld [vmem:[#allocation20 + $0x18] sm:$0xff]
          %v6051 = vld [vmem:[#allocation20 + $0x20] sm:$0xff]
          %v6052 = vld [vmem:[#allocation20 + $0x28] sm:$0xff]
          %v6053 = vld [vmem:[#allocation20 + $0x30] sm:$0xff]
          %v6054 = vld [vmem:[#allocation20 + $0x38] sm:$0xff]
          %v6055 = vld [vmem:[#allocation20 + $0x40] sm:$0xff]
          %v6056 = vld [vmem:[#allocation20 + $0x48] sm:$0xff]
          %v6057 = vld [vmem:[#allocation20 + $0x50] sm:$0xff]
          %v6058 = vld [vmem:[#allocation20 + $0x58] sm:$0xff]
          %v6059 = vld [vmem:[#allocation20 + $0x60] sm:$0xff]
          %v6060 = vld [vmem:[#allocation20 + $0x68] sm:$0xff]
          %v6061 = vld [vmem:[#allocation20 + $0x70] sm:$0xff]
          %v6062 = vld [vmem:[#allocation20 + $0x78] sm:$0xff]
          %v6063 = vld [vmem:[#allocation20 + $0x80] sm:$0xff]
          %v6064 = vld [vmem:[#allocation20 + $0x88] sm:$0xff]
          %v6065 = vld [vmem:[#allocation20 + $0x90] sm:$0xff]
          %v6066 = vld [vmem:[#allocation20 + $0x98] sm:$0xff]
          %v6067 = vld [vmem:[#allocation20 + $0xa0] sm:$0xff]
          %v6068 = vld [vmem:[#allocation20 + $0xa8] sm:$0xff]
          %v6069 = vld [vmem:[#allocation20 + $0xb0] sm:$0xff]
          %v6070 = vld [vmem:[#allocation20 + $0xb8] sm:$0xff]
          %v6071 = vld [vmem:[#allocation20 + $0xc0] sm:$0xff]
          %v6072 = vld [vmem:[#allocation20 + $0xc8] sm:$0xff]
          %v6073 = vld [vmem:[#allocation20 + $0xd0] sm:$0xff]
          %v6074 = vld [vmem:[#allocation20 + $0xd8] sm:$0xff]
          %v6075 = vld [vmem:[#allocation20 + $0xe0] sm:$0xff]
          %v6076 = vld [vmem:[#allocation20 + $0xe8] sm:$0xff]
          %v6077 = vld [vmem:[#allocation20 + $0xf0] sm:$0xff]
          %v6078 = vld [vmem:[#allocation20 + $0xf8] sm:$0xff]
          %v6079 = vld [vmem:[#allocation21] sm:$0x3]
          %v6081 = vperm.slane %v6079, 0
          %v6082 = vperm.slane %v6079, 1
          %6085 = vmatpush.msra.mxu0 %v6077
          %6086 = vmatpush.msra.mxu0 %v6075
          %6087 = vmatpush.msra.mxu0 %v6073
          %6088 = vmatpush.msra.mxu0 %v6071
          %6089 = vmatpush.msra.mxu0 %v6069
          %6090 = vmatpush.msra.mxu0 %v6067
          %6091 = vmatpush.msra.mxu0 %v6065
          %6092 = vmatpush.msra.mxu0 %v6063
          %6093 = vmatpush.msra.mxu0 %v6061
          %6094 = vmatpush.msra.mxu0 %v6059
          %6095 = vmatpush.msra.mxu0 %v6057
          %6096 = vmatpush.msra.mxu0 %v6055
          %6097 = vmatpush.msra.mxu0 %v6053
          %6098 = vmatpush.msra.mxu0 %v6051
          %6099 = vmatpush.msra.mxu0 %v6049
          %6100 = vmatpush.msra.mxu0 %v6047
          %6101 = vmatmul.f32.gmra.mxu0 %v6046
          %v6102 = vpop.f32.mrf.mxu0
          %v6103 = vadd.f32 %v6081, %v6102
          %6104 = vdwg.mxu0
          %6105 = vmatpush.msra.mxu0 %v6078
          %6106 = vmatpush.msra.mxu0 %v6076
          %6107 = vmatpush.msra.mxu0 %v6074
          %6108 = vmatpush.msra.mxu0 %v6072
          %6109 = vmatpush.msra.mxu0 %v6070
          %6110 = vmatpush.msra.mxu0 %v6068
          %6111 = vmatpush.msra.mxu0 %v6066
          %6112 = vmatpush.msra.mxu0 %v6064
          %6113 = vmatpush.msra.mxu0 %v6062
          %6114 = vmatpush.msra.mxu0 %v6060
          %6115 = vmatpush.msra.mxu0 %v6058
          %6116 = vmatpush.msra.mxu0 %v6056
          %6117 = vmatpush.msra.mxu0 %v6054
          %6118 = vmatpush.msra.mxu0 %v6052
          %6119 = vmatpush.msra.mxu0 %v6050
          %6120 = vmatpush.msra.mxu0 %v6048
          %6121 = vmatmul.f32.gmra.mxu0 %v6046
          %v6122 = vpop.f32.mrf.mxu0
          %v6123 = vadd.f32 %v6082, %v6122
          %6124 = vdwg.mxu0
          %v6125 = vmax.f32 %v6103, 0.0
          %v6126 = vmax.f32 %v6123, 0.0
          %v6127 = vpack.c.bf16 %v6126, %v6125
          %6128 = vst [vmem:[#allocation2] sm:$0xff] %v6127
        $region144: #{vae_forward.1} parent=83 // pred_fallthru
          _
        %v6129 = vld [vmem:[#allocation2] sm:$0xff]
        %v6130 = vld [vmem:[%s741] sm:$0xff]
        %v6131 = vld [vmem:[%s741 + $0x8] sm:$0xff]
        %v6132 = vld [vmem:[%s741 + $0x10] sm:$0xff]
        %v6133 = vld [vmem:[%s741 + $0x18] sm:$0xff]
        %v6134 = vld [vmem:[%s741 + $0x20] sm:$0xff]
        %v6135 = vld [vmem:[%s741 + $0x28] sm:$0xff]
        %v6136 = vld [vmem:[%s741 + $0x30] sm:$0xff]
        %v6137 = vld [vmem:[%s741 + $0x38] sm:$0xff]
        %v6138 = vld [vmem:[%s741 + $0x40] sm:$0xff]
        %v6139 = vld [vmem:[%s741 + $0x48] sm:$0xff]
        %v6140 = vld [vmem:[%s741 + $0x50] sm:$0xff]
        %v6141 = vld [vmem:[%s741 + $0x58] sm:$0xff]
        %v6142 = vld [vmem:[%s741 + $0x60] sm:$0xff]
        %v6143 = vld [vmem:[%s741 + $0x68] sm:$0xff]
        %v6144 = vld [vmem:[%s741 + $0x70] sm:$0xff]
        %v6145 = vld [vmem:[%s741 + $0x78] sm:$0xff]
        %v6146 = vld [vmem:[%s741 + $0x80] sm:$0xff]
        %v6147 = vld [vmem:[%s741 + $0x88] sm:$0xff]
        %v6148 = vld [vmem:[%s741 + $0x90] sm:$0xff]
        %v6149 = vld [vmem:[%s741 + $0x98] sm:$0xff]
        %v6150 = vld [vmem:[%s741 + $0xa0] sm:$0xff]
        %v6151 = vld [vmem:[%s741 + $0xa8] sm:$0xff]
        %v6152 = vld [vmem:[%s741 + $0xb0] sm:$0xff]
        %v6153 = vld [vmem:[%s741 + $0xb8] sm:$0xff]
        %v6154 = vld [vmem:[%s741 + $0xc0] sm:$0xff]
        %v6155 = vld [vmem:[%s741 + $0xc8] sm:$0xff]
        %v6156 = vld [vmem:[%s741 + $0xd0] sm:$0xff]
        %v6157 = vld [vmem:[%s741 + $0xd8] sm:$0xff]
        %v6158 = vld [vmem:[%s741 + $0xe0] sm:$0xff]
        %v6159 = vld [vmem:[%s741 + $0xe8] sm:$0xff]
        %v6160 = vld [vmem:[%s741 + $0xf0] sm:$0xff]
        %v6161 = vld [vmem:[%s741 + $0xf8] sm:$0xff]
        %v6162 = vld [vmem:[%s741 + $0x100] sm:$0xff]
        %v6163 = vld [vmem:[%s741 + $0x108] sm:$0xff]
        %v6164 = vld [vmem:[%s741 + $0x110] sm:$0xff]
        %v6165 = vld [vmem:[%s741 + $0x118] sm:$0xff]
        %v6166 = vld [vmem:[%s741 + $0x120] sm:$0xff]
        %v6167 = vld [vmem:[%s741 + $0x128] sm:$0xff]
        %v6168 = vld [vmem:[%s741 + $0x130] sm:$0xff]
        %v6169 = vld [vmem:[%s741 + $0x138] sm:$0xff]
        %v6170 = vld [vmem:[%s741 + $0x140] sm:$0xff]
        %v6171 = vld [vmem:[%s741 + $0x148] sm:$0xff]
        %v6172 = vld [vmem:[%s741 + $0x150] sm:$0xff]
        %v6173 = vld [vmem:[%s741 + $0x158] sm:$0xff]
        %v6174 = vld [vmem:[%s741 + $0x160] sm:$0xff]
        %v6175 = vld [vmem:[%s741 + $0x168] sm:$0xff]
        %v6176 = vld [vmem:[%s741 + $0x170] sm:$0xff]
        %v6177 = vld [vmem:[%s741 + $0x178] sm:$0xff]
        %v6178 = vld [vmem:[%s741 + $0x180] sm:$0xff]
        %v6179 = vld [vmem:[%s741 + $0x188] sm:$0xff]
        %v6180 = vld [vmem:[%s741 + $0x190] sm:$0xff]
        %v6181 = vld [vmem:[%s741 + $0x198] sm:$0xff]
        %v6182 = vld [vmem:[%s741 + $0x1a0] sm:$0xff]
        %v6183 = vld [vmem:[%s741 + $0x1a8] sm:$0xff]
        %v6184 = vld [vmem:[%s741 + $0x1b0] sm:$0xff]
        %v6185 = vld [vmem:[%s741 + $0x1b8] sm:$0xff]
        %v6186 = vld [vmem:[%s741 + $0x1c0] sm:$0xff]
        %v6187 = vld [vmem:[%s741 + $0x1c8] sm:$0xff]
        %v6188 = vld [vmem:[%s741 + $0x1d0] sm:$0xff]
        %v6189 = vld [vmem:[%s741 + $0x1d8] sm:$0xff]
        %v6190 = vld [vmem:[%s741 + $0x1e0] sm:$0xff]
        %v6191 = vld [vmem:[%s741 + $0x1e8] sm:$0xff]
        %v6192 = vld [vmem:[%s741 + $0x1f0] sm:$0xff]
        %v6193 = vld [vmem:[%s741 + $0x1f8] sm:$0xff]
        %v6194 = vld [vmem:[%s751] sm:$0xf]
        %v6196 = vperm.slane %v6194, 0
        %v6197 = vperm.slane %v6194, 1
        %v6198 = vperm.slane %v6194, 2
        %v6199 = vperm.slane %v6194, 3
        %v6205 = vunpack.c.l.b16 %v6129
        %v6206 = vunpack.c.h.b16 %v6129
        %v6207 = vpack.c.b16 %v6205, %v6205
        %v6208 = vpack.c.b16 %v6206, %v6206
        %v6275 = vunpack.c.l.b16 %v6130
        %v6276 = vunpack.c.h.b16 %v6130
        %v6277 = vunpack.c.l.b16 %v6131
        %v6278 = vunpack.c.h.b16 %v6131
        %v6279 = vunpack.c.l.b16 %v6132
        %v6280 = vunpack.c.h.b16 %v6132
        %v6281 = vunpack.c.l.b16 %v6133
        %v6282 = vunpack.c.h.b16 %v6133
        %v6283 = vunpack.c.l.b16 %v6134
        %v6284 = vunpack.c.h.b16 %v6134
        %v6285 = vunpack.c.l.b16 %v6135
        %v6286 = vunpack.c.h.b16 %v6135
        %v6287 = vunpack.c.l.b16 %v6136
        %v6288 = vunpack.c.h.b16 %v6136
        %v6289 = vunpack.c.l.b16 %v6137
        %v6290 = vunpack.c.h.b16 %v6137
        %v6291 = vunpack.c.l.b16 %v6138
        %v6292 = vunpack.c.h.b16 %v6138
        %v6293 = vunpack.c.l.b16 %v6139
        %v6294 = vunpack.c.h.b16 %v6139
        %v6295 = vunpack.c.l.b16 %v6140
        %v6296 = vunpack.c.h.b16 %v6140
        %v6297 = vunpack.c.l.b16 %v6141
        %v6298 = vunpack.c.h.b16 %v6141
        %v6299 = vunpack.c.l.b16 %v6142
        %v6300 = vunpack.c.h.b16 %v6142
        %v6301 = vunpack.c.l.b16 %v6143
        %v6302 = vunpack.c.h.b16 %v6143
        %v6303 = vunpack.c.l.b16 %v6144
        %v6304 = vunpack.c.h.b16 %v6144
        %v6305 = vunpack.c.l.b16 %v6145
        %v6306 = vunpack.c.h.b16 %v6145
        %v6307 = vunpack.c.l.b16 %v6146
        %v6308 = vunpack.c.h.b16 %v6146
        %v6309 = vunpack.c.l.b16 %v6147
        %v6310 = vunpack.c.h.b16 %v6147
        %v6311 = vunpack.c.l.b16 %v6148
        %v6312 = vunpack.c.h.b16 %v6148
        %v6313 = vunpack.c.l.b16 %v6149
        %v6314 = vunpack.c.h.b16 %v6149
        %v6315 = vunpack.c.l.b16 %v6150
        %v6316 = vunpack.c.h.b16 %v6150
        %v6317 = vunpack.c.l.b16 %v6151
        %v6318 = vunpack.c.h.b16 %v6151
        %v6319 = vunpack.c.l.b16 %v6152
        %v6320 = vunpack.c.h.b16 %v6152
        %v6321 = vunpack.c.l.b16 %v6153
        %v6322 = vunpack.c.h.b16 %v6153
        %v6323 = vunpack.c.l.b16 %v6154
        %v6324 = vunpack.c.h.b16 %v6154
        %v6325 = vunpack.c.l.b16 %v6155
        %v6326 = vunpack.c.h.b16 %v6155
        %v6327 = vunpack.c.l.b16 %v6156
        %v6328 = vunpack.c.h.b16 %v6156
        %v6329 = vunpack.c.l.b16 %v6157
        %v6330 = vunpack.c.h.b16 %v6157
        %v6331 = vunpack.c.l.b16 %v6158
        %v6332 = vunpack.c.h.b16 %v6158
        %v6333 = vunpack.c.l.b16 %v6159
        %v6334 = vunpack.c.h.b16 %v6159
        %v6335 = vunpack.c.l.b16 %v6160
        %v6336 = vunpack.c.h.b16 %v6160
        %v6337 = vunpack.c.l.b16 %v6161
        %v6338 = vunpack.c.h.b16 %v6161
        %v6339 = vunpack.c.l.b16 %v6162
        %v6340 = vunpack.c.h.b16 %v6162
        %v6341 = vunpack.c.l.b16 %v6163
        %v6342 = vunpack.c.h.b16 %v6163
        %v6343 = vunpack.c.l.b16 %v6164
        %v6344 = vunpack.c.h.b16 %v6164
        %v6345 = vunpack.c.l.b16 %v6165
        %v6346 = vunpack.c.h.b16 %v6165
        %v6347 = vunpack.c.l.b16 %v6166
        %v6348 = vunpack.c.h.b16 %v6166
        %v6349 = vunpack.c.l.b16 %v6167
        %v6350 = vunpack.c.h.b16 %v6167
        %v6351 = vunpack.c.l.b16 %v6168
        %v6352 = vunpack.c.h.b16 %v6168
        %v6353 = vunpack.c.l.b16 %v6169
        %v6354 = vunpack.c.h.b16 %v6169
        %v6355 = vunpack.c.l.b16 %v6170
        %v6356 = vunpack.c.h.b16 %v6170
        %v6357 = vunpack.c.l.b16 %v6171
        %v6358 = vunpack.c.h.b16 %v6171
        %v6359 = vunpack.c.l.b16 %v6172
        %v6360 = vunpack.c.h.b16 %v6172
        %v6361 = vunpack.c.l.b16 %v6173
        %v6362 = vunpack.c.h.b16 %v6173
        %v6363 = vunpack.c.l.b16 %v6174
        %v6364 = vunpack.c.h.b16 %v6174
        %v6365 = vunpack.c.l.b16 %v6175
        %v6366 = vunpack.c.h.b16 %v6175
        %v6367 = vunpack.c.l.b16 %v6176
        %v6368 = vunpack.c.h.b16 %v6176
        %v6369 = vunpack.c.l.b16 %v6177
        %v6370 = vunpack.c.h.b16 %v6177
        %v6371 = vunpack.c.l.b16 %v6178
        %v6372 = vunpack.c.h.b16 %v6178
        %v6373 = vunpack.c.l.b16 %v6179
        %v6374 = vunpack.c.h.b16 %v6179
        %v6375 = vunpack.c.l.b16 %v6180
        %v6376 = vunpack.c.h.b16 %v6180
        %v6377 = vunpack.c.l.b16 %v6181
        %v6378 = vunpack.c.h.b16 %v6181
        %v6379 = vunpack.c.l.b16 %v6182
        %v6380 = vunpack.c.h.b16 %v6182
        %v6381 = vunpack.c.l.b16 %v6183
        %v6382 = vunpack.c.h.b16 %v6183
        %v6383 = vunpack.c.l.b16 %v6184
        %v6384 = vunpack.c.h.b16 %v6184
        %v6385 = vunpack.c.l.b16 %v6185
        %v6386 = vunpack.c.h.b16 %v6185
        %v6387 = vunpack.c.l.b16 %v6186
        %v6388 = vunpack.c.h.b16 %v6186
        %v6389 = vunpack.c.l.b16 %v6187
        %v6390 = vunpack.c.h.b16 %v6187
        %v6391 = vunpack.c.l.b16 %v6188
        %v6392 = vunpack.c.h.b16 %v6188
        %v6393 = vunpack.c.l.b16 %v6189
        %v6394 = vunpack.c.h.b16 %v6189
        %v6395 = vunpack.c.l.b16 %v6190
        %v6396 = vunpack.c.h.b16 %v6190
        %v6397 = vunpack.c.l.b16 %v6191
        %v6398 = vunpack.c.h.b16 %v6191
        %v6399 = vunpack.c.l.b16 %v6192
        %v6400 = vunpack.c.h.b16 %v6192
        %v6401 = vunpack.c.l.b16 %v6193
        %v6402 = vunpack.c.h.b16 %v6193
        %v6403 = vpack.c.b16 %v6279, %v6275
        %v6404 = vpack.c.b16 %v6280, %v6276
        %v6405 = vpack.c.b16 %v6281, %v6277
        %v6406 = vpack.c.b16 %v6282, %v6278
        %v6407 = vpack.c.b16 %v6287, %v6283
        %v6408 = vpack.c.b16 %v6288, %v6284
        %v6409 = vpack.c.b16 %v6289, %v6285
        %v6410 = vpack.c.b16 %v6290, %v6286
        %v6411 = vpack.c.b16 %v6295, %v6291
        %v6412 = vpack.c.b16 %v6296, %v6292
        %v6413 = vpack.c.b16 %v6297, %v6293
        %v6414 = vpack.c.b16 %v6298, %v6294
        %v6415 = vpack.c.b16 %v6303, %v6299
        %v6416 = vpack.c.b16 %v6304, %v6300
        %v6417 = vpack.c.b16 %v6305, %v6301
        %v6418 = vpack.c.b16 %v6306, %v6302
        %v6419 = vpack.c.b16 %v6311, %v6307
        %v6420 = vpack.c.b16 %v6312, %v6308
        %v6421 = vpack.c.b16 %v6313, %v6309
        %v6422 = vpack.c.b16 %v6314, %v6310
        %v6423 = vpack.c.b16 %v6319, %v6315
        %v6424 = vpack.c.b16 %v6320, %v6316
        %v6425 = vpack.c.b16 %v6321, %v6317
        %v6426 = vpack.c.b16 %v6322, %v6318
        %v6427 = vpack.c.b16 %v6327, %v6323
        %v6428 = vpack.c.b16 %v6328, %v6324
        %v6429 = vpack.c.b16 %v6329, %v6325
        %v6430 = vpack.c.b16 %v6330, %v6326
        %v6431 = vpack.c.b16 %v6335, %v6331
        %v6432 = vpack.c.b16 %v6336, %v6332
        %v6433 = vpack.c.b16 %v6337, %v6333
        %v6434 = vpack.c.b16 %v6338, %v6334
        %v6435 = vpack.c.b16 %v6343, %v6339
        %v6436 = vpack.c.b16 %v6344, %v6340
        %v6437 = vpack.c.b16 %v6345, %v6341
        %v6438 = vpack.c.b16 %v6346, %v6342
        %v6439 = vpack.c.b16 %v6351, %v6347
        %v6440 = vpack.c.b16 %v6352, %v6348
        %v6441 = vpack.c.b16 %v6353, %v6349
        %v6442 = vpack.c.b16 %v6354, %v6350
        %v6443 = vpack.c.b16 %v6359, %v6355
        %v6444 = vpack.c.b16 %v6360, %v6356
        %v6445 = vpack.c.b16 %v6361, %v6357
        %v6446 = vpack.c.b16 %v6362, %v6358
        %v6447 = vpack.c.b16 %v6367, %v6363
        %v6448 = vpack.c.b16 %v6368, %v6364
        %v6449 = vpack.c.b16 %v6369, %v6365
        %v6450 = vpack.c.b16 %v6370, %v6366
        %v6451 = vpack.c.b16 %v6375, %v6371
        %v6452 = vpack.c.b16 %v6376, %v6372
        %v6453 = vpack.c.b16 %v6377, %v6373
        %v6454 = vpack.c.b16 %v6378, %v6374
        %v6455 = vpack.c.b16 %v6383, %v6379
        %v6456 = vpack.c.b16 %v6384, %v6380
        %v6457 = vpack.c.b16 %v6385, %v6381
        %v6458 = vpack.c.b16 %v6386, %v6382
        %v6459 = vpack.c.b16 %v6391, %v6387
        %v6460 = vpack.c.b16 %v6392, %v6388
        %v6461 = vpack.c.b16 %v6393, %v6389
        %v6462 = vpack.c.b16 %v6394, %v6390
        %v6463 = vpack.c.b16 %v6399, %v6395
        %v6464 = vpack.c.b16 %v6400, %v6396
        %v6465 = vpack.c.b16 %v6401, %v6397
        %v6466 = vpack.c.b16 %v6402, %v6398
        %6531 = vmatpush.bf16.msra.mxu0 %v6431
        %6532 = vmatpush.bf16.msra.mxu0 %v6427
        %6533 = vmatpush.bf16.msra.mxu0 %v6423
        %6534 = vmatpush.bf16.msra.mxu0 %v6419
        %6535 = vmatpush.bf16.msra.mxu0 %v6415
        %6536 = vmatpush.bf16.msra.mxu0 %v6411
        %6537 = vmatpush.bf16.msra.mxu0 %v6407
        %6538 = vmatpush.bf16.msra.mxu0 %v6403
        %6539 = vmatmul.bf16.gmra.mxu0 %v6207
        %v6540 = vpop.f32.mrf.mxu0
        %v6541 = vadd.f32 %v6196, %v6540
        %v6542 = vpop.f32.mrf.mxu0
        %6543 = vdwg.mxu0
        %6544 = vmatpush.bf16.msra.mxu0 %v6463
        %6545 = vmatpush.bf16.msra.mxu0 %v6459
        %6546 = vmatpush.bf16.msra.mxu0 %v6455
        %6547 = vmatpush.bf16.msra.mxu0 %v6451
        %6548 = vmatpush.bf16.msra.mxu0 %v6447
        %6549 = vmatpush.bf16.msra.mxu0 %v6443
        %6550 = vmatpush.bf16.msra.mxu0 %v6439
        %6551 = vmatpush.bf16.msra.mxu0 %v6435
        %6552 = vmatmul.bf16.gmra.mxu0 %v6208
        %v6553 = vpop.f32.mrf.mxu0
        %v6554 = vadd.f32 %v6541, %v6553
        %v6555 = vpop.f32.mrf.mxu0
        %6556 = vdwg.mxu0
        %6557 = vmatpush.bf16.msra.mxu0 %v6432
        %6558 = vmatpush.bf16.msra.mxu0 %v6428
        %6559 = vmatpush.bf16.msra.mxu0 %v6424
        %6560 = vmatpush.bf16.msra.mxu0 %v6420
        %6561 = vmatpush.bf16.msra.mxu0 %v6416
        %6562 = vmatpush.bf16.msra.mxu0 %v6412
        %6563 = vmatpush.bf16.msra.mxu0 %v6408
        %6564 = vmatpush.bf16.msra.mxu0 %v6404
        %6565 = vmatmul.bf16.gmra.mxu0 %v6207
        %v6566 = vpop.f32.mrf.mxu0
        %v6567 = vadd.f32 %v6197, %v6566
        %v6568 = vpop.f32.mrf.mxu0
        %6569 = vdwg.mxu0
        %6570 = vmatpush.bf16.msra.mxu0 %v6464
        %6571 = vmatpush.bf16.msra.mxu0 %v6460
        %6572 = vmatpush.bf16.msra.mxu0 %v6456
        %6573 = vmatpush.bf16.msra.mxu0 %v6452
        %6574 = vmatpush.bf16.msra.mxu0 %v6448
        %6575 = vmatpush.bf16.msra.mxu0 %v6444
        %6576 = vmatpush.bf16.msra.mxu0 %v6440
        %6577 = vmatpush.bf16.msra.mxu0 %v6436
        %6578 = vmatmul.bf16.gmra.mxu0 %v6208
        %v6579 = vpop.f32.mrf.mxu0
        %v6580 = vadd.f32 %v6567, %v6579
        %v6581 = vpop.f32.mrf.mxu0
        %6582 = vdwg.mxu0
        %6583 = vmatpush.bf16.msra.mxu0 %v6433
        %6584 = vmatpush.bf16.msra.mxu0 %v6429
        %6585 = vmatpush.bf16.msra.mxu0 %v6425
        %6586 = vmatpush.bf16.msra.mxu0 %v6421
        %6587 = vmatpush.bf16.msra.mxu0 %v6417
        %6588 = vmatpush.bf16.msra.mxu0 %v6413
        %6589 = vmatpush.bf16.msra.mxu0 %v6409
        %6590 = vmatpush.bf16.msra.mxu0 %v6405
        %6591 = vmatmul.bf16.gmra.mxu0 %v6207
        %v6592 = vpop.f32.mrf.mxu0
        %v6593 = vadd.f32 %v6198, %v6592
        %v6594 = vpop.f32.mrf.mxu0
        %6595 = vdwg.mxu0
        %6596 = vmatpush.bf16.msra.mxu0 %v6465
        %6597 = vmatpush.bf16.msra.mxu0 %v6461
        %6598 = vmatpush.bf16.msra.mxu0 %v6457
        %6599 = vmatpush.bf16.msra.mxu0 %v6453
        %6600 = vmatpush.bf16.msra.mxu0 %v6449
        %6601 = vmatpush.bf16.msra.mxu0 %v6445
        %6602 = vmatpush.bf16.msra.mxu0 %v6441
        %6603 = vmatpush.bf16.msra.mxu0 %v6437
        %6604 = vmatmul.bf16.gmra.mxu0 %v6208
        %v6605 = vpop.f32.mrf.mxu0
        %v6606 = vadd.f32 %v6593, %v6605
        %v6607 = vpop.f32.mrf.mxu0
        %6608 = vdwg.mxu0
        %6609 = vmatpush.bf16.msra.mxu0 %v6434
        %6610 = vmatpush.bf16.msra.mxu0 %v6430
        %6611 = vmatpush.bf16.msra.mxu0 %v6426
        %6612 = vmatpush.bf16.msra.mxu0 %v6422
        %6613 = vmatpush.bf16.msra.mxu0 %v6418
        %6614 = vmatpush.bf16.msra.mxu0 %v6414
        %6615 = vmatpush.bf16.msra.mxu0 %v6410
        %6616 = vmatpush.bf16.msra.mxu0 %v6406
        %6617 = vmatmul.bf16.gmra.mxu0 %v6207
        %v6618 = vpop.f32.mrf.mxu0
        %v6619 = vadd.f32 %v6199, %v6618
        %v6620 = vpop.f32.mrf.mxu0
        %6621 = vdwg.mxu0
        %6622 = vmatpush.bf16.msra.mxu0 %v6466
        %6623 = vmatpush.bf16.msra.mxu0 %v6462
        %6624 = vmatpush.bf16.msra.mxu0 %v6458
        %6625 = vmatpush.bf16.msra.mxu0 %v6454
        %6626 = vmatpush.bf16.msra.mxu0 %v6450
        %6627 = vmatpush.bf16.msra.mxu0 %v6446
        %6628 = vmatpush.bf16.msra.mxu0 %v6442
        %6629 = vmatpush.bf16.msra.mxu0 %v6438
        %6630 = vmatmul.bf16.gmra.mxu0 %v6208
        %v6631 = vpop.f32.mrf.mxu0
        %v6632 = vadd.f32 %v6619, %v6631
        %v6633 = vpop.f32.mrf.mxu0
        %6634 = vdwg.mxu0
        %v6635 = vxor.u32 %v6554, 2147483648
        %v6636 = vxor.u32 %v6580, 2147483648
        %v6637 = vxor.u32 %v6606, 2147483648
        %v6638 = vxor.u32 %v6632, 2147483648
        %v6639 = vmul.f32 %v6635, 1.442695
        %v6640 = vpow.pop %v6639
        %v6641 = vmul.f32 %v6636, 1.442695
        %v6642 = vpow.pop %v6641
        %v6643 = vmul.f32 %v6637, 1.442695
        %v6644 = vpow.pop %v6643
        %v6645 = vmul.f32 %v6638, 1.442695
        %v6646 = vpow.pop %v6645
        %v6647 = vadd.f32 %v6640, 1.0
        %v6648 = vadd.f32 %v6642, 1.0
        %v6649 = vadd.f32 %v6644, 1.0
        %v6650 = vadd.f32 %v6646, 1.0
        %v6651 = vrcp.pop %v6647
        %v6652 = vmul.f32 %v6647, %v6651
        %v6653 = vsub.f32 1.0, %v6652
        %v6654 = vmul.f32 %v6651, %v6653
        %v6655 = vadd.f32 %v6651, %v6654
        %vm6656 = vweird.f32 %v6647
        %vm6657 = vweird.f32 %v6651
        %vm6658 = vmor %vm6656, %vm6657
        %v6659 = vsel %vm6658, %v6651, %v6655
        %v6660 = vand.u32 2147483647, %v6647
        %vm6661 = vcmp.eq.f32.partialorder %v6660, 8.507059e+37
        %v6662 = vand.u32 %v6647, 2147483648
        %v6663 = vor.u32 1.1754944e-38, %v6662
        %v6664 = vsel %vm6661, %v6663, %v6659
        %v6665 = vmul.f32 1.0, %v6664
        %v6666 = vrcp.pop %v6648
        %v6667 = vmul.f32 %v6648, %v6666
        %v6668 = vsub.f32 1.0, %v6667
        %v6669 = vmul.f32 %v6666, %v6668
        %v6670 = vadd.f32 %v6666, %v6669
        %vm6671 = vweird.f32 %v6648
        %vm6672 = vweird.f32 %v6666
        %vm6673 = vmor %vm6671, %vm6672
        %v6674 = vsel %vm6673, %v6666, %v6670
        %v6675 = vand.u32 2147483647, %v6648
        %vm6676 = vcmp.eq.f32.partialorder %v6675, 8.507059e+37
        %v6677 = vand.u32 %v6648, 2147483648
        %v6678 = vor.u32 1.1754944e-38, %v6677
        %v6679 = vsel %vm6676, %v6678, %v6674
        %v6680 = vmul.f32 1.0, %v6679
        %v6681 = vrcp.pop %v6649
        %v6682 = vmul.f32 %v6649, %v6681
        %v6683 = vsub.f32 1.0, %v6682
        %v6684 = vmul.f32 %v6681, %v6683
        %v6685 = vadd.f32 %v6681, %v6684
        %vm6686 = vweird.f32 %v6649
        %vm6687 = vweird.f32 %v6681
        %vm6688 = vmor %vm6686, %vm6687
        %v6689 = vsel %vm6688, %v6681, %v6685
        %v6690 = vand.u32 2147483647, %v6649
        %vm6691 = vcmp.eq.f32.partialorder %v6690, 8.507059e+37
        %v6692 = vand.u32 %v6649, 2147483648
        %v6693 = vor.u32 1.1754944e-38, %v6692
        %v6694 = vsel %vm6691, %v6693, %v6689
        %v6695 = vmul.f32 1.0, %v6694
        %v6696 = vrcp.pop %v6650
        %v6697 = vmul.f32 %v6650, %v6696
        %v6698 = vsub.f32 1.0, %v6697
        %v6699 = vmul.f32 %v6696, %v6698
        %v6700 = vadd.f32 %v6696, %v6699
        %vm6701 = vweird.f32 %v6650
        %vm6702 = vweird.f32 %v6696
        %vm6703 = vmor %vm6701, %vm6702
        %v6704 = vsel %vm6703, %v6696, %v6700
        %v6705 = vand.u32 2147483647, %v6650
        %vm6706 = vcmp.eq.f32.partialorder %v6705, 8.507059e+37
        %v6707 = vand.u32 %v6650, 2147483648
        %v6708 = vor.u32 1.1754944e-38, %v6707
        %v6709 = vsel %vm6706, %v6708, %v6704
        %v6710 = vmul.f32 1.0, %v6709
        %6711 = vst [vmem:[%s805] sm:$0xff] %v6665
        %6712 = vst [vmem:[%s805 + $0x8] sm:$0xff] %v6680
        %6713 = vst [vmem:[%s805 + $0x10] sm:$0xff] %v6695
        %6714 = vst [vmem:[%s805 + $0x18] sm:$0xff] %v6710
        %s6715 = sand.u32 %s395, 1
        %s6716 = scalar_lea.sflag [#allocation5], %s6715
        %s6717 = sand.u32 %s395, 1
        %s6718 = smul.addr %s6717, 32
        %s6719 = scalar_lea.vmem [#allocation25], %s6718
        // Predicated region
        $region145: #{vae_forward.1} parent=83 // pred_check
          %p6720 = pneg %p405
        $region146: #{vae_forward.1} parent=83 // pred_check_branch
          %6722 = sbr.rel (%p6720) target = $region148
        $region147: #{vae_forward.1} parent=83 // pred_region
          %s6723 = smul.u32 4, %s41
          %6725 = vsyncadd %s6716, 0
          %s6726 = smul.addr %s6723, 8
          %s6727 = scalar_lea.hbm %s16, %s6726
          %s6729 = sshll.u32 %s6719, 4
          %s6730 = int_to_ptr.vmem [resolvable:$true] %s6729
          %s6731 = sshll.u32 %s6727, 4
          %s6732 = int_to_ptr.hbm [resolvable:$true] %s6731
          %6734 = dma.vmem_to_hbm [thread:$0]  %s6730, 512, %s6732, %s6716
        $region148: #{vae_forward.1} parent=83 // pred_fallthru
          _
        // Predicated region
        $region149: #{vae_forward.1} parent=83 // pred_check
          %p6735 = pneg %p426
        $region150: #{vae_forward.1} parent=83 // pred_check_branch
          %6737 = sbr.rel (%p6735) target = $region152
        $region151: #{vae_forward.1} parent=83 // pred_region
          %6739 = vsyncadd [#allocation27], 0
          %s6741 = sshll.u32 [#allocation26], 4
          %s6742 = int_to_ptr.vmem [resolvable:$true] %s6741
          %s6743 = sshll.u32 %s17, 4
          %s6744 = int_to_ptr.hbm [resolvable:$true] %s6743
          %6746 = dma.vmem_to_hbm [thread:$0]  %s6742, 128, %s6744, [#allocation27]
        $region152: #{vae_forward.1} parent=83 // pred_fallthru
          _
        // Predicated region
        $region153: #{vae_forward.1} parent=83 // pred_check
          %p6747 = pneg %p447
        $region154: #{vae_forward.1} parent=83 // pred_check_branch
          %6749 = sbr.rel (%p6747) target = $region156
        $region155: #{vae_forward.1} parent=83 // pred_region
          %6751 = vsyncadd [#allocation27], 0
          %s6753 = sshll.u32 [#allocation28], 4
          %s6754 = int_to_ptr.vmem [resolvable:$true] %s6753
          %s6755 = sshll.u32 %s18, 4
          %s6756 = int_to_ptr.hbm [resolvable:$true] %s6755
          %6758 = dma.vmem_to_hbm [thread:$0]  %s6754, 128, %s6756, [#allocation27]
        $region156: #{vae_forward.1} parent=83 // pred_fallthru
          _
        // Predicated region
        $region157: #{vae_forward.1} parent=83 // pred_check
          %p6759 = pneg %p426
        $region158: #{vae_forward.1} parent=83 // pred_check_branch
          %6761 = sbr.rel (%p6759) target = $region160
        $region159: #{vae_forward.1} parent=83 // pred_region
          %6763 = dma.done [#allocation27], 128
        $region160: #{vae_forward.1} parent=83 // pred_fallthru
          _
        // Predicated region
        $region161: #{vae_forward.1} parent=83 // pred_check
          %p6764 = pneg %p447
        $region162: #{vae_forward.1} parent=83 // pred_check_branch
          %6766 = sbr.rel (%p6764) target = $region164
        $region163: #{vae_forward.1} parent=83 // pred_region
          %6768 = dma.done [#allocation27], 128
        $region164: #{vae_forward.1} parent=83 // pred_fallthru
          _
      $region84: #{vae_forward.1} parent=5 // pred_fallthru
        _
      %p6769 = scmp.le.s32.totalorder 2, %s36
      // Predicated region
      $region165: #{vae_forward.1} parent=5 // pred_check
        %p6770 = pneg %p6769
      $region166: #{vae_forward.1} parent=5 // pred_check_branch
        %6772 = sbr.rel (%p6770) target = $region168
      $region167: #{vae_forward.1} parent=5 // pred_region
        %s6773 = ssub.s32 %s36, 2
        // Predicated region
        $region169: #{vae_forward.1} parent=167 // pred_check
          %p6774 = pneg %p411
        $region170: #{vae_forward.1} parent=167 // pred_check_branch
          %6776 = sbr.rel (%p6774) target = $region172
        $region171: #{vae_forward.1} parent=167 // pred_region
          %s6777 = sand.u32 %s396, 1
          %s6778 = scalar_lea.sflag [#allocation5], %s6777
          %s6779 = sand.u32 %s396, 1
          %s6780 = smul.addr %s6779, 32
          %s6781 = scalar_lea.vmem [#allocation25], %s6780
          %6783 = dma.done %s6778, 512
        $region172: #{vae_forward.1} parent=167 // pred_fallthru
          _
      $region168: #{vae_forward.1} parent=5 // pred_fallthru
        _
    $region6: #{vae_forward.1} parent=1 // loop_footer
      %s40 = sadd.s32 1, %s36
    $region7: #{vae_forward.1} parent=1 // loop_footer_branch
      %35 = sbr.rel target = $region3
    $region8: #{vae_forward.1} parent=1 // loop_exit
      _
    %6784 = vsyncpa [#allocation4], 1
    %s6785 = scalar_lea.sflag [#allocation4], 1
    %6786 = vsyncpa %s6785, 1
    %6787 = vsyncpa [#allocation7], 1
    %6788 = vsyncpa [#allocation10], 1
    %6789 = vsyncpa [#allocation13], 1
    %6790 = vsyncpa [#allocation16], 1
    %6791 = vsyncpa [#allocation19], 1
    %6792 = vsyncpa [#allocation22], 1
    %6793 = vsyncpa [#allocation5], 1
    %s6794 = scalar_lea.sflag [#allocation5], 1
    %6795 = vsyncpa %s6794, 1
    %6796 = vsyncpa [#allocation27], 1

</llo_original>
